<compile_context>
chip_gen: v5e
topology: v5e:2x2
jax: 0.10.0
libtpu: 0.0.40
codegen_flags: <defaults>
</compile_context>

<pallas_src>
import functools
import math

import jax
import jax.numpy as jnp
from jax.experimental import pallas as pl
from jax.experimental.pallas import tpu as pltpu

GN_GROUPS = 32
GN_EPS = 1e-5


# --------------------- fused GN + qkv + attention + proj + residual ---------------------

def _attn_block_kernel(x_ref, g_ref, b_ref, p_ref, wqkv_ref, bqkv_ref,
                       wproj_ref, bproj_ref, o_ref, *, n_heads, eps):
    # x_ref:    [1, C, T] f32
    # g/b:      [C, 1] f32 GroupNorm affine
    # p_ref:    [2C, 2C] f32 = block_diag(P, P), P[i,j] = (group(i)==group(j)) / (Cg*T)
    # wqkv_ref: [3C, C] bf16 (softmax scale**2 pre-folded into the q rows)
    # bqkv_ref: [3C, 1] f32 (same fold)
    # wproj:    [C, C] bf16, bproj: [C, 1] f32
    x = x_ref[0]                                                    # [C, T] f32
    C, T = x.shape
    ch = C // n_heads

    # ---- GroupNorm(32, C): row moments -> one MXU pass -> one FMA normalize ----
    rowstats = jnp.concatenate(
        [jnp.sum(x, axis=1, keepdims=True),
         jnp.sum(x * x, axis=1, keepdims=True)], axis=0)            # [2C, 1]
    gstats = jnp.dot(p_ref[...], rowstats,
                     preferred_element_type=jnp.float32)            # [2C, 1]
    gmean = gstats[0:C, :]                                          # per-group E[x]
    gvar = gstats[C:2 * C, :] - gmean * gmean                       # E[x^2] - E[x]^2 (f32)
    a_gn = jax.lax.rsqrt(gvar + eps) * g_ref[...]                   # [C, 1]
    c_gn = b_ref[...] - gmean * a_gn                                # [C, 1]
    xn = (x * a_gn + c_gn).astype(jnp.bfloat16)                     # [C, T]

    # ---- qkv 1x1 conv (MXU, bf16 operands, f32 accumulation), single bf16 cast ----
    qkv = (jnp.dot(wqkv_ref[...], xn, preferred_element_type=jnp.float32)
           + bqkv_ref[...]).astype(jnp.bfloat16)                    # [3C, T]
    qkv = qkv.reshape(n_heads, 3 * ch, T)                           # head-major q|k|v split
    q = qkv[:, 0:ch, :]                                             # [H, ch, T] (scale folded)
    k = qkv[:, ch:2 * ch, :]
    v = qkv[:, 2 * ch:3 * ch, :]

    # ---- attention, all heads per grid step ----
    # scores[h, t, s] = sum_c q[h, c, t] * k[h, c, s]   ('hct,hcs->hts')
    w = jax.lax.dot_general(q, k, (((1,), (1,)), ((0,), (0,))),
                            preferred_element_type=jnp.float32)     # [H, T, T] f32
    w = jnp.exp(w - jnp.max(w, axis=-1, keepdims=True))
    p = w * pl.reciprocal(jnp.sum(w, axis=-1, keepdims=True), approx=True)
    # a[h, c, t] = sum_s p[h, t, s] * v[h, c, s]        ('hts,hcs->hct')
    att = jax.lax.dot_general(v, p.astype(jnp.bfloat16),
                              (((2,), (2,)), ((0,), (0,))),
                              preferred_element_type=jnp.float32)   # [H, ch, T]

    # ---- proj_out 1x1 conv + residual ----
    h = att.reshape(C, T).astype(jnp.bfloat16)
    o_ref[0] = (x
                + jnp.dot(wproj_ref[...], h, preferred_element_type=jnp.float32)
                + bproj_ref[...])


def attention_block_forward(params, x):
    """AttentionBlock._forward: x [N, C, *spatial] -> [N, C, *spatial]."""
    N, C = x.shape[0], x.shape[1]
    T = 1
    for s in x.shape[2:]:
        T *= s
    n_heads = params["num_heads"]
    ch = C // n_heads
    Cg = C // GN_GROUPS
    xr = x.reshape(N, C, T)

    # Static group-average matrix (block-diagonal so ONE matmul produces per-group
    # E[x] (rows 0..C-1) and E[x^2] (rows C..2C-1)).
    gids = jnp.arange(C) // Cg
    P = (gids[:, None] == gids[None, :]).astype(jnp.float32) / float(Cg * T)
    P2 = jnp.kron(jnp.eye(2, dtype=jnp.float32), P)                 # [2C, 2C]

    # One-time weight prep (would be precomputed for a deployed model): fold both
    # softmax scales (scale**2 = 1/sqrt(ch)) into the q rows of the qkv conv, and
    # cast the MXU weights to bf16.
    scale2 = 1.0 / math.sqrt(ch)
    is_q = ((jnp.arange(3 * C) // ch) % 3) == 0
    rs = jnp.where(is_q, scale2, 1.0).astype(jnp.float32)
    wqkv = (params["qkv_w"] * rs[:, None]).astype(jnp.bfloat16)     # [3C, C] bf16
    bqkv = (params["qkv_b"] * rs).reshape(3 * C, 1)                 # [3C, 1] f32
    wproj = params["proj_w"].astype(jnp.bfloat16)                   # [C, C] bf16

    out = pl.pallas_call(
        functools.partial(_attn_block_kernel, n_heads=n_heads, eps=GN_EPS),
        out_shape=jax.ShapeDtypeStruct((N, C, T), jnp.float32),
        grid=(N,),
        in_specs=[
            pl.BlockSpec((1, C, T), lambda i: (i, 0, 0)),
            pl.BlockSpec((C, 1), lambda i: (0, 0)),
            pl.BlockSpec((C, 1), lambda i: (0, 0)),
            pl.BlockSpec((2 * C, 2 * C), lambda i: (0, 0)),
            pl.BlockSpec((3 * C, C), lambda i: (0, 0)),
            pl.BlockSpec((3 * C, 1), lambda i: (0, 0)),
            pl.BlockSpec((C, C), lambda i: (0, 0)),
            pl.BlockSpec((C, 1), lambda i: (0, 0)),
        ],
        out_specs=pl.BlockSpec((1, C, T), lambda i: (i, 0, 0)),
        compiler_params=pltpu.CompilerParams(dimension_semantics=("parallel",)),
        # NOTE: if the caller does not need x afterwards, add
        # input_output_aliases={0: 0} to donate the residual buffer.
    )(xr, params["norm_g"].reshape(C, 1), params["norm_b"].reshape(C, 1), P2,
      wqkv, bqkv, wproj, params["proj_b"].reshape(C, 1))
    return out.reshape(x.shape)


# ------------------------------------ params ------------------------------------

def init_attention_block(key, channels, num_heads):
    def normal(k, shape, scale=0.05):
        return scale * jax.random.normal(k, shape, jnp.float32)
    k1, k2, k3, k4, k5, k6 = jax.random.split(key, 6)
    # NOTE: the PyTorch reference zero-inits proj_out via zero_module(); random init
    # is used here so the whole numerical path (not just the residual) is exercised.
    return dict(
        norm_g=1.0 + normal(k1, (channels,)),
        norm_b=normal(k2, (channels,)),
        qkv_w=normal(k3, (3 * channels, channels)),
        qkv_b=normal(k4, (3 * channels,)),
        proj_w=normal(k5, (channels, channels)),
        proj_b=normal(k6, (channels,)),
        num_heads=num_heads,
    )


# pure-JAX f32 reference (same math as the PyTorch module) for validation
def attention_block_reference(params, x):
    N, C = x.shape[0], x.shape[1]
    T = 1
    for s in x.shape[2:]:
        T *= s
    n_heads = params["num_heads"]
    xr = x.reshape(N, C, T)
    G, Cg = GN_GROUPS, C // GN_GROUPS
    xg = xr.reshape(N, G, Cg * T)
    mean = xg.mean(-1, keepdims=True)
    var = ((xg - mean) ** 2).mean(-1, keepdims=True)
    xn = ((xg - mean) / jnp.sqrt(var + GN_EPS)).reshape(N, C, T)
    xn = xn * params["norm_g"][None, :, None] + params["norm_b"][None, :, None]
    qkv = jnp.einsum("oc,nct->not", params["qkv_w"], xn) + params["qkv_b"][None, :, None]
    ch = C // n_heads
    qkv_r = qkv.reshape(N * n_heads, 3 * ch, T)
    q, k, v = qkv_r[:, :ch], qkv_r[:, ch:2 * ch], qkv_r[:, 2 * ch:]
    scale = 1.0 / math.sqrt(math.sqrt(ch))
    w = jnp.einsum("bct,bcs->bts", q * scale, k * scale)
    w = jax.nn.softmax(w, axis=-1)
    a = jnp.einsum("bts,bcs->bct", w, v).reshape(N, C, T)
    h = jnp.einsum("oc,nct->not", params["proj_w"], a) + params["proj_b"][None, :, None]
    return (xr + h).reshape(x.shape)


# -------------------------------------- main --------------------------------------

if __name__ == "__main__":
    key = jax.random.PRNGKey(0)
    kp, kx = jax.random.split(key)

    N, C, H, W = 2, 64, 16, 16          # C must be divisible by 32 (GroupNorm groups)
    NUM_HEADS = 2                        # ch = 32 per head, T = 256 tokens

    params = init_attention_block(kp, C, NUM_HEADS)
    x = jax.random.normal(kx, (N, C, H, W), jnp.float32)

    out = jax.block_until_ready(attention_block_forward(params, x))

    assert out.shape == (N, C, H, W), out.shape
    assert bool(jnp.all(jnp.isfinite(out)))

    ref = attention_block_reference(params, x)
    err = float(jnp.max(jnp.abs(out - ref)))
    assert err < 0.1, f"max abs error vs reference: {err}"

    print("KERNEL_OK")
</pallas_src>

<mosaic_0001>
module attributes {stable_mosaic.version = 11 : i64} {
  func.func @_attn_block_kernel(%arg0: i32, %arg1: memref<1x64x256xf32, #tpu.memory_space<vmem>>, %arg2: memref<64x1xf32, #tpu.memory_space<vmem>>, %arg3: memref<64x1xf32, #tpu.memory_space<vmem>>, %arg4: memref<128x128xf32, #tpu.memory_space<vmem>>, %arg5: memref<192x64xbf16, #tpu.memory_space<vmem>>, %arg6: memref<192x1xf32, #tpu.memory_space<vmem>>, %arg7: memref<64x64xbf16, #tpu.memory_space<vmem>>, %arg8: memref<64x1xf32, #tpu.memory_space<vmem>>, %arg9: memref<1x64x256xf32, #tpu.memory_space<vmem>>) attributes {dimension_semantics = [#tpu.dimension_semantics<parallel>], iteration_bounds = array<i64: 2>, scalar_prefetch = 0 : i64, scratch_operands = 0 : i64, tpu.core_type = #tpu.core_type<tc>, window_params = [{transform_indices = @transform_0, window_bounds = array<i64: 1, 64, 256>}, {pipeline_mode = #tpu.pipeline_mode<synchronous>, transform_indices = @transform_1, window_bounds = array<i64: 64, 1>}, {pipeline_mode = #tpu.pipeline_mode<synchronous>, transform_indices = @transform_2, window_bounds = array<i64: 64, 1>}, {pipeline_mode = #tpu.pipeline_mode<synchronous>, transform_indices = @transform_3, window_bounds = array<i64: 128, 128>}, {pipeline_mode = #tpu.pipeline_mode<synchronous>, transform_indices = @transform_4, window_bounds = array<i64: 192, 64>}, {pipeline_mode = #tpu.pipeline_mode<synchronous>, transform_indices = @transform_5, window_bounds = array<i64: 192, 1>}, {pipeline_mode = #tpu.pipeline_mode<synchronous>, transform_indices = @transform_6, window_bounds = array<i64: 64, 64>}, {pipeline_mode = #tpu.pipeline_mode<synchronous>, transform_indices = @transform_7, window_bounds = array<i64: 64, 1>}, {transform_indices = @transform_8, window_bounds = array<i64: 1, 64, 256>}]} {
    %c0 = arith.constant 0 : index
    %c0_0 = arith.constant 0 : index
    %c0_1 = arith.constant 0 : index
    %0 = vector.load %arg1[%c0, %c0_0, %c0_1] : memref<1x64x256xf32, #tpu.memory_space<vmem>>, vector<1x64x256xf32>
    %1 = vector.shape_cast %0 : vector<1x64x256xf32> to vector<64x256xf32>
    %cst = arith.constant dense<0.000000e+00> : vector<64xf32>
    %2 = vector.multi_reduction <add>, %1, %cst [1] : vector<64x256xf32> to vector<64xf32>
    %3 = vector.shape_cast %2 : vector<64xf32> to vector<64x1xf32>
    %4 = arith.mulf %1, %1 : vector<64x256xf32>
    %cst_2 = arith.constant dense<0.000000e+00> : vector<64xf32>
    %5 = vector.multi_reduction <add>, %4, %cst_2 [1] : vector<64x256xf32> to vector<64xf32>
    %6 = vector.shape_cast %5 : vector<64xf32> to vector<64x1xf32>
    %7 = tpu.concatenate %3, %6 in 0 : vector<64x1xf32>, vector<64x1xf32> -> vector<128x1xf32>
    %c0_3 = arith.constant 0 : index
    %c0_4 = arith.constant 0 : index
    %8 = vector.load %arg4[%c0_3, %c0_4] : memref<128x128xf32, #tpu.memory_space<vmem>>, vector<128x128xf32>
    %cst_5 = arith.constant dense<0.000000e+00> : vector<128x1xf32>
    %9 = tpu.matmul %8, %7, %cst_5 {dimension_numbers = #tpu.dot_dimension_numbers<[1], [0], [0], [1], [0, 0, 1, 1], [], []>} : vector<128x128xf32>, vector<128x1xf32>, vector<128x1xf32> -> vector<128x1xf32>
    %10 = vector.extract_strided_slice %9 {offsets = [0, 0], sizes = [64, 1], strides = [1, 1]} : vector<128x1xf32> to vector<64x1xf32>
    %11 = vector.extract_strided_slice %9 {offsets = [64, 0], sizes = [64, 1], strides = [1, 1]} : vector<128x1xf32> to vector<64x1xf32>
    %12 = arith.mulf %10, %10 : vector<64x1xf32>
    %13 = arith.subf %11, %12 : vector<64x1xf32>
    %cst_6 = arith.constant 9.99999974E-6 : f32
    %14 = vector.broadcast %cst_6 : f32 to vector<64x1xf32>
    %15 = arith.addf %13, %14 : vector<64x1xf32>
    %16 = math.rsqrt %15 : vector<64x1xf32>
    %c0_7 = arith.constant 0 : index
    %c0_8 = arith.constant 0 : index
    %17 = vector.load %arg2[%c0_7, %c0_8] : memref<64x1xf32, #tpu.memory_space<vmem>>, vector<64x1xf32>
    %18 = arith.mulf %16, %17 : vector<64x1xf32>
    %c0_9 = arith.constant 0 : index
    %c0_10 = arith.constant 0 : index
    %19 = vector.load %arg3[%c0_9, %c0_10] : memref<64x1xf32, #tpu.memory_space<vmem>>, vector<64x1xf32>
    %20 = arith.mulf %10, %18 : vector<64x1xf32>
    %21 = arith.subf %19, %20 : vector<64x1xf32>
    %22 = vector.broadcast %18 : vector<64x1xf32> to vector<64x256xf32>
    %23 = arith.mulf %1, %22 : vector<64x256xf32>
    %24 = vector.broadcast %21 : vector<64x1xf32> to vector<64x256xf32>
    %25 = arith.addf %23, %24 : vector<64x256xf32>
    %26 = arith.truncf %25 : vector<64x256xf32> to vector<64x256xbf16>
    %c0_11 = arith.constant 0 : index
    %c0_12 = arith.constant 0 : index
    %27 = vector.load %arg5[%c0_11, %c0_12] : memref<192x64xbf16, #tpu.memory_space<vmem>>, vector<192x64xbf16>
    %cst_13 = arith.constant dense<0.000000e+00> : vector<192x256xf32>
    %28 = tpu.matmul %27, %26, %cst_13 {dimension_numbers = #tpu.dot_dimension_numbers<[1], [0], [0], [1], [0, 0, 1, 1], [], []>} : vector<192x64xbf16>, vector<64x256xbf16>, vector<192x256xf32> -> vector<192x256xf32>
    %c0_14 = arith.constant 0 : index
    %c0_15 = arith.constant 0 : index
    %29 = vector.load %arg6[%c0_14, %c0_15] : memref<192x1xf32, #tpu.memory_space<vmem>>, vector<192x1xf32>
    %30 = vector.broadcast %29 : vector<192x1xf32> to vector<192x256xf32>
    %31 = arith.addf %28, %30 : vector<192x256xf32>
    %32 = arith.truncf %31 : vector<192x256xf32> to vector<192x256xbf16>
    %33 = vector.shape_cast %32 : vector<192x256xbf16> to vector<2x96x256xbf16>
    %34 = vector.extract_strided_slice %33 {offsets = [0, 0, 0], sizes = [2, 32, 256], strides = [1, 1, 1]} : vector<2x96x256xbf16> to vector<2x32x256xbf16>
    %35 = vector.extract_strided_slice %33 {offsets = [0, 32, 0], sizes = [2, 32, 256], strides = [1, 1, 1]} : vector<2x96x256xbf16> to vector<2x32x256xbf16>
    %36 = vector.extract_strided_slice %33 {offsets = [0, 64, 0], sizes = [2, 32, 256], strides = [1, 1, 1]} : vector<2x96x256xbf16> to vector<2x32x256xbf16>
    %cst_16 = arith.constant dense<0.000000e+00> : vector<2x256x256xf32>
    %37 = tpu.matmul %34, %35, %cst_16 {dimension_numbers = #tpu.dot_dimension_numbers<[1], [1], [2], [2], [0, 0, 0, 2, 1, 2], [0], [0]>} : vector<2x32x256xbf16>, vector<2x32x256xbf16>, vector<2x256x256xf32> -> vector<2x256x256xf32>
    %cst_17 = arith.constant dense<0xFF800000> : vector<2x256xf32>
    %38 = vector.multi_reduction <maximumf>, %37, %cst_17 [2] : vector<2x256x256xf32> to vector<2x256xf32>
    %39 = vector.shape_cast %38 : vector<2x256xf32> to vector<2x256x1xf32>
    %40 = vector.broadcast %39 : vector<2x256x1xf32> to vector<2x256x256xf32>
    %41 = arith.subf %37, %40 : vector<2x256x256xf32>
    %42 = math.exp %41 : vector<2x256x256xf32>
    %cst_18 = arith.constant dense<0.000000e+00> : vector<2x256xf32>
    %43 = vector.multi_reduction <add>, %42, %cst_18 [2] : vector<2x256x256xf32> to vector<2x256xf32>
    %44 = vector.shape_cast %43 : vector<2x256xf32> to vector<2x256x1xf32>
    %45 = tpu.reciprocal %44 {approx = true} : vector<2x256x1xf32> -> vector<2x256x1xf32>
    %46 = vector.broadcast %45 : vector<2x256x1xf32> to vector<2x256x256xf32>
    %47 = arith.mulf %42, %46 : vector<2x256x256xf32>
    %48 = arith.truncf %47 : vector<2x256x256xf32> to vector<2x256x256xbf16>
    %cst_19 = arith.constant dense<0.000000e+00> : vector<2x32x256xf32>
    %49 = tpu.matmul %36, %48, %cst_19 {dimension_numbers = #tpu.dot_dimension_numbers<[2], [2], [1], [1], [0, 0, 0, 1, 1, 1], [0], [0]>} : vector<2x32x256xbf16>, vector<2x256x256xbf16>, vector<2x32x256xf32> -> vector<2x32x256xf32>
    %50 = vector.shape_cast %49 : vector<2x32x256xf32> to vector<64x256xf32>
    %51 = arith.truncf %50 : vector<64x256xf32> to vector<64x256xbf16>
    %c0_20 = arith.constant 0 : index
    %c0_21 = arith.constant 0 : index
    %52 = vector.load %arg7[%c0_20, %c0_21] : memref<64x64xbf16, #tpu.memory_space<vmem>>, vector<64x64xbf16>
    %cst_22 = arith.constant dense<0.000000e+00> : vector<64x256xf32>
    %53 = tpu.matmul %52, %51, %cst_22 {dimension_numbers = #tpu.dot_dimension_numbers<[1], [0], [0], [1], [0, 0, 1, 1], [], []>} : vector<64x64xbf16>, vector<64x256xbf16>, vector<64x256xf32> -> vector<64x256xf32>
    %54 = arith.addf %1, %53 : vector<64x256xf32>
    %c0_23 = arith.constant 0 : index
    %c0_24 = arith.constant 0 : index
    %55 = vector.load %arg8[%c0_23, %c0_24] : memref<64x1xf32, #tpu.memory_space<vmem>>, vector<64x1xf32>
    %56 = vector.broadcast %55 : vector<64x1xf32> to vector<64x256xf32>
    %57 = arith.addf %54, %56 : vector<64x256xf32>
    %c0_25 = arith.constant 0 : index
    %c0_26 = arith.constant 0 : index
    %c0_27 = arith.constant 0 : index
    %58 = vector.load %arg9[%c0_25, %c0_26, %c0_27] : memref<1x64x256xf32, #tpu.memory_space<vmem>>, vector<1x64x256xf32>
    %59 = vector.shape_cast %58 : vector<1x64x256xf32> to vector<64x256xf32>
    %60 = vector.shape_cast %57 : vector<64x256xf32> to vector<1x64x256xf32>
    tpu.vector_store %arg9[%c0_25, %c0_26, %c0_27], %60 {strides = array<i32>} : memref<1x64x256xf32, #tpu.memory_space<vmem>>, vector<1x64x256xf32>,
    return
  }
  func.func @transform_0(%arg0: i32) -> (i32, i32, i32) {
    %c0_i32 = arith.constant 0 : i32
    %c0_i32_0 = arith.constant 0 : i32
    %c0_i32_1 = arith.constant 0 : i32
    return %arg0, %c0_i32, %c0_i32_0 : i32, i32, i32
  }
  func.func @transform_1(%arg0: i32) -> (i32, i32) {
    %c0_i32 = arith.constant 0 : i32
    %c0_i32_0 = arith.constant 0 : i32
    %c0_i32_1 = arith.constant 0 : i32
    return %c0_i32, %c0_i32_0 : i32, i32
  }
  func.func @transform_2(%arg0: i32) -> (i32, i32) {
    %c0_i32 = arith.constant 0 : i32
    %c0_i32_0 = arith.constant 0 : i32
    %c0_i32_1 = arith.constant 0 : i32
    return %c0_i32, %c0_i32_0 : i32, i32
  }
  func.func @transform_3(%arg0: i32) -> (i32, i32) {
    %c0_i32 = arith.constant 0 : i32
    %c0_i32_0 = arith.constant 0 : i32
    %c0_i32_1 = arith.constant 0 : i32
    return %c0_i32, %c0_i32_0 : i32, i32
  }
  func.func @transform_4(%arg0: i32) -> (i32, i32) {
    %c0_i32 = arith.constant 0 : i32
    %c0_i32_0 = arith.constant 0 : i32
    %c0_i32_1 = arith.constant 0 : i32
    return %c0_i32, %c0_i32_0 : i32, i32
  }
  func.func @transform_5(%arg0: i32) -> (i32, i32) {
    %c0_i32 = arith.constant 0 : i32
    %c0_i32_0 = arith.constant 0 : i32
    %c0_i32_1 = arith.constant 0 : i32
    return %c0_i32, %c0_i32_0 : i32, i32
  }
  func.func @transform_6(%arg0: i32) -> (i32, i32) {
    %c0_i32 = arith.constant 0 : i32
    %c0_i32_0 = arith.constant 0 : i32
    %c0_i32_1 = arith.constant 0 : i32
    return %c0_i32, %c0_i32_0 : i32, i32
  }
  func.func @transform_7(%arg0: i32) -> (i32, i32) {
    %c0_i32 = arith.constant 0 : i32
    %c0_i32_0 = arith.constant 0 : i32
    %c0_i32_1 = arith.constant 0 : i32
    return %c0_i32, %c0_i32_0 : i32, i32
  }
  func.func @transform_8(%arg0: i32) -> (i32, i32, i32) {
    %c0_i32 = arith.constant 0 : i32
    %c0_i32_0 = arith.constant 0 : i32
    %c0_i32_1 = arith.constant 0 : i32
    return %arg0, %c0_i32, %c0_i32_0 : i32, i32, i32
  }
}

</mosaic_0001>

<llo_original>
// kernel: tpu_custom_call.1
$region0: #{tpu_custom_call.1}
  #allocation0 [shape = 'u32[]', space=smem, size = 0x4, offset = 0x4, fixed_abs, tag = 'smem constant byte address 0x4 - core index']
  #allocation1 [shape = 'u32[72,128]{1,0:T(1,128)}', space=vmem, size = 0x9000, scoped, tag = 'internal scratch']
  %s0 = inlined_call_operand.vmem [shape: f32[2,64,256], index: 0, kind: input, shape index: {}]
  %s1 = inlined_call_operand.vmem [shape: f32[64,1], index: 1, kind: input, shape index: {}]
  %s2 = inlined_call_operand.vmem [shape: f32[64,1], index: 2, kind: input, shape index: {}]
  %s3 = inlined_call_operand.vmem [shape: f32[128,128], index: 3, kind: input, shape index: {}]
  %s4 = inlined_call_operand.vmem [shape: bf16[192,64], index: 4, kind: input, shape index: {}]
  %s5 = inlined_call_operand.vmem [shape: f32[192,1], index: 5, kind: input, shape index: {}]
  %s6 = inlined_call_operand.vmem [shape: bf16[64,64], index: 6, kind: input, shape index: {}]
  %s7 = inlined_call_operand.vmem [shape: f32[64,1], index: 7, kind: input, shape index: {}]
  %s8 = inlined_call_operand.hbm [shape: f32[2,64,256], index: 8, kind: output, shape index: {}]
  %s9 = sld [smem:[#allocation0]]
  $region65: #{tpu_custom_call.1} parent=0
    _
  %s11 = ssub.s32 1, %s9
  %s12 = scalar_select 0, %s11, %s9
  $region1: #{tpu_custom_call.1} parent=0
    #allocation2 [shape = 'u8[131072]{0}', space=vmem, size = 0x20000, scoped, tag = 'output window, operand 0']
    #allocation3 [shape = 's32[2]{0}', space=sflag, size = 0x8, scoped, tag = 'scoped memory for tpu_custom_call.1']
    %13 = vsyncpa [#allocation3], 0
    %s14 = scalar_lea.sflag [#allocation3], 1
    %15 = vsyncpa %s14, 0
    loop: start=0, step=1, limit=4
    $region2: #{tpu_custom_call.1} parent=1 // loop_pre_header
      _
    $region3: #{tpu_custom_call.1} parent=1 // loop_header
      %s17 = sphi 0, %s21
      %p18 = scmp.ge.s32.totalorder %s17, 4
      %s27 = sphi 0, %s29
      %s30 = sphi 0, %s27
      %s31 = sphi 0, %s30
      %s47 = sphi 0, %s31
      %s51 = sphi 0, %s51
      %s53 = sphi 0, %s51
      %s54 = sphi 0, %s53
      %s68 = sphi 0, %s54
      %s72 = sphi 0, %s72
      %s74 = sphi 0, %s72
      %s75 = sphi 0, %s74
      %s89 = sphi 0, %s75
      %s93 = sphi 0, %s93
      %s95 = sphi 0, %s93
      %s96 = sphi 0, %s95
      %s110 = sphi 0, %s96
      %s114 = sphi 0, %s114
      %s116 = sphi 0, %s114
      %s117 = sphi 0, %s116
      %s131 = sphi 0, %s117
      %s135 = sphi 0, %s135
      %s137 = sphi 0, %s135
      %s138 = sphi 0, %s137
      %s152 = sphi 0, %s138
      %s156 = sphi 0, %s156
      %s158 = sphi 0, %s156
      %s159 = sphi 0, %s158
      %s173 = sphi 0, %s159
      %s177 = sphi 0, %s177
      %s179 = sphi 0, %s177
      %s180 = sphi 0, %s179
      %s194 = sphi 0, %s180
      %s200 = sphi 0, %s202
      %s203 = sphi 0, %s200
      %s204 = sphi 0, %s203
      %s220 = sphi 0, %s204
    $region4: #{tpu_custom_call.1} parent=1 // loop_header_branch
      %20 = sbr.rel (%p18) target = $region8
    $region5: #{tpu_custom_call.1} parent=1 // loop_body
      %s22 = ssub.s32 %s17, 1
      %s23 = ssub.s32 %s17, 2
      %s24 = sadd.s32 %s17, 1
      %s25 = ssub.s32 %s17, %s24
      %p26 = scmp.eq.s32.totalorder %s25, 0
      %s28 = sadd.s32 %s27, 1
      %s29 = scalar_select %p26, %s27, %s28
      %p32 = pneg %p26
      %p33 = scmp.eq.s32.totalorder %s17, 1
      %p34 = por %p32, %p33
      %p35 = scmp.ne.s32.totalorder %s27, %s30
      %p36 = scmp.eq.s32.totalorder %s17, 0
      %p37 = por %p35, %p36
      %p38 = scmp.ne.s32.totalorder %s27, %s30
      %p39 = scmp.eq.s32.totalorder %s22, 1
      %p40 = por %p38, %p39
      %p41 = scmp.ne.s32.totalorder %s30, %s31
      %p42 = scmp.eq.s32.totalorder %s22, 0
      %p43 = por %p41, %p42
      %p44 = scmp.ne.s32.totalorder %s30, %s31
      %p45 = scmp.eq.s32.totalorder %s23, 1
      %p46 = por %p44, %p45
      %p48 = scmp.ne.s32.totalorder %s31, %s47
      %p49 = scmp.eq.s32.totalorder %s23, 0
      %p50 = por %p48, %p49
      %s52 = sadd.s32 %s51, 1
      %p55 = scmp.eq.s32.totalorder %s17, 1
      %p56 = scmp.ne.s32.totalorder %s51, %s53
      %p57 = scmp.eq.s32.totalorder %s17, 0
      %p58 = por %p56, %p57
      %p59 = scmp.ne.s32.totalorder %s51, %s53
      %p60 = scmp.eq.s32.totalorder %s22, 1
      %p61 = por %p59, %p60
      %p62 = scmp.ne.s32.totalorder %s53, %s54
      %p63 = scmp.eq.s32.totalorder %s22, 0
      %p64 = por %p62, %p63
      %p65 = scmp.ne.s32.totalorder %s53, %s54
      %p66 = scmp.eq.s32.totalorder %s23, 1
      %p67 = por %p65, %p66
      %p69 = scmp.ne.s32.totalorder %s54, %s68
      %p70 = scmp.eq.s32.totalorder %s23, 0
      %p71 = por %p69, %p70
      %s73 = sadd.s32 %s72, 1
      %p76 = scmp.eq.s32.totalorder %s17, 1
      %p77 = scmp.ne.s32.totalorder %s72, %s74
      %p78 = scmp.eq.s32.totalorder %s17, 0
      %p79 = por %p77, %p78
      %p80 = scmp.ne.s32.totalorder %s72, %s74
      %p81 = scmp.eq.s32.totalorder %s22, 1
      %p82 = por %p80, %p81
      %p83 = scmp.ne.s32.totalorder %s74, %s75
      %p84 = scmp.eq.s32.totalorder %s22, 0
      %p85 = por %p83, %p84
      %p86 = scmp.ne.s32.totalorder %s74, %s75
      %p87 = scmp.eq.s32.totalorder %s23, 1
      %p88 = por %p86, %p87
      %p90 = scmp.ne.s32.totalorder %s75, %s89
      %p91 = scmp.eq.s32.totalorder %s23, 0
      %p92 = por %p90, %p91
      %s94 = sadd.s32 %s93, 1
      %p97 = scmp.eq.s32.totalorder %s17, 1
      %p98 = scmp.ne.s32.totalorder %s93, %s95
      %p99 = scmp.eq.s32.totalorder %s17, 0
      %p100 = por %p98, %p99
      %p101 = scmp.ne.s32.totalorder %s93, %s95
      %p102 = scmp.eq.s32.totalorder %s22, 1
      %p103 = por %p101, %p102
      %p104 = scmp.ne.s32.totalorder %s95, %s96
      %p105 = scmp.eq.s32.totalorder %s22, 0
      %p106 = por %p104, %p105
      %p107 = scmp.ne.s32.totalorder %s95, %s96
      %p108 = scmp.eq.s32.totalorder %s23, 1
      %p109 = por %p107, %p108
      %p111 = scmp.ne.s32.totalorder %s96, %s110
      %p112 = scmp.eq.s32.totalorder %s23, 0
      %p113 = por %p111, %p112
      %s115 = sadd.s32 %s114, 1
      %p118 = scmp.eq.s32.totalorder %s17, 1
      %p119 = scmp.ne.s32.totalorder %s114, %s116
      %p120 = scmp.eq.s32.totalorder %s17, 0
      %p121 = por %p119, %p120
      %p122 = scmp.ne.s32.totalorder %s114, %s116
      %p123 = scmp.eq.s32.totalorder %s22, 1
      %p124 = por %p122, %p123
      %p125 = scmp.ne.s32.totalorder %s116, %s117
      %p126 = scmp.eq.s32.totalorder %s22, 0
      %p127 = por %p125, %p126
      %p128 = scmp.ne.s32.totalorder %s116, %s117
      %p129 = scmp.eq.s32.totalorder %s23, 1
      %p130 = por %p128, %p129
      %p132 = scmp.ne.s32.totalorder %s117, %s131
      %p133 = scmp.eq.s32.totalorder %s23, 0
      %p134 = por %p132, %p133
      %s136 = sadd.s32 %s135, 1
      %p139 = scmp.eq.s32.totalorder %s17, 1
      %p140 = scmp.ne.s32.totalorder %s135, %s137
      %p141 = scmp.eq.s32.totalorder %s17, 0
      %p142 = por %p140, %p141
      %p143 = scmp.ne.s32.totalorder %s135, %s137
      %p144 = scmp.eq.s32.totalorder %s22, 1
      %p145 = por %p143, %p144
      %p146 = scmp.ne.s32.totalorder %s137, %s138
      %p147 = scmp.eq.s32.totalorder %s22, 0
      %p148 = por %p146, %p147
      %p149 = scmp.ne.s32.totalorder %s137, %s138
      %p150 = scmp.eq.s32.totalorder %s23, 1
      %p151 = por %p149, %p150
      %p153 = scmp.ne.s32.totalorder %s138, %s152
      %p154 = scmp.eq.s32.totalorder %s23, 0
      %p155 = por %p153, %p154
      %s157 = sadd.s32 %s156, 1
      %p160 = scmp.eq.s32.totalorder %s17, 1
      %p161 = scmp.ne.s32.totalorder %s156, %s158
      %p162 = scmp.eq.s32.totalorder %s17, 0
      %p163 = por %p161, %p162
      %p164 = scmp.ne.s32.totalorder %s156, %s158
      %p165 = scmp.eq.s32.totalorder %s22, 1
      %p166 = por %p164, %p165
      %p167 = scmp.ne.s32.totalorder %s158, %s159
      %p168 = scmp.eq.s32.totalorder %s22, 0
      %p169 = por %p167, %p168
      %p170 = scmp.ne.s32.totalorder %s158, %s159
      %p171 = scmp.eq.s32.totalorder %s23, 1
      %p172 = por %p170, %p171
      %p174 = scmp.ne.s32.totalorder %s159, %s173
      %p175 = scmp.eq.s32.totalorder %s23, 0
      %p176 = por %p174, %p175
      %s178 = sadd.s32 %s177, 1
      %p181 = scmp.eq.s32.totalorder %s17, 1
      %p182 = scmp.ne.s32.totalorder %s177, %s179
      %p183 = scmp.eq.s32.totalorder %s17, 0
      %p184 = por %p182, %p183
      %p185 = scmp.ne.s32.totalorder %s177, %s179
      %p186 = scmp.eq.s32.totalorder %s22, 1
      %p187 = por %p185, %p186
      %p188 = scmp.ne.s32.totalorder %s179, %s180
      %p189 = scmp.eq.s32.totalorder %s22, 0
      %p190 = por %p188, %p189
      %p191 = scmp.ne.s32.totalorder %s179, %s180
      %p192 = scmp.eq.s32.totalorder %s23, 1
      %p193 = por %p191, %p192
      %p195 = scmp.ne.s32.totalorder %s180, %s194
      %p196 = scmp.eq.s32.totalorder %s23, 0
      %p197 = por %p195, %p196
      %s198 = ssub.s32 %s17, %s24
      %p199 = scmp.eq.s32.totalorder %s198, 0
      %s201 = sadd.s32 %s200, 1
      %s202 = scalar_select %p199, %s200, %s201
      %p205 = pneg %p199
      %p206 = scmp.eq.s32.totalorder %s17, 1
      %p207 = por %p205, %p206
      %p208 = scmp.ne.s32.totalorder %s200, %s203
      %p209 = scmp.eq.s32.totalorder %s17, 0
      %p210 = por %p208, %p209
      %p211 = scmp.ne.s32.totalorder %s200, %s203
      %p212 = scmp.eq.s32.totalorder %s22, 1
      %p213 = por %p211, %p212
      %p214 = scmp.ne.s32.totalorder %s203, %s204
      %p215 = scmp.eq.s32.totalorder %s22, 0
      %p216 = por %p214, %p215
      %p217 = scmp.ne.s32.totalorder %s203, %s204
      %p218 = scmp.eq.s32.totalorder %s23, 1
      %p219 = por %p217, %p218
      %p221 = scmp.ne.s32.totalorder %s204, %s220
      %p222 = scmp.eq.s32.totalorder %s23, 0
      %p223 = por %p221, %p222
      %p224 = scmp.le.s32.totalorder 1, %s17
      %p225 = scmp.lt.s32.totalorder %s17, 3
      %p226 = pnand %p224, %p225
      %p227 = pneg %p226
      // Predicated region
      $region9: #{tpu_custom_call.1} parent=5 // pred_check
        _
      $region10: #{tpu_custom_call.1} parent=5 // pred_check_branch
        %229 = sbr.rel (%p226) target = $region12
      $region11: #{tpu_custom_call.1} parent=5 // pred_region
        %s230 = ssub.s32 %s17, 1
        // Predicated region
        $region13: #{tpu_custom_call.1} parent=11 // pred_check
          %p231 = pneg %p64
        $region14: #{tpu_custom_call.1} parent=11 // pred_check_branch
          %233 = sbr.rel (%p231) target = $region16
        $region15: #{tpu_custom_call.1} parent=11 // pred_region
          _
        $region16: #{tpu_custom_call.1} parent=11 // pred_fallthru
          _
        // Predicated region
        $region17: #{tpu_custom_call.1} parent=11 // pred_check
          %p234 = pneg %p85
        $region18: #{tpu_custom_call.1} parent=11 // pred_check_branch
          %236 = sbr.rel (%p234) target = $region20
        $region19: #{tpu_custom_call.1} parent=11 // pred_region
          _
        $region20: #{tpu_custom_call.1} parent=11 // pred_fallthru
          _
        // Predicated region
        $region21: #{tpu_custom_call.1} parent=11 // pred_check
          %p237 = pneg %p106
        $region22: #{tpu_custom_call.1} parent=11 // pred_check_branch
          %239 = sbr.rel (%p237) target = $region24
        $region23: #{tpu_custom_call.1} parent=11 // pred_region
          _
        $region24: #{tpu_custom_call.1} parent=11 // pred_fallthru
          _
        // Predicated region
        $region25: #{tpu_custom_call.1} parent=11 // pred_check
          %p240 = pneg %p127
        $region26: #{tpu_custom_call.1} parent=11 // pred_check_branch
          %242 = sbr.rel (%p240) target = $region28
        $region27: #{tpu_custom_call.1} parent=11 // pred_region
          _
        $region28: #{tpu_custom_call.1} parent=11 // pred_fallthru
          _
        // Predicated region
        $region29: #{tpu_custom_call.1} parent=11 // pred_check
          %p243 = pneg %p148
        $region30: #{tpu_custom_call.1} parent=11 // pred_check_branch
          %245 = sbr.rel (%p243) target = $region32
        $region31: #{tpu_custom_call.1} parent=11 // pred_region
          _
        $region32: #{tpu_custom_call.1} parent=11 // pred_fallthru
          _
        // Predicated region
        $region33: #{tpu_custom_call.1} parent=11 // pred_check
          %p246 = pneg %p169
        $region34: #{tpu_custom_call.1} parent=11 // pred_check_branch
          %248 = sbr.rel (%p246) target = $region36
        $region35: #{tpu_custom_call.1} parent=11 // pred_region
          _
        $region36: #{tpu_custom_call.1} parent=11 // pred_fallthru
          _
        // Predicated region
        $region37: #{tpu_custom_call.1} parent=11 // pred_check
          %p249 = pneg %p190
        $region38: #{tpu_custom_call.1} parent=11 // pred_check_branch
          %251 = sbr.rel (%p249) target = $region40
        $region39: #{tpu_custom_call.1} parent=11 // pred_region
          _
        $region40: #{tpu_custom_call.1} parent=11 // pred_fallthru
          _
      $region12: #{tpu_custom_call.1} parent=5 // pred_fallthru
        _
      %p252 = scmp.lt.s32.totalorder %s17, 2
      // Predicated region
      $region41: #{tpu_custom_call.1} parent=5 // pred_check
        %p253 = pneg %p252
      $region42: #{tpu_custom_call.1} parent=5 // pred_check_branch
        %255 = sbr.rel (%p253) target = $region44
      $region43: #{tpu_custom_call.1} parent=5 // pred_region
        // Predicated region
        $region45: #{tpu_custom_call.1} parent=43 // pred_check
          %p256 = pneg %p37
        $region46: #{tpu_custom_call.1} parent=43 // pred_check_branch
          %258 = sbr.rel (%p256) target = $region48
        $region47: #{tpu_custom_call.1} parent=43 // pred_region
          %p259 = scmp.lt.s32.totalorder %s17, 1
          %s260 = scalar_select %p259, %s17, 1
          %s261 = smul.addr %s260, 16
          %s262 = smul.addr %s261, 8
          %s263 = scalar_lea.vmem %s0, %s262
        $region48: #{tpu_custom_call.1} parent=43 // pred_fallthru
          _
      $region44: #{tpu_custom_call.1} parent=5 // pred_fallthru
        _
      %p264 = scmp.le.s32.totalorder 1, %s17
      %p265 = scmp.lt.s32.totalorder %s17, 3
      %p266 = pnand %p264, %p265
      %p267 = pneg %p266
      // Predicated region
      $region49: #{tpu_custom_call.1} parent=5 // pred_check
        _
      $region50: #{tpu_custom_call.1} parent=5 // pred_check_branch
        %269 = sbr.rel (%p266) target = $region52
      $region51: #{tpu_custom_call.1} parent=5 // pred_region
        %s270 = ssub.s32 %s17, 1
        %p271 = scmp.lt.s32.totalorder %s22, 1
        %s272 = scalar_select %p271, %s22, 1
        %s273 = smul.addr %s272, 16
        %s274 = smul.addr %s273, 8
        %s275 = scalar_lea.vmem %s0, %s274
        %p276 = pneg %p43
        %p277 = pneg %p40
        %p278 = pneg %p64
        %p279 = pneg %p61
        %p280 = pneg %p85
        %p281 = pneg %p82
        %p282 = pneg %p106
        %p283 = pneg %p103
        %p284 = pneg %p127
        %p285 = pneg %p124
        %p286 = pneg %p148
        %p287 = pneg %p145
        %p288 = pneg %p169
        %p289 = pneg %p166
        %p290 = pneg %p190
        %p291 = pneg %p187
        %p292 = pneg %p216
        %p293 = pneg %p213
        %s294 = sand.u32 %s203, 1
        %s295 = scalar_lea.sflag [#allocation3], %s294
        %s296 = sand.u32 %s203, 1
        %s297 = smul.addr %s296, 128
        %s298 = scalar_lea.vmem [#allocation2], %s297
        %p299 = scmp.lt.s32.totalorder %s22, 1
        %s300 = scalar_select %p299, %s22, 1
        %s301 = smul.addr %s300, 16
        %s302 = smul.addr %s301, 8
        %s303 = scalar_lea.vmem %s0, %s302
        %v305 = vld [vmem:[%s303] sm:$0xff]
        %v306 = vld [vmem:[%s303 + $0x8] sm:$0xff]
        %v307 = vld [vmem:[%s303 + $0x10] sm:$0xff]
        %v308 = vld [vmem:[%s303 + $0x18] sm:$0xff]
        %v309 = vld [vmem:[%s303 + $0x20] sm:$0xff]
        %v310 = vld [vmem:[%s303 + $0x28] sm:$0xff]
        %v311 = vld [vmem:[%s303 + $0x30] sm:$0xff]
        %v312 = vld [vmem:[%s303 + $0x38] sm:$0xff]
        %v313 = vld [vmem:[%s303 + $0x40] sm:$0xff]
        %v314 = vld [vmem:[%s303 + $0x48] sm:$0xff]
        %v315 = vld [vmem:[%s303 + $0x50] sm:$0xff]
        %v316 = vld [vmem:[%s303 + $0x58] sm:$0xff]
        %v317 = vld [vmem:[%s303 + $0x60] sm:$0xff]
        %v318 = vld [vmem:[%s303 + $0x68] sm:$0xff]
        %v319 = vld [vmem:[%s303 + $0x70] sm:$0xff]
        %v320 = vld [vmem:[%s303 + $0x78] sm:$0xff]
        %v321 = vadd.f32 %v305, %v306
        %322 = vadd.xlane.f32.xlu0 %v321
        %v323 = vpop.xlane.xlu0 %322
        %v324 = vadd.f32 %v307, %v308
        %325 = vadd.xlane.f32.xlu0 %v324
        %v326 = vpop.xlane.xlu0 %325
        %v327 = vadd.f32 %v309, %v310
        %328 = vadd.xlane.f32.xlu0 %v327
        %v329 = vpop.xlane.xlu0 %328
        %v330 = vadd.f32 %v311, %v312
        %331 = vadd.xlane.f32.xlu0 %v330
        %v332 = vpop.xlane.xlu0 %331
        %v333 = vadd.f32 %v313, %v314
        %334 = vadd.xlane.f32.xlu0 %v333
        %v335 = vpop.xlane.xlu0 %334
        %v336 = vadd.f32 %v315, %v316
        %337 = vadd.xlane.f32.xlu0 %v336
        %v338 = vpop.xlane.xlu0 %337
        %v339 = vadd.f32 %v317, %v318
        %340 = vadd.xlane.f32.xlu0 %v339
        %v341 = vpop.xlane.xlu0 %340
        %v342 = vadd.f32 %v319, %v320
        %343 = vadd.xlane.f32.xlu0 %v342
        %v344 = vpop.xlane.xlu0 %343
        %v345 = vmul.f32 %v305, %v305
        %v346 = vmul.f32 %v306, %v306
        %v347 = vmul.f32 %v307, %v307
        %v348 = vmul.f32 %v308, %v308
        %v349 = vmul.f32 %v309, %v309
        %v350 = vmul.f32 %v310, %v310
        %v351 = vmul.f32 %v311, %v311
        %v352 = vmul.f32 %v312, %v312
        %v353 = vmul.f32 %v313, %v313
        %v354 = vmul.f32 %v314, %v314
        %v355 = vmul.f32 %v315, %v315
        %v356 = vmul.f32 %v316, %v316
        %v357 = vmul.f32 %v317, %v317
        %v358 = vmul.f32 %v318, %v318
        %v359 = vmul.f32 %v319, %v319
        %v360 = vmul.f32 %v320, %v320
        %v361 = vadd.f32 %v345, %v346
        %362 = vadd.xlane.f32.xlu0 %v361
        %v363 = vpop.xlane.xlu0 %362
        %v364 = vadd.f32 %v347, %v348
        %365 = vadd.xlane.f32.xlu0 %v364
        %v366 = vpop.xlane.xlu0 %365
        %v367 = vadd.f32 %v349, %v350
        %368 = vadd.xlane.f32.xlu0 %v367
        %v369 = vpop.xlane.xlu0 %368
        %v370 = vadd.f32 %v351, %v352
        %371 = vadd.xlane.f32.xlu0 %v370
        %v372 = vpop.xlane.xlu0 %371
        %v373 = vadd.f32 %v353, %v354
        %374 = vadd.xlane.f32.xlu0 %v373
        %v375 = vpop.xlane.xlu0 %374
        %v376 = vadd.f32 %v355, %v356
        %377 = vadd.xlane.f32.xlu0 %v376
        %v378 = vpop.xlane.xlu0 %377
        %v379 = vadd.f32 %v357, %v358
        %380 = vadd.xlane.f32.xlu0 %v379
        %v381 = vpop.xlane.xlu0 %380
        %v382 = vadd.f32 %v359, %v360
        %383 = vadd.xlane.f32.xlu0 %v382
        %v384 = vpop.xlane.xlu0 %383
        %v385 = vld [vmem:[%s3] sm:$0xff]
        %v386 = vld [vmem:[%s3 + $0x8] sm:$0xff]
        %v387 = vld [vmem:[%s3 + $0x10] sm:$0xff]
        %v388 = vld [vmem:[%s3 + $0x18] sm:$0xff]
        %v389 = vld [vmem:[%s3 + $0x20] sm:$0xff]
        %v390 = vld [vmem:[%s3 + $0x28] sm:$0xff]
        %v391 = vld [vmem:[%s3 + $0x30] sm:$0xff]
        %v392 = vld [vmem:[%s3 + $0x38] sm:$0xff]
        %v393 = vld [vmem:[%s3 + $0x40] sm:$0xff]
        %v394 = vld [vmem:[%s3 + $0x48] sm:$0xff]
        %v395 = vld [vmem:[%s3 + $0x50] sm:$0xff]
        %v396 = vld [vmem:[%s3 + $0x58] sm:$0xff]
        %v397 = vld [vmem:[%s3 + $0x60] sm:$0xff]
        %v398 = vld [vmem:[%s3 + $0x68] sm:$0xff]
        %v399 = vld [vmem:[%s3 + $0x70] sm:$0xff]
        %v400 = vld [vmem:[%s3 + $0x78] sm:$0xff]
        %401 = vmatpush.msra.mxu0 %v384
        %402 = vmatpush.msra.mxu0 %v381
        %403 = vmatpush.msra.mxu0 %v378
        %404 = vmatpush.msra.mxu0 %v375
        %405 = vmatpush.msra.mxu0 %v372
        %406 = vmatpush.msra.mxu0 %v369
        %407 = vmatpush.msra.mxu0 %v366
        %408 = vmatpush.msra.mxu0 %v363
        %409 = vmatpush.msra.mxu0 %v344
        %410 = vmatpush.msra.mxu0 %v341
        %411 = vmatpush.msra.mxu0 %v338
        %412 = vmatpush.msra.mxu0 %v335
        %413 = vmatpush.msra.mxu0 %v332
        %414 = vmatpush.msra.mxu0 %v329
        %415 = vmatpush.msra.mxu0 %v326
        %416 = vmatpush.msra.mxu0 %v323
        %417 = vmatmul.f32.gmra.mxu0 %v385
        %v418 = vpop.f32.mrf.mxu0
        %v419 = vadd.f32 0.0, %v418
        %420 = vmatmul.f32.gmra.mxu0 %v386
        %v421 = vpop.f32.mrf.mxu0
        %v422 = vadd.f32 0.0, %v421
        %423 = vmatmul.f32.gmra.mxu0 %v387
        %v424 = vpop.f32.mrf.mxu0
        %v425 = vadd.f32 0.0, %v424
        %426 = vmatmul.f32.gmra.mxu0 %v388
        %v427 = vpop.f32.mrf.mxu0
        %v428 = vadd.f32 0.0, %v427
        %429 = vmatmul.f32.gmra.mxu0 %v389
        %v430 = vpop.f32.mrf.mxu0
        %v431 = vadd.f32 0.0, %v430
        %432 = vmatmul.f32.gmra.mxu0 %v390
        %v433 = vpop.f32.mrf.mxu0
        %v434 = vadd.f32 0.0, %v433
        %435 = vmatmul.f32.gmra.mxu0 %v391
        %v436 = vpop.f32.mrf.mxu0
        %v437 = vadd.f32 0.0, %v436
        %438 = vmatmul.f32.gmra.mxu0 %v392
        %v439 = vpop.f32.mrf.mxu0
        %v440 = vadd.f32 0.0, %v439
        %441 = vmatmul.f32.gmra.mxu0 %v393
        %v442 = vpop.f32.mrf.mxu0
        %v443 = vadd.f32 0.0, %v442
        %444 = vmatmul.f32.gmra.mxu0 %v394
        %v445 = vpop.f32.mrf.mxu0
        %v446 = vadd.f32 0.0, %v445
        %447 = vmatmul.f32.gmra.mxu0 %v395
        %v448 = vpop.f32.mrf.mxu0
        %v449 = vadd.f32 0.0, %v448
        %450 = vmatmul.f32.gmra.mxu0 %v396
        %v451 = vpop.f32.mrf.mxu0
        %v452 = vadd.f32 0.0, %v451
        %453 = vmatmul.f32.gmra.mxu0 %v397
        %v454 = vpop.f32.mrf.mxu0
        %v455 = vadd.f32 0.0, %v454
        %456 = vmatmul.f32.gmra.mxu0 %v398
        %v457 = vpop.f32.mrf.mxu0
        %v458 = vadd.f32 0.0, %v457
        %459 = vmatmul.f32.gmra.mxu0 %v399
        %v460 = vpop.f32.mrf.mxu0
        %v461 = vadd.f32 0.0, %v460
        %462 = vmatmul.f32.gmra.mxu0 %v400
        %v463 = vpop.f32.mrf.mxu0
        %v464 = vadd.f32 0.0, %v463
        %465 = vdwg.mxu0
        %v466 = vmul.f32 %v419, %v419
        %v467 = vmul.f32 %v422, %v422
        %v468 = vmul.f32 %v425, %v425
        %v469 = vmul.f32 %v428, %v428
        %v470 = vmul.f32 %v431, %v431
        %v471 = vmul.f32 %v434, %v434
        %v472 = vmul.f32 %v437, %v437
        %v473 = vmul.f32 %v440, %v440
        %v474 = vsub.f32 %v443, %v466
        %v475 = vsub.f32 %v446, %v467
        %v476 = vsub.f32 %v449, %v468
        %v477 = vsub.f32 %v452, %v469
        %v478 = vsub.f32 %v455, %v470
        %v479 = vsub.f32 %v458, %v471
        %v480 = vsub.f32 %v461, %v472
        %v481 = vsub.f32 %v464, %v473
        %v482 = vadd.f32 %v474, 1e-05
        %v483 = vadd.f32 %v475, 1e-05
        %v484 = vadd.f32 %v476, 1e-05
        %v485 = vadd.f32 %v477, 1e-05
        %v486 = vadd.f32 %v478, 1e-05
        %v487 = vadd.f32 %v479, 1e-05
        %v488 = vadd.f32 %v480, 1e-05
        %v489 = vadd.f32 %v481, 1e-05
        %v490 = vrsqrt.pop %v482
        %v491 = vmul.f32 %v490, %v482
        %v492 = vmul.f32 %v491, %v490
        %v493 = vmul.f32 0.5, %v492
        %v494 = vsub.f32 1.5, %v493
        %v495 = vmul.f32 %v490, %v494
        %vm496 = vweird.f32 %v482
        %vm497 = vweird.f32 %v490
        %vm498 = vmor %vm496, %vm497
        %v499 = vsel %vm498, %v490, %v495
        %v500 = vrsqrt.pop %v483
        %v501 = vmul.f32 %v500, %v483
        %v502 = vmul.f32 %v501, %v500
        %v503 = vmul.f32 0.5, %v502
        %v504 = vsub.f32 1.5, %v503
        %v505 = vmul.f32 %v500, %v504
        %vm506 = vweird.f32 %v483
        %vm507 = vweird.f32 %v500
        %vm508 = vmor %vm506, %vm507
        %v509 = vsel %vm508, %v500, %v505
        %v510 = vrsqrt.pop %v484
        %v511 = vmul.f32 %v510, %v484
        %v512 = vmul.f32 %v511, %v510
        %v513 = vmul.f32 0.5, %v512
        %v514 = vsub.f32 1.5, %v513
        %v515 = vmul.f32 %v510, %v514
        %vm516 = vweird.f32 %v484
        %vm517 = vweird.f32 %v510
        %vm518 = vmor %vm516, %vm517
        %v519 = vsel %vm518, %v510, %v515
        %v520 = vrsqrt.pop %v485
        %v521 = vmul.f32 %v520, %v485
        %v522 = vmul.f32 %v521, %v520
        %v523 = vmul.f32 0.5, %v522
        %v524 = vsub.f32 1.5, %v523
        %v525 = vmul.f32 %v520, %v524
        %vm526 = vweird.f32 %v485
        %vm527 = vweird.f32 %v520
        %vm528 = vmor %vm526, %vm527
        %v529 = vsel %vm528, %v520, %v525
        %v530 = vrsqrt.pop %v486
        %v531 = vmul.f32 %v530, %v486
        %v532 = vmul.f32 %v531, %v530
        %v533 = vmul.f32 0.5, %v532
        %v534 = vsub.f32 1.5, %v533
        %v535 = vmul.f32 %v530, %v534
        %vm536 = vweird.f32 %v486
        %vm537 = vweird.f32 %v530
        %vm538 = vmor %vm536, %vm537
        %v539 = vsel %vm538, %v530, %v535
        %v540 = vrsqrt.pop %v487
        %v541 = vmul.f32 %v540, %v487
        %v542 = vmul.f32 %v541, %v540
        %v543 = vmul.f32 0.5, %v542
        %v544 = vsub.f32 1.5, %v543
        %v545 = vmul.f32 %v540, %v544
        %vm546 = vweird.f32 %v487
        %vm547 = vweird.f32 %v540
        %vm548 = vmor %vm546, %vm547
        %v549 = vsel %vm548, %v540, %v545
        %v550 = vrsqrt.pop %v488
        %v551 = vmul.f32 %v550, %v488
        %v552 = vmul.f32 %v551, %v550
        %v553 = vmul.f32 0.5, %v552
        %v554 = vsub.f32 1.5, %v553
        %v555 = vmul.f32 %v550, %v554
        %vm556 = vweird.f32 %v488
        %vm557 = vweird.f32 %v550
        %vm558 = vmor %vm556, %vm557
        %v559 = vsel %vm558, %v550, %v555
        %v560 = vrsqrt.pop %v489
        %v561 = vmul.f32 %v560, %v489
        %v562 = vmul.f32 %v561, %v560
        %v563 = vmul.f32 0.5, %v562
        %v564 = vsub.f32 1.5, %v563
        %v565 = vmul.f32 %v560, %v564
        %vm566 = vweird.f32 %v489
        %vm567 = vweird.f32 %v560
        %vm568 = vmor %vm566, %vm567
        %v569 = vsel %vm568, %v560, %v565
        %v570 = vld [vmem:[%s1] sm:$0xff]
        %v571 = vld [vmem:[%s1 + $0x8] sm:$0xff]
        %v572 = vld [vmem:[%s1 + $0x10] sm:$0xff]
        %v573 = vld [vmem:[%s1 + $0x18] sm:$0xff]
        %v574 = vld [vmem:[%s1 + $0x20] sm:$0xff]
        %v575 = vld [vmem:[%s1 + $0x28] sm:$0xff]
        %v576 = vld [vmem:[%s1 + $0x30] sm:$0xff]
        %v577 = vld [vmem:[%s1 + $0x38] sm:$0xff]
        %v578 = vmul.f32 %v499, %v570
        %v579 = vmul.f32 %v509, %v571
        %v580 = vmul.f32 %v519, %v572
        %v581 = vmul.f32 %v529, %v573
        %v582 = vmul.f32 %v539, %v574
        %v583 = vmul.f32 %v549, %v575
        %v584 = vmul.f32 %v559, %v576
        %v585 = vmul.f32 %v569, %v577
        %v586 = vld [vmem:[%s2] sm:$0xff]
        %v587 = vld [vmem:[%s2 + $0x8] sm:$0xff]
        %v588 = vld [vmem:[%s2 + $0x10] sm:$0xff]
        %v589 = vld [vmem:[%s2 + $0x18] sm:$0xff]
        %v590 = vld [vmem:[%s2 + $0x20] sm:$0xff]
        %v591 = vld [vmem:[%s2 + $0x28] sm:$0xff]
        %v592 = vld [vmem:[%s2 + $0x30] sm:$0xff]
        %v593 = vld [vmem:[%s2 + $0x38] sm:$0xff]
        %v594 = vmul.f32 %v419, %v578
        %v595 = vmul.f32 %v422, %v579
        %v596 = vmul.f32 %v425, %v580
        %v597 = vmul.f32 %v428, %v581
        %v598 = vmul.f32 %v431, %v582
        %v599 = vmul.f32 %v434, %v583
        %v600 = vmul.f32 %v437, %v584
        %v601 = vmul.f32 %v440, %v585
        %v602 = vsub.f32 %v586, %v594
        %v603 = vsub.f32 %v587, %v595
        %v604 = vsub.f32 %v588, %v596
        %v605 = vsub.f32 %v589, %v597
        %v606 = vsub.f32 %v590, %v598
        %v607 = vsub.f32 %v591, %v599
        %v608 = vsub.f32 %v592, %v600
        %v609 = vsub.f32 %v593, %v601
        %611 = vset.pattern.permute.xlu0 0
        %612 = vperm.xlu0 %611, %v578
        %v613 = vpop.permute.xlu0 %612
        %616 = vset.pattern.permute.xlu0 0
        %617 = vperm.xlu0 %616, %v579
        %v618 = vpop.permute.xlu0 %617
        %621 = vset.pattern.permute.xlu0 0
        %622 = vperm.xlu0 %621, %v580
        %v623 = vpop.permute.xlu0 %622
        %626 = vset.pattern.permute.xlu0 0
        %627 = vperm.xlu0 %626, %v581
        %v628 = vpop.permute.xlu0 %627
        %631 = vset.pattern.permute.xlu0 0
        %632 = vperm.xlu0 %631, %v582
        %v633 = vpop.permute.xlu0 %632
        %636 = vset.pattern.permute.xlu0 0
        %637 = vperm.xlu0 %636, %v583
        %v638 = vpop.permute.xlu0 %637
        %641 = vset.pattern.permute.xlu0 0
        %642 = vperm.xlu0 %641, %v584
        %v643 = vpop.permute.xlu0 %642
        %646 = vset.pattern.permute.xlu0 0
        %647 = vperm.xlu0 %646, %v585
        %v648 = vpop.permute.xlu0 %647
        %v650 = vmul.f32 %v305, %v613
        %v651 = vmul.f32 %v306, %v613
        %v652 = vmul.f32 %v307, %v618
        %v653 = vmul.f32 %v308, %v618
        %v654 = vmul.f32 %v309, %v623
        %v655 = vmul.f32 %v310, %v623
        %v656 = vmul.f32 %v311, %v628
        %v657 = vmul.f32 %v312, %v628
        %v658 = vmul.f32 %v313, %v633
        %v659 = vmul.f32 %v314, %v633
        %v660 = vmul.f32 %v315, %v638
        %v661 = vmul.f32 %v316, %v638
        %v662 = vmul.f32 %v317, %v643
        %v663 = vmul.f32 %v318, %v643
        %v664 = vmul.f32 %v319, %v648
        %v665 = vmul.f32 %v320, %v648
        %667 = vset.pattern.permute.xlu0 0
        %668 = vperm.xlu0 %667, %v602
        %v669 = vpop.permute.xlu0 %668
        %672 = vset.pattern.permute.xlu0 0
        %673 = vperm.xlu0 %672, %v603
        %v674 = vpop.permute.xlu0 %673
        %677 = vset.pattern.permute.xlu0 0
        %678 = vperm.xlu0 %677, %v604
        %v679 = vpop.permute.xlu0 %678
        %682 = vset.pattern.permute.xlu0 0
        %683 = vperm.xlu0 %682, %v605
        %v684 = vpop.permute.xlu0 %683
        %687 = vset.pattern.permute.xlu0 0
        %688 = vperm.xlu0 %687, %v606
        %v689 = vpop.permute.xlu0 %688
        %692 = vset.pattern.permute.xlu0 0
        %693 = vperm.xlu0 %692, %v607
        %v694 = vpop.permute.xlu0 %693
        %697 = vset.pattern.permute.xlu0 0
        %698 = vperm.xlu0 %697, %v608
        %v699 = vpop.permute.xlu0 %698
        %702 = vset.pattern.permute.xlu0 0
        %703 = vperm.xlu0 %702, %v609
        %v704 = vpop.permute.xlu0 %703
        %v706 = vadd.f32 %v650, %v669
        %v707 = vadd.f32 %v651, %v669
        %v708 = vadd.f32 %v652, %v674
        %v709 = vadd.f32 %v653, %v674
        %v710 = vadd.f32 %v654, %v679
        %v711 = vadd.f32 %v655, %v679
        %v712 = vadd.f32 %v656, %v684
        %v713 = vadd.f32 %v657, %v684
        %v714 = vadd.f32 %v658, %v689
        %v715 = vadd.f32 %v659, %v689
        %v716 = vadd.f32 %v660, %v694
        %v717 = vadd.f32 %v661, %v694
        %v718 = vadd.f32 %v662, %v699
        %v719 = vadd.f32 %v663, %v699
        %v720 = vadd.f32 %v664, %v704
        %v721 = vadd.f32 %v665, %v704
        %v722 = vpack.c.bf16 %v708, %v706
        %v723 = vpack.c.bf16 %v709, %v707
        %v724 = vpack.c.bf16 %v712, %v710
        %v725 = vpack.c.bf16 %v713, %v711
        %v726 = vpack.c.bf16 %v716, %v714
        %v727 = vpack.c.bf16 %v717, %v715
        %v728 = vpack.c.bf16 %v720, %v718
        %v729 = vpack.c.bf16 %v721, %v719
        %v730 = vld [vmem:[%s4] sm:$0xf]
        %v731 = vld [vmem:[%s4 + $0x4] sm:$0xf]
        %v732 = vld [vmem:[%s4 + $0x8] sm:$0xf]
        %v733 = vld [vmem:[%s4 + $0xc] sm:$0xf]
        %v734 = vld [vmem:[%s4 + $0x10] sm:$0xf]
        %v735 = vld [vmem:[%s4 + $0x14] sm:$0xf]
        %v736 = vld [vmem:[%s4 + $0x18] sm:$0xf]
        %v737 = vld [vmem:[%s4 + $0x1c] sm:$0xf]
        %v738 = vld [vmem:[%s4 + $0x20] sm:$0xf]
        %v739 = vld [vmem:[%s4 + $0x24] sm:$0xf]
        %v740 = vld [vmem:[%s4 + $0x28] sm:$0xf]
        %v741 = vld [vmem:[%s4 + $0x2c] sm:$0xf]
        %v742 = vld [vmem:[%s4 + $0x30] sm:$0xf]
        %v743 = vld [vmem:[%s4 + $0x34] sm:$0xf]
        %v744 = vld [vmem:[%s4 + $0x38] sm:$0xf]
        %v745 = vld [vmem:[%s4 + $0x3c] sm:$0xf]
        %v746 = vld [vmem:[%s4 + $0x40] sm:$0xf]
        %v747 = vld [vmem:[%s4 + $0x44] sm:$0xf]
        %v748 = vld [vmem:[%s4 + $0x48] sm:$0xf]
        %v749 = vld [vmem:[%s4 + $0x4c] sm:$0xf]
        %v750 = vld [vmem:[%s4 + $0x50] sm:$0xf]
        %v751 = vld [vmem:[%s4 + $0x54] sm:$0xf]
        %v752 = vld [vmem:[%s4 + $0x58] sm:$0xf]
        %v753 = vld [vmem:[%s4 + $0x5c] sm:$0xf]
        %v754 = vld [vmem:[%s5] sm:$0xff]
        %v755 = vld [vmem:[%s5 + $0x8] sm:$0xff]
        %v756 = vld [vmem:[%s5 + $0x10] sm:$0xff]
        %v757 = vld [vmem:[%s5 + $0x18] sm:$0xff]
        %v758 = vld [vmem:[%s5 + $0x20] sm:$0xff]
        %v759 = vld [vmem:[%s5 + $0x28] sm:$0xff]
        %v760 = vld [vmem:[%s5 + $0x30] sm:$0xff]
        %v761 = vld [vmem:[%s5 + $0x38] sm:$0xff]
        %v762 = vld [vmem:[%s5 + $0x40] sm:$0xff]
        %v763 = vld [vmem:[%s5 + $0x48] sm:$0xff]
        %v764 = vld [vmem:[%s5 + $0x50] sm:$0xff]
        %v765 = vld [vmem:[%s5 + $0x58] sm:$0xff]
        %v766 = vld [vmem:[%s5 + $0x60] sm:$0xff]
        %v767 = vld [vmem:[%s5 + $0x68] sm:$0xff]
        %v768 = vld [vmem:[%s5 + $0x70] sm:$0xff]
        %v769 = vld [vmem:[%s5 + $0x78] sm:$0xff]
        %v770 = vld [vmem:[%s5 + $0x80] sm:$0xff]
        %v771 = vld [vmem:[%s5 + $0x88] sm:$0xff]
        %v772 = vld [vmem:[%s5 + $0x90] sm:$0xff]
        %v773 = vld [vmem:[%s5 + $0x98] sm:$0xff]
        %v774 = vld [vmem:[%s5 + $0xa0] sm:$0xff]
        %v775 = vld [vmem:[%s5 + $0xa8] sm:$0xff]
        %v776 = vld [vmem:[%s5 + $0xb0] sm:$0xff]
        %v777 = vld [vmem:[%s5 + $0xb8] sm:$0xff]
        %779 = vset.pattern.permute.xlu0 0
        %780 = vperm.xlu0 %779, %v754
        %v781 = vpop.permute.xlu0 %780
        %784 = vset.pattern.permute.xlu0 0
        %785 = vperm.xlu0 %784, %v755
        %v786 = vpop.permute.xlu0 %785
        %789 = vset.pattern.permute.xlu0 0
        %790 = vperm.xlu0 %789, %v756
        %v791 = vpop.permute.xlu0 %790
        %794 = vset.pattern.permute.xlu0 0
        %795 = vperm.xlu0 %794, %v757
        %v796 = vpop.permute.xlu0 %795
        %799 = vset.pattern.permute.xlu0 0
        %800 = vperm.xlu0 %799, %v758
        %v801 = vpop.permute.xlu0 %800
        %804 = vset.pattern.permute.xlu0 0
        %805 = vperm.xlu0 %804, %v759
        %v806 = vpop.permute.xlu0 %805
        %809 = vset.pattern.permute.xlu0 0
        %810 = vperm.xlu0 %809, %v760
        %v811 = vpop.permute.xlu0 %810
        %814 = vset.pattern.permute.xlu0 0
        %815 = vperm.xlu0 %814, %v761
        %v816 = vpop.permute.xlu0 %815
        %819 = vset.pattern.permute.xlu0 0
        %820 = vperm.xlu0 %819, %v762
        %v821 = vpop.permute.xlu0 %820
        %824 = vset.pattern.permute.xlu0 0
        %825 = vperm.xlu0 %824, %v763
        %v826 = vpop.permute.xlu0 %825
        %829 = vset.pattern.permute.xlu0 0
        %830 = vperm.xlu0 %829, %v764
        %v831 = vpop.permute.xlu0 %830
        %834 = vset.pattern.permute.xlu0 0
        %835 = vperm.xlu0 %834, %v765
        %v836 = vpop.permute.xlu0 %835
        %839 = vset.pattern.permute.xlu0 0
        %840 = vperm.xlu0 %839, %v766
        %v841 = vpop.permute.xlu0 %840
        %844 = vset.pattern.permute.xlu0 0
        %845 = vperm.xlu0 %844, %v767
        %v846 = vpop.permute.xlu0 %845
        %849 = vset.pattern.permute.xlu0 0
        %850 = vperm.xlu0 %849, %v768
        %v851 = vpop.permute.xlu0 %850
        %854 = vset.pattern.permute.xlu0 0
        %855 = vperm.xlu0 %854, %v769
        %v856 = vpop.permute.xlu0 %855
        %859 = vset.pattern.permute.xlu0 0
        %860 = vperm.xlu0 %859, %v770
        %v861 = vpop.permute.xlu0 %860
        %864 = vset.pattern.permute.xlu0 0
        %865 = vperm.xlu0 %864, %v771
        %v866 = vpop.permute.xlu0 %865
        %869 = vset.pattern.permute.xlu0 0
        %870 = vperm.xlu0 %869, %v772
        %v871 = vpop.permute.xlu0 %870
        %874 = vset.pattern.permute.xlu0 0
        %875 = vperm.xlu0 %874, %v773
        %v876 = vpop.permute.xlu0 %875
        %879 = vset.pattern.permute.xlu0 0
        %880 = vperm.xlu0 %879, %v774
        %v881 = vpop.permute.xlu0 %880
        %884 = vset.pattern.permute.xlu0 0
        %885 = vperm.xlu0 %884, %v775
        %v886 = vpop.permute.xlu0 %885
        %889 = vset.pattern.permute.xlu0 0
        %890 = vperm.xlu0 %889, %v776
        %v891 = vpop.permute.xlu0 %890
        %894 = vset.pattern.permute.xlu0 0
        %895 = vperm.xlu0 %894, %v777
        %v896 = vpop.permute.xlu0 %895
        %v922 = vunpack.c.l.b16 %v730
        %v923 = vunpack.c.l.b16 %v731
        %v924 = vunpack.c.l.b16 %v732
        %v925 = vunpack.c.l.b16 %v733
        %v926 = vunpack.c.l.b16 %v734
        %v927 = vunpack.c.l.b16 %v735
        %v928 = vunpack.c.l.b16 %v736
        %v929 = vunpack.c.l.b16 %v737
        %v930 = vunpack.c.l.b16 %v738
        %v931 = vunpack.c.l.b16 %v739
        %v932 = vunpack.c.l.b16 %v740
        %v933 = vunpack.c.l.b16 %v741
        %v934 = vunpack.c.l.b16 %v742
        %v935 = vunpack.c.l.b16 %v743
        %v936 = vunpack.c.l.b16 %v744
        %v937 = vunpack.c.l.b16 %v745
        %v938 = vunpack.c.l.b16 %v746
        %v939 = vunpack.c.l.b16 %v747
        %v940 = vunpack.c.l.b16 %v748
        %v941 = vunpack.c.l.b16 %v749
        %v942 = vunpack.c.l.b16 %v750
        %v943 = vunpack.c.l.b16 %v751
        %v944 = vunpack.c.l.b16 %v752
        %v945 = vunpack.c.l.b16 %v753
        %v946 = vpack.c.b16 %v923, %v922
        %v947 = vpack.c.b16 %v925, %v924
        %v948 = vpack.c.b16 %v927, %v926
        %v949 = vpack.c.b16 %v929, %v928
        %v950 = vpack.c.b16 %v931, %v930
        %v951 = vpack.c.b16 %v933, %v932
        %v952 = vpack.c.b16 %v935, %v934
        %v953 = vpack.c.b16 %v937, %v936
        %v954 = vpack.c.b16 %v939, %v938
        %v955 = vpack.c.b16 %v941, %v940
        %v956 = vpack.c.b16 %v943, %v942
        %v957 = vpack.c.b16 %v945, %v944
        %vm958 = vcmask 523264
        %v960 = vsel %vm958, %v946, 0
        %v963 = vsel %vm958, %v947, 0
        %v966 = vsel %vm958, %v948, 0
        %v969 = vsel %vm958, %v949, 0
        %v972 = vsel %vm958, %v950, 0
        %v975 = vsel %vm958, %v951, 0
        %v978 = vsel %vm958, %v952, 0
        %v981 = vsel %vm958, %v953, 0
        %v984 = vsel %vm958, %v954, 0
        %v987 = vsel %vm958, %v955, 0
        %v990 = vsel %vm958, %v956, 0
        %v993 = vsel %vm958, %v957, 0
        %995 = vmatpush.bf16.msra.mxu0 0
        %996 = vmatpush.bf16.msra.mxu0 0
        %997 = vmatpush.bf16.msra.mxu0 0
        %998 = vmatpush.bf16.msra.mxu0 0
        %999 = vmatpush.bf16.msra.mxu0 %v728
        %1000 = vmatpush.bf16.msra.mxu0 %v726
        %1001 = vmatpush.bf16.msra.mxu0 %v724
        %1002 = vmatpush.bf16.msra.mxu0 %v722
        %1003 = vmatmul.bf16.gmra.mxu0 %v960
        %v1004 = vpop.f32.mrf.mxu0
        %v1005 = vadd.f32 %v781, %v1004
        %v1006 = vpop.f32.mrf.mxu0
        %v1007 = vadd.f32 %v786, %v1006
        %1008 = vmatmul.bf16.gmra.mxu0 %v963
        %v1009 = vpop.f32.mrf.mxu0
        %v1010 = vadd.f32 %v791, %v1009
        %v1011 = vpop.f32.mrf.mxu0
        %v1012 = vadd.f32 %v796, %v1011
        %1013 = vmatmul.bf16.gmra.mxu0 %v966
        %v1014 = vpop.f32.mrf.mxu0
        %v1015 = vadd.f32 %v801, %v1014
        %v1016 = vpop.f32.mrf.mxu0
        %v1017 = vadd.f32 %v806, %v1016
        %1018 = vmatmul.bf16.gmra.mxu0 %v969
        %v1019 = vpop.f32.mrf.mxu0
        %v1020 = vadd.f32 %v811, %v1019
        %v1021 = vpop.f32.mrf.mxu0
        %v1022 = vadd.f32 %v816, %v1021
        %1023 = vmatmul.bf16.gmra.mxu0 %v972
        %v1024 = vpop.f32.mrf.mxu0
        %v1025 = vadd.f32 %v821, %v1024
        %v1026 = vpop.f32.mrf.mxu0
        %v1027 = vadd.f32 %v826, %v1026
        %1028 = vmatmul.bf16.gmra.mxu0 %v975
        %v1029 = vpop.f32.mrf.mxu0
        %v1030 = vadd.f32 %v831, %v1029
        %v1031 = vpop.f32.mrf.mxu0
        %v1032 = vadd.f32 %v836, %v1031
        %1033 = vmatmul.bf16.gmra.mxu0 %v978
        %v1034 = vpop.f32.mrf.mxu0
        %v1035 = vadd.f32 %v841, %v1034
        %v1036 = vpop.f32.mrf.mxu0
        %v1037 = vadd.f32 %v846, %v1036
        %1038 = vmatmul.bf16.gmra.mxu0 %v981
        %v1039 = vpop.f32.mrf.mxu0
        %v1040 = vadd.f32 %v851, %v1039
        %v1041 = vpop.f32.mrf.mxu0
        %v1042 = vadd.f32 %v856, %v1041
        %1043 = vmatmul.bf16.gmra.mxu0 %v984
        %v1044 = vpop.f32.mrf.mxu0
        %v1045 = vadd.f32 %v861, %v1044
        %v1046 = vpop.f32.mrf.mxu0
        %v1047 = vadd.f32 %v866, %v1046
        %1048 = vmatmul.bf16.gmra.mxu0 %v987
        %v1049 = vpop.f32.mrf.mxu0
        %v1050 = vadd.f32 %v871, %v1049
        %v1051 = vpop.f32.mrf.mxu0
        %v1052 = vadd.f32 %v876, %v1051
        %1053 = vmatmul.bf16.gmra.mxu0 %v990
        %v1054 = vpop.f32.mrf.mxu0
        %v1055 = vadd.f32 %v881, %v1054
        %v1056 = vpop.f32.mrf.mxu0
        %v1057 = vadd.f32 %v886, %v1056
        %1058 = vmatmul.bf16.gmra.mxu0 %v993
        %v1059 = vpop.f32.mrf.mxu0
        %v1060 = vadd.f32 %v891, %v1059
        %v1061 = vpop.f32.mrf.mxu0
        %v1062 = vadd.f32 %v896, %v1061
        %1063 = vdwg.mxu0
        %1064 = vmatpush.bf16.msra.mxu0 0
        %1065 = vmatpush.bf16.msra.mxu0 0
        %1066 = vmatpush.bf16.msra.mxu0 0
        %1067 = vmatpush.bf16.msra.mxu0 0
        %1068 = vmatpush.bf16.msra.mxu0 %v729
        %1069 = vmatpush.bf16.msra.mxu0 %v727
        %1070 = vmatpush.bf16.msra.mxu0 %v725
        %1071 = vmatpush.bf16.msra.mxu0 %v723
        %1072 = vmatmul.bf16.gmra.mxu0 %v960
        %v1073 = vpop.f32.mrf.mxu0
        %v1074 = vadd.f32 %v781, %v1073
        %v1075 = vpop.f32.mrf.mxu0
        %v1076 = vadd.f32 %v786, %v1075
        %1077 = vmatmul.bf16.gmra.mxu0 %v963
        %v1078 = vpop.f32.mrf.mxu0
        %v1079 = vadd.f32 %v791, %v1078
        %v1080 = vpop.f32.mrf.mxu0
        %v1081 = vadd.f32 %v796, %v1080
        %1082 = vmatmul.bf16.gmra.mxu0 %v966
        %v1083 = vpop.f32.mrf.mxu0
        %v1084 = vadd.f32 %v801, %v1083
        %v1085 = vpop.f32.mrf.mxu0
        %v1086 = vadd.f32 %v806, %v1085
        %1087 = vmatmul.bf16.gmra.mxu0 %v969
        %v1088 = vpop.f32.mrf.mxu0
        %v1089 = vadd.f32 %v811, %v1088
        %v1090 = vpop.f32.mrf.mxu0
        %v1091 = vadd.f32 %v816, %v1090
        %1092 = vmatmul.bf16.gmra.mxu0 %v972
        %v1093 = vpop.f32.mrf.mxu0
        %v1094 = vadd.f32 %v821, %v1093
        %v1095 = vpop.f32.mrf.mxu0
        %v1096 = vadd.f32 %v826, %v1095
        %1097 = vmatmul.bf16.gmra.mxu0 %v975
        %v1098 = vpop.f32.mrf.mxu0
        %v1099 = vadd.f32 %v831, %v1098
        %v1100 = vpop.f32.mrf.mxu0
        %v1101 = vadd.f32 %v836, %v1100
        %1102 = vmatmul.bf16.gmra.mxu0 %v978
        %v1103 = vpop.f32.mrf.mxu0
        %v1104 = vadd.f32 %v841, %v1103
        %v1105 = vpop.f32.mrf.mxu0
        %v1106 = vadd.f32 %v846, %v1105
        %1107 = vmatmul.bf16.gmra.mxu0 %v981
        %v1108 = vpop.f32.mrf.mxu0
        %v1109 = vadd.f32 %v851, %v1108
        %v1110 = vpop.f32.mrf.mxu0
        %v1111 = vadd.f32 %v856, %v1110
        %1112 = vmatmul.bf16.gmra.mxu0 %v984
        %v1113 = vpop.f32.mrf.mxu0
        %v1114 = vadd.f32 %v861, %v1113
        %v1115 = vpop.f32.mrf.mxu0
        %v1116 = vadd.f32 %v866, %v1115
        %1117 = vmatmul.bf16.gmra.mxu0 %v987
        %v1118 = vpop.f32.mrf.mxu0
        %v1119 = vadd.f32 %v871, %v1118
        %v1120 = vpop.f32.mrf.mxu0
        %v1121 = vadd.f32 %v876, %v1120
        %1122 = vmatmul.bf16.gmra.mxu0 %v990
        %v1123 = vpop.f32.mrf.mxu0
        %v1124 = vadd.f32 %v881, %v1123
        %v1125 = vpop.f32.mrf.mxu0
        %v1126 = vadd.f32 %v886, %v1125
        %1127 = vmatmul.bf16.gmra.mxu0 %v993
        %v1128 = vpop.f32.mrf.mxu0
        %v1129 = vadd.f32 %v891, %v1128
        %v1130 = vpop.f32.mrf.mxu0
        %v1131 = vadd.f32 %v896, %v1130
        %1132 = vdwg.mxu0
        %v1133 = vpack.c.bf16 %v1074, %v1005
        %v1134 = vpack.c.bf16 %v1076, %v1007
        %v1135 = vpack.c.bf16 %v1079, %v1010
        %v1136 = vpack.c.bf16 %v1081, %v1012
        %v1137 = vpack.c.bf16 %v1084, %v1015
        %v1138 = vpack.c.bf16 %v1086, %v1017
        %v1139 = vpack.c.bf16 %v1089, %v1020
        %v1140 = vpack.c.bf16 %v1091, %v1022
        %v1141 = vpack.c.bf16 %v1094, %v1025
        %v1142 = vpack.c.bf16 %v1096, %v1027
        %v1143 = vpack.c.bf16 %v1099, %v1030
        %v1144 = vpack.c.bf16 %v1101, %v1032
        %v1145 = vpack.c.bf16 %v1104, %v1035
        %v1146 = vpack.c.bf16 %v1106, %v1037
        %v1147 = vpack.c.bf16 %v1109, %v1040
        %v1148 = vpack.c.bf16 %v1111, %v1042
        %v1149 = vpack.c.bf16 %v1114, %v1045
        %v1150 = vpack.c.bf16 %v1116, %v1047
        %v1151 = vpack.c.bf16 %v1119, %v1050
        %v1152 = vpack.c.bf16 %v1121, %v1052
        %v1153 = vpack.c.bf16 %v1124, %v1055
        %v1154 = vpack.c.bf16 %v1126, %v1057
        %v1155 = vpack.c.bf16 %v1129, %v1060
        %v1156 = vpack.c.bf16 %v1131, %v1062
        %v1161 = vunpack.c.l.b16 %v1133
        %v1162 = vunpack.c.h.b16 %v1133
        %v1163 = vunpack.c.l.b16 %v1134
        %v1164 = vunpack.c.h.b16 %v1134
        %v1165 = vunpack.c.l.b16 %v1135
        %v1166 = vunpack.c.h.b16 %v1135
        %v1167 = vunpack.c.l.b16 %v1136
        %v1168 = vunpack.c.h.b16 %v1136
        %v1169 = vpack.c.b16 %v1163, %v1161
        %v1170 = vpack.c.b16 %v1164, %v1162
        %v1171 = vpack.c.b16 %v1167, %v1165
        %v1172 = vpack.c.b16 %v1168, %v1166
        %1177 = vxpose.binary.xlu0.c.b16.start [1/16] %v1170, %v1169, 128
        %1178 = vxpose.binary.xlu0.c.b16.cont [2/16] %v1172, %v1171, 128
        %1179 = vxpose.binary.xlu0.c.b16.cont [3/16] 0, 0, 128
        %1180 = vxpose.binary.xlu0.c.b16.cont [4/16] 0, 0, 128
        %1181 = vxpose.binary.xlu0.c.b16.cont [5/16] 0, 0, 128
        %1182 = vxpose.binary.xlu0.c.b16.cont [6/16] 0, 0, 128
        %1183 = vxpose.binary.xlu0.c.b16.cont [7/16] 0, 0, 128
        %1184 = vxpose.binary.xlu0.c.b16.end [8/16] 0, 0, 128
        %v1185 = vpop.trf.xlu0
        %v1186 = vpop.trf.xlu0
        %v1187 = vpop.trf.xlu0
        %v1188 = vpop.trf.xlu0
        %v1189 = vpop.trf.xlu0
        %v1190 = vpop.trf.xlu0
        %v1191 = vpop.trf.xlu0
        %v1192 = vpop.trf.xlu0
        %v1193 = vpop.trf.xlu0
        %v1194 = vpop.trf.xlu0
        %v1195 = vpop.trf.xlu0
        %v1196 = vpop.trf.xlu0
        %v1197 = vpop.trf.xlu0
        %v1198 = vpop.trf.xlu0
        %v1199 = vpop.trf.xlu0
        %v1200 = vpop.trf.xlu0
        %v1205 = vunpack.c.l.b16 %v1137
        %v1206 = vunpack.c.h.b16 %v1137
        %v1207 = vunpack.c.l.b16 %v1138
        %v1208 = vunpack.c.h.b16 %v1138
        %v1209 = vunpack.c.l.b16 %v1139
        %v1210 = vunpack.c.h.b16 %v1139
        %v1211 = vunpack.c.l.b16 %v1140
        %v1212 = vunpack.c.h.b16 %v1140
        %v1213 = vpack.c.b16 %v1207, %v1205
        %v1214 = vpack.c.b16 %v1208, %v1206
        %v1215 = vpack.c.b16 %v1211, %v1209
        %v1216 = vpack.c.b16 %v1212, %v1210
        %vm1221 = vcmask 261120
        %v1223 = vsel %vm1221, %v1185, 0
        %v1226 = vsel %vm1221, %v1187, 0
        %v1229 = vsel %vm1221, %v1189, 0
        %v1232 = vsel %vm1221, %v1191, 0
        %v1235 = vsel %vm1221, %v1193, 0
        %v1238 = vsel %vm1221, %v1195, 0
        %v1241 = vsel %vm1221, %v1197, 0
        %v1244 = vsel %vm1221, %v1199, 0
        %v1247 = vsel %vm1221, %v1186, 0
        %v1250 = vsel %vm1221, %v1188, 0
        %v1253 = vsel %vm1221, %v1190, 0
        %v1256 = vsel %vm1221, %v1192, 0
        %v1259 = vsel %vm1221, %v1194, 0
        %v1262 = vsel %vm1221, %v1196, 0
        %v1265 = vsel %vm1221, %v1198, 0
        %v1268 = vsel %vm1221, %v1200, 0
        %1270 = vmatpush.bf16.msra.mxu0 0
        %1271 = vmatpush.bf16.msra.mxu0 0
        %1272 = vmatpush.bf16.msra.mxu0 0
        %1273 = vmatpush.bf16.msra.mxu0 0
        %1274 = vmatpush.bf16.msra.mxu0 0
        %1275 = vmatpush.bf16.msra.mxu0 0
        %1276 = vmatpush.bf16.msra.mxu0 %v1215
        %1277 = vmatpush.bf16.msra.mxu0 %v1213
        %1278 = vmatmul.bf16.gmra.mxu0 %v1223
        %v1279 = vpop.f32.mrf.mxu0
        %v1280 = vadd.f32 0.0, %v1279
        %v1281 = vpop.f32.mrf.mxu0
        %v1282 = vadd.f32 0.0, %v1281
        %1283 = vmatmul.bf16.gmra.mxu0 %v1226
        %v1284 = vpop.f32.mrf.mxu0
        %v1285 = vadd.f32 0.0, %v1284
        %v1286 = vpop.f32.mrf.mxu0
        %v1287 = vadd.f32 0.0, %v1286
        %1288 = vmatmul.bf16.gmra.mxu0 %v1229
        %v1289 = vpop.f32.mrf.mxu0
        %v1290 = vadd.f32 0.0, %v1289
        %v1291 = vpop.f32.mrf.mxu0
        %v1292 = vadd.f32 0.0, %v1291
        %1293 = vmatmul.bf16.gmra.mxu0 %v1232
        %v1294 = vpop.f32.mrf.mxu0
        %v1295 = vadd.f32 0.0, %v1294
        %v1296 = vpop.f32.mrf.mxu0
        %v1297 = vadd.f32 0.0, %v1296
        %1298 = vmatmul.bf16.gmra.mxu0 %v1235
        %v1299 = vpop.f32.mrf.mxu0
        %v1300 = vadd.f32 0.0, %v1299
        %v1301 = vpop.f32.mrf.mxu0
        %v1302 = vadd.f32 0.0, %v1301
        %1303 = vmatmul.bf16.gmra.mxu0 %v1238
        %v1304 = vpop.f32.mrf.mxu0
        %v1305 = vadd.f32 0.0, %v1304
        %v1306 = vpop.f32.mrf.mxu0
        %v1307 = vadd.f32 0.0, %v1306
        %1308 = vmatmul.bf16.gmra.mxu0 %v1241
        %v1309 = vpop.f32.mrf.mxu0
        %v1310 = vadd.f32 0.0, %v1309
        %v1311 = vpop.f32.mrf.mxu0
        %v1312 = vadd.f32 0.0, %v1311
        %1313 = vmatmul.bf16.gmra.mxu0 %v1244
        %v1314 = vpop.f32.mrf.mxu0
        %v1315 = vadd.f32 0.0, %v1314
        %v1316 = vpop.f32.mrf.mxu0
        %v1317 = vadd.f32 0.0, %v1316
        %1318 = vmatmul.bf16.gmra.mxu0 %v1247
        %v1319 = vpop.f32.mrf.mxu0
        %v1320 = vadd.f32 0.0, %v1319
        %v1321 = vpop.f32.mrf.mxu0
        %v1322 = vadd.f32 0.0, %v1321
        %1323 = vmatmul.bf16.gmra.mxu0 %v1250
        %v1324 = vpop.f32.mrf.mxu0
        %v1325 = vadd.f32 0.0, %v1324
        %v1326 = vpop.f32.mrf.mxu0
        %v1327 = vadd.f32 0.0, %v1326
        %1328 = vmatmul.bf16.gmra.mxu0 %v1253
        %v1329 = vpop.f32.mrf.mxu0
        %v1330 = vadd.f32 0.0, %v1329
        %v1331 = vpop.f32.mrf.mxu0
        %v1332 = vadd.f32 0.0, %v1331
        %1333 = vmatmul.bf16.gmra.mxu0 %v1256
        %v1334 = vpop.f32.mrf.mxu0
        %v1335 = vadd.f32 0.0, %v1334
        %v1336 = vpop.f32.mrf.mxu0
        %v1337 = vadd.f32 0.0, %v1336
        %1338 = vmatmul.bf16.gmra.mxu0 %v1259
        %v1339 = vpop.f32.mrf.mxu0
        %v1340 = vadd.f32 0.0, %v1339
        %v1341 = vpop.f32.mrf.mxu0
        %v1342 = vadd.f32 0.0, %v1341
        %1343 = vmatmul.bf16.gmra.mxu0 %v1262
        %v1344 = vpop.f32.mrf.mxu0
        %v1345 = vadd.f32 0.0, %v1344
        %v1346 = vpop.f32.mrf.mxu0
        %v1347 = vadd.f32 0.0, %v1346
        %1348 = vmatmul.bf16.gmra.mxu0 %v1265
        %v1349 = vpop.f32.mrf.mxu0
        %v1350 = vadd.f32 0.0, %v1349
        %v1351 = vpop.f32.mrf.mxu0
        %v1352 = vadd.f32 0.0, %v1351
        %1353 = vmatmul.bf16.gmra.mxu0 %v1268
        %v1354 = vpop.f32.mrf.mxu0
        %v1355 = vadd.f32 0.0, %v1354
        %v1356 = vpop.f32.mrf.mxu0
        %v1357 = vadd.f32 0.0, %v1356
        %1358 = vdwg.mxu0
        %1359 = vmatpush.bf16.msra.mxu0 0
        %1360 = vmatpush.bf16.msra.mxu0 0
        %1361 = vmatpush.bf16.msra.mxu0 0
        %1362 = vmatpush.bf16.msra.mxu0 0
        %1363 = vmatpush.bf16.msra.mxu0 0
        %1364 = vmatpush.bf16.msra.mxu0 0
        %1365 = vmatpush.bf16.msra.mxu0 %v1216
        %1366 = vmatpush.bf16.msra.mxu0 %v1214
        %1367 = vmatmul.bf16.gmra.mxu0 %v1223
        %v1368 = vpop.f32.mrf.mxu0
        %v1369 = vadd.f32 0.0, %v1368
        %v1370 = vpop.f32.mrf.mxu0
        %v1371 = vadd.f32 0.0, %v1370
        %1372 = vmatmul.bf16.gmra.mxu0 %v1226
        %v1373 = vpop.f32.mrf.mxu0
        %v1374 = vadd.f32 0.0, %v1373
        %v1375 = vpop.f32.mrf.mxu0
        %v1376 = vadd.f32 0.0, %v1375
        %1377 = vmatmul.bf16.gmra.mxu0 %v1229
        %v1378 = vpop.f32.mrf.mxu0
        %v1379 = vadd.f32 0.0, %v1378
        %v1380 = vpop.f32.mrf.mxu0
        %v1381 = vadd.f32 0.0, %v1380
        %1382 = vmatmul.bf16.gmra.mxu0 %v1232
        %v1383 = vpop.f32.mrf.mxu0
        %v1384 = vadd.f32 0.0, %v1383
        %v1385 = vpop.f32.mrf.mxu0
        %v1386 = vadd.f32 0.0, %v1385
        %1387 = vmatmul.bf16.gmra.mxu0 %v1235
        %v1388 = vpop.f32.mrf.mxu0
        %v1389 = vadd.f32 0.0, %v1388
        %v1390 = vpop.f32.mrf.mxu0
        %v1391 = vadd.f32 0.0, %v1390
        %1392 = vmatmul.bf16.gmra.mxu0 %v1238
        %v1393 = vpop.f32.mrf.mxu0
        %v1394 = vadd.f32 0.0, %v1393
        %v1395 = vpop.f32.mrf.mxu0
        %v1396 = vadd.f32 0.0, %v1395
        %1397 = vmatmul.bf16.gmra.mxu0 %v1241
        %v1398 = vpop.f32.mrf.mxu0
        %v1399 = vadd.f32 0.0, %v1398
        %v1400 = vpop.f32.mrf.mxu0
        %v1401 = vadd.f32 0.0, %v1400
        %1402 = vmatmul.bf16.gmra.mxu0 %v1244
        %v1403 = vpop.f32.mrf.mxu0
        %v1404 = vadd.f32 0.0, %v1403
        %v1405 = vpop.f32.mrf.mxu0
        %v1406 = vadd.f32 0.0, %v1405
        %1407 = vmatmul.bf16.gmra.mxu0 %v1247
        %v1408 = vpop.f32.mrf.mxu0
        %v1409 = vadd.f32 0.0, %v1408
        %v1410 = vpop.f32.mrf.mxu0
        %v1411 = vadd.f32 0.0, %v1410
        %1412 = vmatmul.bf16.gmra.mxu0 %v1250
        %v1413 = vpop.f32.mrf.mxu0
        %v1414 = vadd.f32 0.0, %v1413
        %v1415 = vpop.f32.mrf.mxu0
        %v1416 = vadd.f32 0.0, %v1415
        %1417 = vmatmul.bf16.gmra.mxu0 %v1253
        %v1418 = vpop.f32.mrf.mxu0
        %v1419 = vadd.f32 0.0, %v1418
        %v1420 = vpop.f32.mrf.mxu0
        %v1421 = vadd.f32 0.0, %v1420
        %1422 = vmatmul.bf16.gmra.mxu0 %v1256
        %v1423 = vpop.f32.mrf.mxu0
        %v1424 = vadd.f32 0.0, %v1423
        %v1425 = vpop.f32.mrf.mxu0
        %v1426 = vadd.f32 0.0, %v1425
        %1427 = vmatmul.bf16.gmra.mxu0 %v1259
        %v1428 = vpop.f32.mrf.mxu0
        %v1429 = vadd.f32 0.0, %v1428
        %v1430 = vpop.f32.mrf.mxu0
        %v1431 = vadd.f32 0.0, %v1430
        %1432 = vmatmul.bf16.gmra.mxu0 %v1262
        %v1433 = vpop.f32.mrf.mxu0
        %v1434 = vadd.f32 0.0, %v1433
        %v1435 = vpop.f32.mrf.mxu0
        %v1436 = vadd.f32 0.0, %v1435
        %1437 = vmatmul.bf16.gmra.mxu0 %v1265
        %v1438 = vpop.f32.mrf.mxu0
        %v1439 = vadd.f32 0.0, %v1438
        %v1440 = vpop.f32.mrf.mxu0
        %v1441 = vadd.f32 0.0, %v1440
        %1442 = vmatmul.bf16.gmra.mxu0 %v1268
        %v1443 = vpop.f32.mrf.mxu0
        %v1444 = vadd.f32 0.0, %v1443
        %v1445 = vpop.f32.mrf.mxu0
        %v1446 = vadd.f32 0.0, %v1445
        %1447 = vdwg.mxu0
        %v1452 = vunpack.c.l.b16 %v1145
        %v1453 = vunpack.c.h.b16 %v1145
        %v1454 = vunpack.c.l.b16 %v1146
        %v1455 = vunpack.c.h.b16 %v1146
        %v1456 = vunpack.c.l.b16 %v1147
        %v1457 = vunpack.c.h.b16 %v1147
        %v1458 = vunpack.c.l.b16 %v1148
        %v1459 = vunpack.c.h.b16 %v1148
        %v1460 = vpack.c.b16 %v1454, %v1452
        %v1461 = vpack.c.b16 %v1455, %v1453
        %v1462 = vpack.c.b16 %v1458, %v1456
        %v1463 = vpack.c.b16 %v1459, %v1457
        %1468 = vxpose.binary.xlu0.c.b16.start [1/16] %v1461, %v1460, 128
        %1469 = vxpose.binary.xlu0.c.b16.cont [2/16] %v1463, %v1462, 128
        %1470 = vxpose.binary.xlu0.c.b16.cont [3/16] 0, 0, 128
        %1471 = vxpose.binary.xlu0.c.b16.cont [4/16] 0, 0, 128
        %1472 = vxpose.binary.xlu0.c.b16.cont [5/16] 0, 0, 128
        %1473 = vxpose.binary.xlu0.c.b16.cont [6/16] 0, 0, 128
        %1474 = vxpose.binary.xlu0.c.b16.cont [7/16] 0, 0, 128
        %1475 = vxpose.binary.xlu0.c.b16.end [8/16] 0, 0, 128
        %v1476 = vpop.trf.xlu0
        %v1477 = vpop.trf.xlu0
        %v1478 = vpop.trf.xlu0
        %v1479 = vpop.trf.xlu0
        %v1480 = vpop.trf.xlu0
        %v1481 = vpop.trf.xlu0
        %v1482 = vpop.trf.xlu0
        %v1483 = vpop.trf.xlu0
        %v1484 = vpop.trf.xlu0
        %v1485 = vpop.trf.xlu0
        %v1486 = vpop.trf.xlu0
        %v1487 = vpop.trf.xlu0
        %v1488 = vpop.trf.xlu0
        %v1489 = vpop.trf.xlu0
        %v1490 = vpop.trf.xlu0
        %v1491 = vpop.trf.xlu0
        %v1496 = vunpack.c.l.b16 %v1149
        %v1497 = vunpack.c.h.b16 %v1149
        %v1498 = vunpack.c.l.b16 %v1150
        %v1499 = vunpack.c.h.b16 %v1150
        %v1500 = vunpack.c.l.b16 %v1151
        %v1501 = vunpack.c.h.b16 %v1151
        %v1502 = vunpack.c.l.b16 %v1152
        %v1503 = vunpack.c.h.b16 %v1152
        %v1504 = vpack.c.b16 %v1498, %v1496
        %v1505 = vpack.c.b16 %v1499, %v1497
        %v1506 = vpack.c.b16 %v1502, %v1500
        %v1507 = vpack.c.b16 %v1503, %v1501
        %v1513 = vsel %vm1221, %v1476, 0
        %v1516 = vsel %vm1221, %v1478, 0
        %v1519 = vsel %vm1221, %v1480, 0
        %v1522 = vsel %vm1221, %v1482, 0
        %v1525 = vsel %vm1221, %v1484, 0
        %v1528 = vsel %vm1221, %v1486, 0
        %v1531 = vsel %vm1221, %v1488, 0
        %v1534 = vsel %vm1221, %v1490, 0
        %v1537 = vsel %vm1221, %v1477, 0
        %v1540 = vsel %vm1221, %v1479, 0
        %v1543 = vsel %vm1221, %v1481, 0
        %v1546 = vsel %vm1221, %v1483, 0
        %v1549 = vsel %vm1221, %v1485, 0
        %v1552 = vsel %vm1221, %v1487, 0
        %v1555 = vsel %vm1221, %v1489, 0
        %v1558 = vsel %vm1221, %v1491, 0
        %1560 = vmatpush.bf16.msra.mxu0 0
        %1561 = vmatpush.bf16.msra.mxu0 0
        %1562 = vmatpush.bf16.msra.mxu0 0
        %1563 = vmatpush.bf16.msra.mxu0 0
        %1564 = vmatpush.bf16.msra.mxu0 0
        %1565 = vmatpush.bf16.msra.mxu0 0
        %1566 = vmatpush.bf16.msra.mxu0 %v1506
        %1567 = vmatpush.bf16.msra.mxu0 %v1504
        %1568 = vmatmul.bf16.gmra.mxu0 %v1513
        %v1569 = vpop.f32.mrf.mxu0
        %v1570 = vadd.f32 0.0, %v1569
        %v1571 = vpop.f32.mrf.mxu0
        %v1572 = vadd.f32 0.0, %v1571
        %1573 = vmatmul.bf16.gmra.mxu0 %v1516
        %v1574 = vpop.f32.mrf.mxu0
        %v1575 = vadd.f32 0.0, %v1574
        %v1576 = vpop.f32.mrf.mxu0
        %v1577 = vadd.f32 0.0, %v1576
        %1578 = vmatmul.bf16.gmra.mxu0 %v1519
        %v1579 = vpop.f32.mrf.mxu0
        %v1580 = vadd.f32 0.0, %v1579
        %v1581 = vpop.f32.mrf.mxu0
        %v1582 = vadd.f32 0.0, %v1581
        %1583 = vmatmul.bf16.gmra.mxu0 %v1522
        %v1584 = vpop.f32.mrf.mxu0
        %v1585 = vadd.f32 0.0, %v1584
        %v1586 = vpop.f32.mrf.mxu0
        %v1587 = vadd.f32 0.0, %v1586
        %1588 = vmatmul.bf16.gmra.mxu0 %v1525
        %v1589 = vpop.f32.mrf.mxu0
        %v1590 = vadd.f32 0.0, %v1589
        %v1591 = vpop.f32.mrf.mxu0
        %v1592 = vadd.f32 0.0, %v1591
        %1593 = vmatmul.bf16.gmra.mxu0 %v1528
        %v1594 = vpop.f32.mrf.mxu0
        %v1595 = vadd.f32 0.0, %v1594
        %v1596 = vpop.f32.mrf.mxu0
        %v1597 = vadd.f32 0.0, %v1596
        %1598 = vmatmul.bf16.gmra.mxu0 %v1531
        %v1599 = vpop.f32.mrf.mxu0
        %v1600 = vadd.f32 0.0, %v1599
        %v1601 = vpop.f32.mrf.mxu0
        %v1602 = vadd.f32 0.0, %v1601
        %1603 = vmatmul.bf16.gmra.mxu0 %v1534
        %v1604 = vpop.f32.mrf.mxu0
        %v1605 = vadd.f32 0.0, %v1604
        %v1606 = vpop.f32.mrf.mxu0
        %v1607 = vadd.f32 0.0, %v1606
        %1608 = vmatmul.bf16.gmra.mxu0 %v1537
        %v1609 = vpop.f32.mrf.mxu0
        %v1610 = vadd.f32 0.0, %v1609
        %v1611 = vpop.f32.mrf.mxu0
        %v1612 = vadd.f32 0.0, %v1611
        %1613 = vmatmul.bf16.gmra.mxu0 %v1540
        %v1614 = vpop.f32.mrf.mxu0
        %v1615 = vadd.f32 0.0, %v1614
        %v1616 = vpop.f32.mrf.mxu0
        %v1617 = vadd.f32 0.0, %v1616
        %1618 = vmatmul.bf16.gmra.mxu0 %v1543
        %v1619 = vpop.f32.mrf.mxu0
        %v1620 = vadd.f32 0.0, %v1619
        %v1621 = vpop.f32.mrf.mxu0
        %v1622 = vadd.f32 0.0, %v1621
        %1623 = vmatmul.bf16.gmra.mxu0 %v1546
        %v1624 = vpop.f32.mrf.mxu0
        %v1625 = vadd.f32 0.0, %v1624
        %v1626 = vpop.f32.mrf.mxu0
        %v1627 = vadd.f32 0.0, %v1626
        %1628 = vmatmul.bf16.gmra.mxu0 %v1549
        %v1629 = vpop.f32.mrf.mxu0
        %v1630 = vadd.f32 0.0, %v1629
        %v1631 = vpop.f32.mrf.mxu0
        %v1632 = vadd.f32 0.0, %v1631
        %1633 = vmatmul.bf16.gmra.mxu0 %v1552
        %v1634 = vpop.f32.mrf.mxu0
        %v1635 = vadd.f32 0.0, %v1634
        %v1636 = vpop.f32.mrf.mxu0
        %v1637 = vadd.f32 0.0, %v1636
        %1638 = vmatmul.bf16.gmra.mxu0 %v1555
        %v1639 = vpop.f32.mrf.mxu0
        %v1640 = vadd.f32 0.0, %v1639
        %v1641 = vpop.f32.mrf.mxu0
        %v1642 = vadd.f32 0.0, %v1641
        %1643 = vmatmul.bf16.gmra.mxu0 %v1558
        %v1644 = vpop.f32.mrf.mxu0
        %v1645 = vadd.f32 0.0, %v1644
        %v1646 = vpop.f32.mrf.mxu0
        %v1647 = vadd.f32 0.0, %v1646
        %1648 = vdwg.mxu0
        %1649 = vmatpush.bf16.msra.mxu0 0
        %1650 = vmatpush.bf16.msra.mxu0 0
        %1651 = vmatpush.bf16.msra.mxu0 0
        %1652 = vmatpush.bf16.msra.mxu0 0
        %1653 = vmatpush.bf16.msra.mxu0 0
        %1654 = vmatpush.bf16.msra.mxu0 0
        %1655 = vmatpush.bf16.msra.mxu0 %v1507
        %1656 = vmatpush.bf16.msra.mxu0 %v1505
        %1657 = vmatmul.bf16.gmra.mxu0 %v1513
        %v1658 = vpop.f32.mrf.mxu0
        %v1659 = vadd.f32 0.0, %v1658
        %v1660 = vpop.f32.mrf.mxu0
        %v1661 = vadd.f32 0.0, %v1660
        %1662 = vmatmul.bf16.gmra.mxu0 %v1516
        %v1663 = vpop.f32.mrf.mxu0
        %v1664 = vadd.f32 0.0, %v1663
        %v1665 = vpop.f32.mrf.mxu0
        %v1666 = vadd.f32 0.0, %v1665
        %1667 = vmatmul.bf16.gmra.mxu0 %v1519
        %v1668 = vpop.f32.mrf.mxu0
        %v1669 = vadd.f32 0.0, %v1668
        %v1670 = vpop.f32.mrf.mxu0
        %v1671 = vadd.f32 0.0, %v1670
        %1672 = vmatmul.bf16.gmra.mxu0 %v1522
        %v1673 = vpop.f32.mrf.mxu0
        %v1674 = vadd.f32 0.0, %v1673
        %v1675 = vpop.f32.mrf.mxu0
        %v1676 = vadd.f32 0.0, %v1675
        %1677 = vmatmul.bf16.gmra.mxu0 %v1525
        %v1678 = vpop.f32.mrf.mxu0
        %v1679 = vadd.f32 0.0, %v1678
        %v1680 = vpop.f32.mrf.mxu0
        %v1681 = vadd.f32 0.0, %v1680
        %1682 = vmatmul.bf16.gmra.mxu0 %v1528
        %v1683 = vpop.f32.mrf.mxu0
        %v1684 = vadd.f32 0.0, %v1683
        %v1685 = vpop.f32.mrf.mxu0
        %v1686 = vadd.f32 0.0, %v1685
        %1687 = vmatmul.bf16.gmra.mxu0 %v1531
        %v1688 = vpop.f32.mrf.mxu0
        %v1689 = vadd.f32 0.0, %v1688
        %v1690 = vpop.f32.mrf.mxu0
        %v1691 = vadd.f32 0.0, %v1690
        %1692 = vmatmul.bf16.gmra.mxu0 %v1534
        %v1693 = vpop.f32.mrf.mxu0
        %v1694 = vadd.f32 0.0, %v1693
        %v1695 = vpop.f32.mrf.mxu0
        %v1696 = vadd.f32 0.0, %v1695
        %1697 = vmatmul.bf16.gmra.mxu0 %v1537
        %v1698 = vpop.f32.mrf.mxu0
        %v1699 = vadd.f32 0.0, %v1698
        %v1700 = vpop.f32.mrf.mxu0
        %v1701 = vadd.f32 0.0, %v1700
        %1702 = vmatmul.bf16.gmra.mxu0 %v1540
        %v1703 = vpop.f32.mrf.mxu0
        %v1704 = vadd.f32 0.0, %v1703
        %v1705 = vpop.f32.mrf.mxu0
        %v1706 = vadd.f32 0.0, %v1705
        %1707 = vmatmul.bf16.gmra.mxu0 %v1543
        %v1708 = vpop.f32.mrf.mxu0
        %v1709 = vadd.f32 0.0, %v1708
        %v1710 = vpop.f32.mrf.mxu0
        %v1711 = vadd.f32 0.0, %v1710
        %1712 = vmatmul.bf16.gmra.mxu0 %v1546
        %v1713 = vpop.f32.mrf.mxu0
        %v1714 = vadd.f32 0.0, %v1713
        %v1715 = vpop.f32.mrf.mxu0
        %v1716 = vadd.f32 0.0, %v1715
        %1717 = vmatmul.bf16.gmra.mxu0 %v1549
        %v1718 = vpop.f32.mrf.mxu0
        %v1719 = vadd.f32 0.0, %v1718
        %v1720 = vpop.f32.mrf.mxu0
        %v1721 = vadd.f32 0.0, %v1720
        %1722 = vmatmul.bf16.gmra.mxu0 %v1552
        %v1723 = vpop.f32.mrf.mxu0
        %v1724 = vadd.f32 0.0, %v1723
        %v1725 = vpop.f32.mrf.mxu0
        %v1726 = vadd.f32 0.0, %v1725
        %1727 = vmatmul.bf16.gmra.mxu0 %v1555
        %v1728 = vpop.f32.mrf.mxu0
        %v1729 = vadd.f32 0.0, %v1728
        %v1730 = vpop.f32.mrf.mxu0
        %v1731 = vadd.f32 0.0, %v1730
        %1732 = vmatmul.bf16.gmra.mxu0 %v1558
        %v1733 = vpop.f32.mrf.mxu0
        %v1734 = vadd.f32 0.0, %v1733
        %v1735 = vpop.f32.mrf.mxu0
        %v1736 = vadd.f32 0.0, %v1735
        %1737 = vdwg.mxu0
        %v1738 = vmax.f32 %v1280, %v1369
        %1739 = vmax.xlane.f32.xlu0 %v1738
        %v1740 = vpop.xlane.xlu0 %1739
        %v1741 = vmax.f32 %v1282, %v1371
        %1742 = vmax.xlane.f32.xlu0 %v1741
        %v1743 = vpop.xlane.xlu0 %1742
        %v1744 = vmax.f32 %v1285, %v1374
        %1745 = vmax.xlane.f32.xlu0 %v1744
        %v1746 = vpop.xlane.xlu0 %1745
        %v1747 = vmax.f32 %v1287, %v1376
        %1748 = vmax.xlane.f32.xlu0 %v1747
        %v1749 = vpop.xlane.xlu0 %1748
        %v1750 = vmax.f32 %v1290, %v1379
        %1751 = vmax.xlane.f32.xlu0 %v1750
        %v1752 = vpop.xlane.xlu0 %1751
        %v1753 = vmax.f32 %v1292, %v1381
        %1754 = vmax.xlane.f32.xlu0 %v1753
        %v1755 = vpop.xlane.xlu0 %1754
        %v1756 = vmax.f32 %v1295, %v1384
        %1757 = vmax.xlane.f32.xlu0 %v1756
        %v1758 = vpop.xlane.xlu0 %1757
        %v1759 = vmax.f32 %v1297, %v1386
        %1760 = vmax.xlane.f32.xlu0 %v1759
        %v1761 = vpop.xlane.xlu0 %1760
        %v1762 = vmax.f32 %v1300, %v1389
        %1763 = vmax.xlane.f32.xlu0 %v1762
        %v1764 = vpop.xlane.xlu0 %1763
        %v1765 = vmax.f32 %v1302, %v1391
        %1766 = vmax.xlane.f32.xlu0 %v1765
        %v1767 = vpop.xlane.xlu0 %1766
        %v1768 = vmax.f32 %v1305, %v1394
        %1769 = vmax.xlane.f32.xlu0 %v1768
        %v1770 = vpop.xlane.xlu0 %1769
        %v1771 = vmax.f32 %v1307, %v1396
        %1772 = vmax.xlane.f32.xlu0 %v1771
        %v1773 = vpop.xlane.xlu0 %1772
        %v1774 = vmax.f32 %v1310, %v1399
        %1775 = vmax.xlane.f32.xlu0 %v1774
        %v1776 = vpop.xlane.xlu0 %1775
        %v1777 = vmax.f32 %v1312, %v1401
        %1778 = vmax.xlane.f32.xlu0 %v1777
        %v1779 = vpop.xlane.xlu0 %1778
        %v1780 = vmax.f32 %v1315, %v1404
        %1781 = vmax.xlane.f32.xlu0 %v1780
        %v1782 = vpop.xlane.xlu0 %1781
        %v1783 = vmax.f32 %v1317, %v1406
        %1784 = vmax.xlane.f32.xlu0 %v1783
        %v1785 = vpop.xlane.xlu0 %1784
        %v1786 = vmax.f32 %v1320, %v1409
        %1787 = vmax.xlane.f32.xlu0 %v1786
        %v1788 = vpop.xlane.xlu0 %1787
        %v1789 = vmax.f32 %v1322, %v1411
        %1790 = vmax.xlane.f32.xlu0 %v1789
        %v1791 = vpop.xlane.xlu0 %1790
        %v1792 = vmax.f32 %v1325, %v1414
        %1793 = vmax.xlane.f32.xlu0 %v1792
        %v1794 = vpop.xlane.xlu0 %1793
        %v1795 = vmax.f32 %v1327, %v1416
        %1796 = vmax.xlane.f32.xlu0 %v1795
        %v1797 = vpop.xlane.xlu0 %1796
        %v1798 = vmax.f32 %v1330, %v1419
        %1799 = vmax.xlane.f32.xlu0 %v1798
        %v1800 = vpop.xlane.xlu0 %1799
        %v1801 = vmax.f32 %v1332, %v1421
        %1802 = vmax.xlane.f32.xlu0 %v1801
        %v1803 = vpop.xlane.xlu0 %1802
        %v1804 = vmax.f32 %v1335, %v1424
        %1805 = vmax.xlane.f32.xlu0 %v1804
        %v1806 = vpop.xlane.xlu0 %1805
        %v1807 = vmax.f32 %v1337, %v1426
        %1808 = vmax.xlane.f32.xlu0 %v1807
        %v1809 = vpop.xlane.xlu0 %1808
        %v1810 = vmax.f32 %v1340, %v1429
        %1811 = vmax.xlane.f32.xlu0 %v1810
        %v1812 = vpop.xlane.xlu0 %1811
        %v1813 = vmax.f32 %v1342, %v1431
        %1814 = vmax.xlane.f32.xlu0 %v1813
        %v1815 = vpop.xlane.xlu0 %1814
        %v1816 = vmax.f32 %v1345, %v1434
        %1817 = vmax.xlane.f32.xlu0 %v1816
        %v1818 = vpop.xlane.xlu0 %1817
        %v1819 = vmax.f32 %v1347, %v1436
        %1820 = vmax.xlane.f32.xlu0 %v1819
        %v1821 = vpop.xlane.xlu0 %1820
        %v1822 = vmax.f32 %v1350, %v1439
        %1823 = vmax.xlane.f32.xlu0 %v1822
        %v1824 = vpop.xlane.xlu0 %1823
        %v1825 = vmax.f32 %v1352, %v1441
        %1826 = vmax.xlane.f32.xlu0 %v1825
        %v1827 = vpop.xlane.xlu0 %1826
        %v1828 = vmax.f32 %v1355, %v1444
        %1829 = vmax.xlane.f32.xlu0 %v1828
        %v1830 = vpop.xlane.xlu0 %1829
        %v1831 = vmax.f32 %v1357, %v1446
        %1832 = vmax.xlane.f32.xlu0 %v1831
        %v1833 = vpop.xlane.xlu0 %1832
        %v1834 = vmax.f32 %v1570, %v1659
        %1835 = vmax.xlane.f32.xlu0 %v1834
        %v1836 = vpop.xlane.xlu0 %1835
        %v1837 = vmax.f32 %v1572, %v1661
        %1838 = vmax.xlane.f32.xlu0 %v1837
        %v1839 = vpop.xlane.xlu0 %1838
        %v1840 = vmax.f32 %v1575, %v1664
        %1841 = vmax.xlane.f32.xlu0 %v1840
        %v1842 = vpop.xlane.xlu0 %1841
        %v1843 = vmax.f32 %v1577, %v1666
        %1844 = vmax.xlane.f32.xlu0 %v1843
        %v1845 = vpop.xlane.xlu0 %1844
        %v1846 = vmax.f32 %v1580, %v1669
        %1847 = vmax.xlane.f32.xlu0 %v1846
        %v1848 = vpop.xlane.xlu0 %1847
        %v1849 = vmax.f32 %v1582, %v1671
        %1850 = vmax.xlane.f32.xlu0 %v1849
        %v1851 = vpop.xlane.xlu0 %1850
        %v1852 = vmax.f32 %v1585, %v1674
        %1853 = vmax.xlane.f32.xlu0 %v1852
        %v1854 = vpop.xlane.xlu0 %1853
        %v1855 = vmax.f32 %v1587, %v1676
        %1856 = vmax.xlane.f32.xlu0 %v1855
        %v1857 = vpop.xlane.xlu0 %1856
        %v1858 = vmax.f32 %v1590, %v1679
        %1859 = vmax.xlane.f32.xlu0 %v1858
        %v1860 = vpop.xlane.xlu0 %1859
        %v1861 = vmax.f32 %v1592, %v1681
        %1862 = vmax.xlane.f32.xlu0 %v1861
        %v1863 = vpop.xlane.xlu0 %1862
        %v1864 = vmax.f32 %v1595, %v1684
        %1865 = vmax.xlane.f32.xlu0 %v1864
        %v1866 = vpop.xlane.xlu0 %1865
        %v1867 = vmax.f32 %v1597, %v1686
        %1868 = vmax.xlane.f32.xlu0 %v1867
        %v1869 = vpop.xlane.xlu0 %1868
        %v1870 = vmax.f32 %v1600, %v1689
        %1871 = vmax.xlane.f32.xlu0 %v1870
        %v1872 = vpop.xlane.xlu0 %1871
        %v1873 = vmax.f32 %v1602, %v1691
        %1874 = vmax.xlane.f32.xlu0 %v1873
        %v1875 = vpop.xlane.xlu0 %1874
        %v1876 = vmax.f32 %v1605, %v1694
        %1877 = vmax.xlane.f32.xlu0 %v1876
        %v1878 = vpop.xlane.xlu0 %1877
        %v1879 = vmax.f32 %v1607, %v1696
        %1880 = vmax.xlane.f32.xlu0 %v1879
        %v1881 = vpop.xlane.xlu0 %1880
        %v1882 = vmax.f32 %v1610, %v1699
        %1883 = vmax.xlane.f32.xlu0 %v1882
        %v1884 = vpop.xlane.xlu0 %1883
        %v1885 = vmax.f32 %v1612, %v1701
        %1886 = vmax.xlane.f32.xlu0 %v1885
        %v1887 = vpop.xlane.xlu0 %1886
        %v1888 = vmax.f32 %v1615, %v1704
        %1889 = vmax.xlane.f32.xlu0 %v1888
        %v1890 = vpop.xlane.xlu0 %1889
        %v1891 = vmax.f32 %v1617, %v1706
        %1892 = vmax.xlane.f32.xlu0 %v1891
        %v1893 = vpop.xlane.xlu0 %1892
        %v1894 = vmax.f32 %v1620, %v1709
        %1895 = vmax.xlane.f32.xlu0 %v1894
        %v1896 = vpop.xlane.xlu0 %1895
        %v1897 = vmax.f32 %v1622, %v1711
        %1898 = vmax.xlane.f32.xlu0 %v1897
        %v1899 = vpop.xlane.xlu0 %1898
        %v1900 = vmax.f32 %v1625, %v1714
        %1901 = vmax.xlane.f32.xlu0 %v1900
        %v1902 = vpop.xlane.xlu0 %1901
        %v1903 = vmax.f32 %v1627, %v1716
        %1904 = vmax.xlane.f32.xlu0 %v1903
        %v1905 = vpop.xlane.xlu0 %1904
        %v1906 = vmax.f32 %v1630, %v1719
        %1907 = vmax.xlane.f32.xlu0 %v1906
        %v1908 = vpop.xlane.xlu0 %1907
        %v1909 = vmax.f32 %v1632, %v1721
        %1910 = vmax.xlane.f32.xlu0 %v1909
        %v1911 = vpop.xlane.xlu0 %1910
        %v1912 = vmax.f32 %v1635, %v1724
        %1913 = vmax.xlane.f32.xlu0 %v1912
        %v1914 = vpop.xlane.xlu0 %1913
        %v1915 = vmax.f32 %v1637, %v1726
        %1916 = vmax.xlane.f32.xlu0 %v1915
        %v1917 = vpop.xlane.xlu0 %1916
        %v1918 = vmax.f32 %v1640, %v1729
        %1919 = vmax.xlane.f32.xlu0 %v1918
        %v1920 = vpop.xlane.xlu0 %1919
        %v1921 = vmax.f32 %v1642, %v1731
        %1922 = vmax.xlane.f32.xlu0 %v1921
        %v1923 = vpop.xlane.xlu0 %1922
        %v1924 = vmax.f32 %v1645, %v1734
        %1925 = vmax.xlane.f32.xlu0 %v1924
        %v1926 = vpop.xlane.xlu0 %1925
        %v1927 = vmax.f32 %v1647, %v1736
        %1928 = vmax.xlane.f32.xlu0 %v1927
        %v1929 = vpop.xlane.xlu0 %1928
        %v1930 = vsub.f32 %v1280, %v1740
        %v1931 = vsub.f32 %v1369, %v1740
        %v1932 = vsub.f32 %v1282, %v1743
        %v1933 = vsub.f32 %v1371, %v1743
        %v1934 = vsub.f32 %v1285, %v1746
        %v1935 = vsub.f32 %v1374, %v1746
        %v1936 = vsub.f32 %v1287, %v1749
        %v1937 = vsub.f32 %v1376, %v1749
        %v1938 = vsub.f32 %v1290, %v1752
        %v1939 = vsub.f32 %v1379, %v1752
        %v1940 = vsub.f32 %v1292, %v1755
        %v1941 = vsub.f32 %v1381, %v1755
        %v1942 = vsub.f32 %v1295, %v1758
        %v1943 = vsub.f32 %v1384, %v1758
        %v1944 = vsub.f32 %v1297, %v1761
        %v1945 = vsub.f32 %v1386, %v1761
        %v1946 = vsub.f32 %v1300, %v1764
        %v1947 = vsub.f32 %v1389, %v1764
        %v1948 = vsub.f32 %v1302, %v1767
        %v1949 = vsub.f32 %v1391, %v1767
        %v1950 = vsub.f32 %v1305, %v1770
        %v1951 = vsub.f32 %v1394, %v1770
        %v1952 = vsub.f32 %v1307, %v1773
        %v1953 = vsub.f32 %v1396, %v1773
        %v1954 = vsub.f32 %v1310, %v1776
        %v1955 = vsub.f32 %v1399, %v1776
        %v1956 = vsub.f32 %v1312, %v1779
        %v1957 = vsub.f32 %v1401, %v1779
        %v1958 = vsub.f32 %v1315, %v1782
        %v1959 = vsub.f32 %v1404, %v1782
        %v1960 = vsub.f32 %v1317, %v1785
        %v1961 = vsub.f32 %v1406, %v1785
        %v1962 = vsub.f32 %v1320, %v1788
        %v1963 = vsub.f32 %v1409, %v1788
        %v1964 = vsub.f32 %v1322, %v1791
        %v1965 = vsub.f32 %v1411, %v1791
        %v1966 = vsub.f32 %v1325, %v1794
        %v1967 = vsub.f32 %v1414, %v1794
        %v1968 = vsub.f32 %v1327, %v1797
        %v1969 = vsub.f32 %v1416, %v1797
        %v1970 = vsub.f32 %v1330, %v1800
        %v1971 = vsub.f32 %v1419, %v1800
        %v1972 = vsub.f32 %v1332, %v1803
        %v1973 = vsub.f32 %v1421, %v1803
        %v1974 = vsub.f32 %v1335, %v1806
        %v1975 = vsub.f32 %v1424, %v1806
        %v1976 = vsub.f32 %v1337, %v1809
        %v1977 = vsub.f32 %v1426, %v1809
        %v1978 = vsub.f32 %v1340, %v1812
        %v1979 = vsub.f32 %v1429, %v1812
        %v1980 = vsub.f32 %v1342, %v1815
        %v1981 = vsub.f32 %v1431, %v1815
        %v1982 = vsub.f32 %v1345, %v1818
        %v1983 = vsub.f32 %v1434, %v1818
        %v1984 = vsub.f32 %v1347, %v1821
        %v1985 = vsub.f32 %v1436, %v1821
        %v1986 = vsub.f32 %v1350, %v1824
        %v1987 = vsub.f32 %v1439, %v1824
        %v1988 = vsub.f32 %v1352, %v1827
        %v1989 = vsub.f32 %v1441, %v1827
        %v1990 = vsub.f32 %v1355, %v1830
        %v1991 = vsub.f32 %v1444, %v1830
        %v1992 = vsub.f32 %v1357, %v1833
        %v1993 = vsub.f32 %v1446, %v1833
        %v1994 = vsub.f32 %v1570, %v1836
        %v1995 = vsub.f32 %v1659, %v1836
        %v1996 = vsub.f32 %v1572, %v1839
        %v1997 = vsub.f32 %v1661, %v1839
        %v1998 = vsub.f32 %v1575, %v1842
        %v1999 = vsub.f32 %v1664, %v1842
        %v2000 = vsub.f32 %v1577, %v1845
        %v2001 = vsub.f32 %v1666, %v1845
        %v2002 = vsub.f32 %v1580, %v1848
        %v2003 = vsub.f32 %v1669, %v1848
        %v2004 = vsub.f32 %v1582, %v1851
        %v2005 = vsub.f32 %v1671, %v1851
        %v2006 = vsub.f32 %v1585, %v1854
        %v2007 = vsub.f32 %v1674, %v1854
        %v2008 = vsub.f32 %v1587, %v1857
        %v2009 = vsub.f32 %v1676, %v1857
        %v2010 = vsub.f32 %v1590, %v1860
        %v2011 = vsub.f32 %v1679, %v1860
        %v2012 = vsub.f32 %v1592, %v1863
        %v2013 = vsub.f32 %v1681, %v1863
        %v2014 = vsub.f32 %v1595, %v1866
        %v2015 = vsub.f32 %v1684, %v1866
        %v2016 = vsub.f32 %v1597, %v1869
        %v2017 = vsub.f32 %v1686, %v1869
        %v2018 = vsub.f32 %v1600, %v1872
        %v2019 = vsub.f32 %v1689, %v1872
        %v2020 = vsub.f32 %v1602, %v1875
        %v2021 = vsub.f32 %v1691, %v1875
        %v2022 = vsub.f32 %v1605, %v1878
        %v2023 = vsub.f32 %v1694, %v1878
        %v2024 = vsub.f32 %v1607, %v1881
        %v2025 = vsub.f32 %v1696, %v1881
        %v2026 = vsub.f32 %v1610, %v1884
        %v2027 = vsub.f32 %v1699, %v1884
        %v2028 = vsub.f32 %v1612, %v1887
        %v2029 = vsub.f32 %v1701, %v1887
        %v2030 = vsub.f32 %v1615, %v1890
        %v2031 = vsub.f32 %v1704, %v1890
        %v2032 = vsub.f32 %v1617, %v1893
        %v2033 = vsub.f32 %v1706, %v1893
        %v2034 = vsub.f32 %v1620, %v1896
        %v2035 = vsub.f32 %v1709, %v1896
        %v2036 = vsub.f32 %v1622, %v1899
        %v2037 = vsub.f32 %v1711, %v1899
        %v2038 = vsub.f32 %v1625, %v1902
        %v2039 = vsub.f32 %v1714, %v1902
        %v2040 = vsub.f32 %v1627, %v1905
        %v2041 = vsub.f32 %v1716, %v1905
        %v2042 = vsub.f32 %v1630, %v1908
        %v2043 = vsub.f32 %v1719, %v1908
        %v2044 = vsub.f32 %v1632, %v1911
        %v2045 = vsub.f32 %v1721, %v1911
        %v2046 = vsub.f32 %v1635, %v1914
        %v2047 = vsub.f32 %v1724, %v1914
        %v2048 = vsub.f32 %v1637, %v1917
        %v2049 = vsub.f32 %v1726, %v1917
        %v2050 = vsub.f32 %v1640, %v1920
        %v2051 = vsub.f32 %v1729, %v1920
        %v2052 = vsub.f32 %v1642, %v1923
        %v2053 = vsub.f32 %v1731, %v1923
        %v2054 = vsub.f32 %v1645, %v1926
        %v2055 = vsub.f32 %v1734, %v1926
        %v2056 = vsub.f32 %v1647, %v1929
        %v2057 = vsub.f32 %v1736, %v1929
        %v2058 = vmul.f32 %v1930, 1.442695
        %v2059 = vpow.pop %v2058
        %v2060 = vmul.f32 %v1931, 1.442695
        %v2061 = vpow.pop %v2060
        %v2062 = vmul.f32 %v1932, 1.442695
        %v2063 = vpow.pop %v2062
        %v2064 = vmul.f32 %v1933, 1.442695
        %v2065 = vpow.pop %v2064
        %v2066 = vmul.f32 %v1934, 1.442695
        %v2067 = vpow.pop %v2066
        %v2068 = vmul.f32 %v1935, 1.442695
        %v2069 = vpow.pop %v2068
        %v2070 = vmul.f32 %v1936, 1.442695
        %v2071 = vpow.pop %v2070
        %v2072 = vmul.f32 %v1937, 1.442695
        %v2073 = vpow.pop %v2072
        %v2074 = vmul.f32 %v1938, 1.442695
        %v2075 = vpow.pop %v2074
        %v2076 = vmul.f32 %v1939, 1.442695
        %v2077 = vpow.pop %v2076
        %v2078 = vmul.f32 %v1940, 1.442695
        %v2079 = vpow.pop %v2078
        %v2080 = vmul.f32 %v1941, 1.442695
        %v2081 = vpow.pop %v2080
        %v2082 = vmul.f32 %v1942, 1.442695
        %v2083 = vpow.pop %v2082
        %v2084 = vmul.f32 %v1943, 1.442695
        %v2085 = vpow.pop %v2084
        %v2086 = vmul.f32 %v1944, 1.442695
        %v2087 = vpow.pop %v2086
        %v2088 = vmul.f32 %v1945, 1.442695
        %v2089 = vpow.pop %v2088
        %v2090 = vmul.f32 %v1946, 1.442695
        %v2091 = vpow.pop %v2090
        %v2092 = vmul.f32 %v1947, 1.442695
        %v2093 = vpow.pop %v2092
        %v2094 = vmul.f32 %v1948, 1.442695
        %v2095 = vpow.pop %v2094
        %v2096 = vmul.f32 %v1949, 1.442695
        %v2097 = vpow.pop %v2096
        %v2098 = vmul.f32 %v1950, 1.442695
        %v2099 = vpow.pop %v2098
        %v2100 = vmul.f32 %v1951, 1.442695
        %v2101 = vpow.pop %v2100
        %v2102 = vmul.f32 %v1952, 1.442695
        %v2103 = vpow.pop %v2102
        %v2104 = vmul.f32 %v1953, 1.442695
        %v2105 = vpow.pop %v2104
        %v2106 = vmul.f32 %v1954, 1.442695
        %v2107 = vpow.pop %v2106
        %v2108 = vmul.f32 %v1955, 1.442695
        %v2109 = vpow.pop %v2108
        %v2110 = vmul.f32 %v1956, 1.442695
        %v2111 = vpow.pop %v2110
        %v2112 = vmul.f32 %v1957, 1.442695
        %v2113 = vpow.pop %v2112
        %v2114 = vmul.f32 %v1958, 1.442695
        %v2115 = vpow.pop %v2114
        %v2116 = vmul.f32 %v1959, 1.442695
        %v2117 = vpow.pop %v2116
        %v2118 = vmul.f32 %v1960, 1.442695
        %v2119 = vpow.pop %v2118
        %v2120 = vmul.f32 %v1961, 1.442695
        %v2121 = vpow.pop %v2120
        %v2122 = vmul.f32 %v1962, 1.442695
        %v2123 = vpow.pop %v2122
        %v2124 = vmul.f32 %v1963, 1.442695
        %v2125 = vpow.pop %v2124
        %v2126 = vmul.f32 %v1964, 1.442695
        %v2127 = vpow.pop %v2126
        %v2128 = vmul.f32 %v1965, 1.442695
        %v2129 = vpow.pop %v2128
        %v2130 = vmul.f32 %v1966, 1.442695
        %v2131 = vpow.pop %v2130
        %v2132 = vmul.f32 %v1967, 1.442695
        %v2133 = vpow.pop %v2132
        %v2134 = vmul.f32 %v1968, 1.442695
        %v2135 = vpow.pop %v2134
        %v2136 = vmul.f32 %v1969, 1.442695
        %v2137 = vpow.pop %v2136
        %v2138 = vmul.f32 %v1970, 1.442695
        %v2139 = vpow.pop %v2138
        %v2140 = vmul.f32 %v1971, 1.442695
        %v2141 = vpow.pop %v2140
        %v2142 = vmul.f32 %v1972, 1.442695
        %v2143 = vpow.pop %v2142
        %v2144 = vmul.f32 %v1973, 1.442695
        %v2145 = vpow.pop %v2144
        %v2146 = vmul.f32 %v1974, 1.442695
        %v2147 = vpow.pop %v2146
        %v2148 = vmul.f32 %v1975, 1.442695
        %v2149 = vpow.pop %v2148
        %v2150 = vmul.f32 %v1976, 1.442695
        %v2151 = vpow.pop %v2150
        %v2152 = vmul.f32 %v1977, 1.442695
        %v2153 = vpow.pop %v2152
        %v2154 = vmul.f32 %v1978, 1.442695
        %v2155 = vpow.pop %v2154
        %v2156 = vmul.f32 %v1979, 1.442695
        %v2157 = vpow.pop %v2156
        %v2158 = vmul.f32 %v1980, 1.442695
        %v2159 = vpow.pop %v2158
        %v2160 = vmul.f32 %v1981, 1.442695
        %v2161 = vpow.pop %v2160
        %v2162 = vmul.f32 %v1982, 1.442695
        %v2163 = vpow.pop %v2162
        %v2164 = vmul.f32 %v1983, 1.442695
        %v2165 = vpow.pop %v2164
        %v2166 = vmul.f32 %v1984, 1.442695
        %v2167 = vpow.pop %v2166
        %v2168 = vmul.f32 %v1985, 1.442695
        %v2169 = vpow.pop %v2168
        %v2170 = vmul.f32 %v1986, 1.442695
        %v2171 = vpow.pop %v2170
        %v2172 = vmul.f32 %v1987, 1.442695
        %v2173 = vpow.pop %v2172
        %v2174 = vmul.f32 %v1988, 1.442695
        %v2175 = vpow.pop %v2174
        %v2176 = vmul.f32 %v1989, 1.442695
        %v2177 = vpow.pop %v2176
        %v2178 = vmul.f32 %v1990, 1.442695
        %v2179 = vpow.pop %v2178
        %v2180 = vmul.f32 %v1991, 1.442695
        %v2181 = vpow.pop %v2180
        %v2182 = vmul.f32 %v1992, 1.442695
        %v2183 = vpow.pop %v2182
        %v2184 = vmul.f32 %v1993, 1.442695
        %v2185 = vpow.pop %v2184
        %v2186 = vmul.f32 %v1994, 1.442695
        %v2187 = vpow.pop %v2186
        %v2188 = vmul.f32 %v1995, 1.442695
        %v2189 = vpow.pop %v2188
        %v2190 = vmul.f32 %v1996, 1.442695
        %v2191 = vpow.pop %v2190
        %v2192 = vmul.f32 %v1997, 1.442695
        %v2193 = vpow.pop %v2192
        %v2194 = vmul.f32 %v1998, 1.442695
        %v2195 = vpow.pop %v2194
        %v2196 = vmul.f32 %v1999, 1.442695
        %v2197 = vpow.pop %v2196
        %v2198 = vmul.f32 %v2000, 1.442695
        %v2199 = vpow.pop %v2198
        %v2200 = vmul.f32 %v2001, 1.442695
        %v2201 = vpow.pop %v2200
        %v2202 = vmul.f32 %v2002, 1.442695
        %v2203 = vpow.pop %v2202
        %v2204 = vmul.f32 %v2003, 1.442695
        %v2205 = vpow.pop %v2204
        %v2206 = vmul.f32 %v2004, 1.442695
        %v2207 = vpow.pop %v2206
        %v2208 = vmul.f32 %v2005, 1.442695
        %v2209 = vpow.pop %v2208
        %v2210 = vmul.f32 %v2006, 1.442695
        %v2211 = vpow.pop %v2210
        %v2212 = vmul.f32 %v2007, 1.442695
        %v2213 = vpow.pop %v2212
        %v2214 = vmul.f32 %v2008, 1.442695
        %v2215 = vpow.pop %v2214
        %v2216 = vmul.f32 %v2009, 1.442695
        %v2217 = vpow.pop %v2216
        %v2218 = vmul.f32 %v2010, 1.442695
        %v2219 = vpow.pop %v2218
        %v2220 = vmul.f32 %v2011, 1.442695
        %v2221 = vpow.pop %v2220
        %v2222 = vmul.f32 %v2012, 1.442695
        %v2223 = vpow.pop %v2222
        %v2224 = vmul.f32 %v2013, 1.442695
        %v2225 = vpow.pop %v2224
        %v2226 = vmul.f32 %v2014, 1.442695
        %v2227 = vpow.pop %v2226
        %v2228 = vmul.f32 %v2015, 1.442695
        %v2229 = vpow.pop %v2228
        %v2230 = vmul.f32 %v2016, 1.442695
        %v2231 = vpow.pop %v2230
        %v2232 = vmul.f32 %v2017, 1.442695
        %v2233 = vpow.pop %v2232
        %v2234 = vmul.f32 %v2018, 1.442695
        %v2235 = vpow.pop %v2234
        %v2236 = vmul.f32 %v2019, 1.442695
        %v2237 = vpow.pop %v2236
        %v2238 = vmul.f32 %v2020, 1.442695
        %v2239 = vpow.pop %v2238
        %v2240 = vmul.f32 %v2021, 1.442695
        %v2241 = vpow.pop %v2240
        %v2242 = vmul.f32 %v2022, 1.442695
        %v2243 = vpow.pop %v2242
        %v2244 = vmul.f32 %v2023, 1.442695
        %v2245 = vpow.pop %v2244
        %v2246 = vmul.f32 %v2024, 1.442695
        %v2247 = vpow.pop %v2246
        %v2248 = vmul.f32 %v2025, 1.442695
        %v2249 = vpow.pop %v2248
        %v2250 = vmul.f32 %v2026, 1.442695
        %v2251 = vpow.pop %v2250
        %v2252 = vmul.f32 %v2027, 1.442695
        %v2253 = vpow.pop %v2252
        %v2254 = vmul.f32 %v2028, 1.442695
        %v2255 = vpow.pop %v2254
        %v2256 = vmul.f32 %v2029, 1.442695
        %v2257 = vpow.pop %v2256
        %v2258 = vmul.f32 %v2030, 1.442695
        %v2259 = vpow.pop %v2258
        %v2260 = vmul.f32 %v2031, 1.442695
        %v2261 = vpow.pop %v2260
        %v2262 = vmul.f32 %v2032, 1.442695
        %v2263 = vpow.pop %v2262
        %v2264 = vmul.f32 %v2033, 1.442695
        %v2265 = vpow.pop %v2264
        %v2266 = vmul.f32 %v2034, 1.442695
        %v2267 = vpow.pop %v2266
        %v2268 = vmul.f32 %v2035, 1.442695
        %v2269 = vpow.pop %v2268
        %v2270 = vmul.f32 %v2036, 1.442695
        %v2271 = vpow.pop %v2270
        %v2272 = vmul.f32 %v2037, 1.442695
        %v2273 = vpow.pop %v2272
        %v2274 = vmul.f32 %v2038, 1.442695
        %v2275 = vpow.pop %v2274
        %v2276 = vmul.f32 %v2039, 1.442695
        %v2277 = vpow.pop %v2276
        %v2278 = vmul.f32 %v2040, 1.442695
        %v2279 = vpow.pop %v2278
        %v2280 = vmul.f32 %v2041, 1.442695
        %v2281 = vpow.pop %v2280
        %v2282 = vmul.f32 %v2042, 1.442695
        %v2283 = vpow.pop %v2282
        %v2284 = vmul.f32 %v2043, 1.442695
        %v2285 = vpow.pop %v2284
        %v2286 = vmul.f32 %v2044, 1.442695
        %v2287 = vpow.pop %v2286
        %v2288 = vmul.f32 %v2045, 1.442695
        %v2289 = vpow.pop %v2288
        %v2290 = vmul.f32 %v2046, 1.442695
        %v2291 = vpow.pop %v2290
        %v2292 = vmul.f32 %v2047, 1.442695
        %v2293 = vpow.pop %v2292
        %v2294 = vmul.f32 %v2048, 1.442695
        %v2295 = vpow.pop %v2294
        %v2296 = vmul.f32 %v2049, 1.442695
        %v2297 = vpow.pop %v2296
        %v2298 = vmul.f32 %v2050, 1.442695
        %v2299 = vpow.pop %v2298
        %v2300 = vmul.f32 %v2051, 1.442695
        %v2301 = vpow.pop %v2300
        %v2302 = vmul.f32 %v2052, 1.442695
        %v2303 = vpow.pop %v2302
        %v2304 = vmul.f32 %v2053, 1.442695
        %v2305 = vpow.pop %v2304
        %v2306 = vmul.f32 %v2054, 1.442695
        %v2307 = vpow.pop %v2306
        %v2308 = vmul.f32 %v2055, 1.442695
        %v2309 = vpow.pop %v2308
        %v2310 = vmul.f32 %v2056, 1.442695
        %v2311 = vpow.pop %v2310
        %v2312 = vmul.f32 %v2057, 1.442695
        %v2313 = vpow.pop %v2312
        %v2314 = vadd.f32 %v2059, %v2061
        %2315 = vadd.xlane.f32.xlu0 %v2314
        %v2316 = vpop.xlane.xlu0 %2315
        %v2317 = vadd.f32 %v2063, %v2065
        %2318 = vadd.xlane.f32.xlu0 %v2317
        %v2319 = vpop.xlane.xlu0 %2318
        %v2320 = vadd.f32 %v2067, %v2069
        %2321 = vadd.xlane.f32.xlu0 %v2320
        %v2322 = vpop.xlane.xlu0 %2321
        %v2323 = vadd.f32 %v2071, %v2073
        %2324 = vadd.xlane.f32.xlu0 %v2323
        %v2325 = vpop.xlane.xlu0 %2324
        %v2326 = vadd.f32 %v2075, %v2077
        %2327 = vadd.xlane.f32.xlu0 %v2326
        %v2328 = vpop.xlane.xlu0 %2327
        %v2329 = vadd.f32 %v2079, %v2081
        %2330 = vadd.xlane.f32.xlu0 %v2329
        %v2331 = vpop.xlane.xlu0 %2330
        %v2332 = vadd.f32 %v2083, %v2085
        %2333 = vadd.xlane.f32.xlu0 %v2332
        %v2334 = vpop.xlane.xlu0 %2333
        %v2335 = vadd.f32 %v2087, %v2089
        %2336 = vadd.xlane.f32.xlu0 %v2335
        %v2337 = vpop.xlane.xlu0 %2336
        %v2338 = vadd.f32 %v2091, %v2093
        %2339 = vadd.xlane.f32.xlu0 %v2338
        %v2340 = vpop.xlane.xlu0 %2339
        %v2341 = vadd.f32 %v2095, %v2097
        %2342 = vadd.xlane.f32.xlu0 %v2341
        %v2343 = vpop.xlane.xlu0 %2342
        %v2344 = vadd.f32 %v2099, %v2101
        %2345 = vadd.xlane.f32.xlu0 %v2344
        %v2346 = vpop.xlane.xlu0 %2345
        %v2347 = vadd.f32 %v2103, %v2105
        %2348 = vadd.xlane.f32.xlu0 %v2347
        %v2349 = vpop.xlane.xlu0 %2348
        %v2350 = vadd.f32 %v2107, %v2109
        %2351 = vadd.xlane.f32.xlu0 %v2350
        %v2352 = vpop.xlane.xlu0 %2351
        %v2353 = vadd.f32 %v2111, %v2113
        %2354 = vadd.xlane.f32.xlu0 %v2353
        %v2355 = vpop.xlane.xlu0 %2354
        %v2356 = vadd.f32 %v2115, %v2117
        %2357 = vadd.xlane.f32.xlu0 %v2356
        %v2358 = vpop.xlane.xlu0 %2357
        %v2359 = vadd.f32 %v2119, %v2121
        %2360 = vadd.xlane.f32.xlu0 %v2359
        %v2361 = vpop.xlane.xlu0 %2360
        %v2362 = vadd.f32 %v2123, %v2125
        %2363 = vadd.xlane.f32.xlu0 %v2362
        %v2364 = vpop.xlane.xlu0 %2363
        %v2365 = vadd.f32 %v2127, %v2129
        %2366 = vadd.xlane.f32.xlu0 %v2365
        %v2367 = vpop.xlane.xlu0 %2366
        %v2368 = vadd.f32 %v2131, %v2133
        %2369 = vadd.xlane.f32.xlu0 %v2368
        %v2370 = vpop.xlane.xlu0 %2369
        %v2371 = vadd.f32 %v2135, %v2137
        %2372 = vadd.xlane.f32.xlu0 %v2371
        %v2373 = vpop.xlane.xlu0 %2372
        %v2374 = vadd.f32 %v2139, %v2141
        %2375 = vadd.xlane.f32.xlu0 %v2374
        %v2376 = vpop.xlane.xlu0 %2375
        %v2377 = vadd.f32 %v2143, %v2145
        %2378 = vadd.xlane.f32.xlu0 %v2377
        %v2379 = vpop.xlane.xlu0 %2378
        %v2380 = vadd.f32 %v2147, %v2149
        %2381 = vadd.xlane.f32.xlu0 %v2380
        %v2382 = vpop.xlane.xlu0 %2381
        %v2383 = vadd.f32 %v2151, %v2153
        %2384 = vadd.xlane.f32.xlu0 %v2383
        %v2385 = vpop.xlane.xlu0 %2384
        %v2386 = vadd.f32 %v2155, %v2157
        %2387 = vadd.xlane.f32.xlu0 %v2386
        %v2388 = vpop.xlane.xlu0 %2387
        %v2389 = vadd.f32 %v2159, %v2161
        %2390 = vadd.xlane.f32.xlu0 %v2389
        %v2391 = vpop.xlane.xlu0 %2390
        %v2392 = vadd.f32 %v2163, %v2165
        %2393 = vadd.xlane.f32.xlu0 %v2392
        %v2394 = vpop.xlane.xlu0 %2393
        %v2395 = vadd.f32 %v2167, %v2169
        %2396 = vadd.xlane.f32.xlu0 %v2395
        %v2397 = vpop.xlane.xlu0 %2396
        %v2398 = vadd.f32 %v2171, %v2173
        %2399 = vadd.xlane.f32.xlu0 %v2398
        %v2400 = vpop.xlane.xlu0 %2399
        %v2401 = vadd.f32 %v2175, %v2177
        %2402 = vadd.xlane.f32.xlu0 %v2401
        %v2403 = vpop.xlane.xlu0 %2402
        %v2404 = vadd.f32 %v2179, %v2181
        %2405 = vadd.xlane.f32.xlu0 %v2404
        %v2406 = vpop.xlane.xlu0 %2405
        %v2407 = vadd.f32 %v2183, %v2185
        %2408 = vadd.xlane.f32.xlu0 %v2407
        %v2409 = vpop.xlane.xlu0 %2408
        %v2410 = vadd.f32 %v2187, %v2189
        %2411 = vadd.xlane.f32.xlu0 %v2410
        %v2412 = vpop.xlane.xlu0 %2411
        %v2413 = vadd.f32 %v2191, %v2193
        %2414 = vadd.xlane.f32.xlu0 %v2413
        %v2415 = vpop.xlane.xlu0 %2414
        %v2416 = vadd.f32 %v2195, %v2197
        %2417 = vadd.xlane.f32.xlu0 %v2416
        %v2418 = vpop.xlane.xlu0 %2417
        %v2419 = vadd.f32 %v2199, %v2201
        %2420 = vadd.xlane.f32.xlu0 %v2419
        %v2421 = vpop.xlane.xlu0 %2420
        %v2422 = vadd.f32 %v2203, %v2205
        %2423 = vadd.xlane.f32.xlu0 %v2422
        %v2424 = vpop.xlane.xlu0 %2423
        %v2425 = vadd.f32 %v2207, %v2209
        %2426 = vadd.xlane.f32.xlu0 %v2425
        %v2427 = vpop.xlane.xlu0 %2426
        %v2428 = vadd.f32 %v2211, %v2213
        %2429 = vadd.xlane.f32.xlu0 %v2428
        %v2430 = vpop.xlane.xlu0 %2429
        %v2431 = vadd.f32 %v2215, %v2217
        %2432 = vadd.xlane.f32.xlu0 %v2431
        %v2433 = vpop.xlane.xlu0 %2432
        %v2434 = vadd.f32 %v2219, %v2221
        %2435 = vadd.xlane.f32.xlu0 %v2434
        %v2436 = vpop.xlane.xlu0 %2435
        %v2437 = vadd.f32 %v2223, %v2225
        %2438 = vadd.xlane.f32.xlu0 %v2437
        %v2439 = vpop.xlane.xlu0 %2438
        %v2440 = vadd.f32 %v2227, %v2229
        %2441 = vadd.xlane.f32.xlu0 %v2440
        %v2442 = vpop.xlane.xlu0 %2441
        %v2443 = vadd.f32 %v2231, %v2233
        %2444 = vadd.xlane.f32.xlu0 %v2443
        %v2445 = vpop.xlane.xlu0 %2444
        %v2446 = vadd.f32 %v2235, %v2237
        %2447 = vadd.xlane.f32.xlu0 %v2446
        %v2448 = vpop.xlane.xlu0 %2447
        %v2449 = vadd.f32 %v2239, %v2241
        %2450 = vadd.xlane.f32.xlu0 %v2449
        %v2451 = vpop.xlane.xlu0 %2450
        %v2452 = vadd.f32 %v2243, %v2245
        %2453 = vadd.xlane.f32.xlu0 %v2452
        %v2454 = vpop.xlane.xlu0 %2453
        %v2455 = vadd.f32 %v2247, %v2249
        %2456 = vadd.xlane.f32.xlu0 %v2455
        %v2457 = vpop.xlane.xlu0 %2456
        %v2458 = vadd.f32 %v2251, %v2253
        %2459 = vadd.xlane.f32.xlu0 %v2458
        %v2460 = vpop.xlane.xlu0 %2459
        %v2461 = vadd.f32 %v2255, %v2257
        %2462 = vadd.xlane.f32.xlu0 %v2461
        %v2463 = vpop.xlane.xlu0 %2462
        %v2464 = vadd.f32 %v2259, %v2261
        %2465 = vadd.xlane.f32.xlu0 %v2464
        %v2466 = vpop.xlane.xlu0 %2465
        %v2467 = vadd.f32 %v2263, %v2265
        %2468 = vadd.xlane.f32.xlu0 %v2467
        %v2469 = vpop.xlane.xlu0 %2468
        %v2470 = vadd.f32 %v2267, %v2269
        %2471 = vadd.xlane.f32.xlu0 %v2470
        %v2472 = vpop.xlane.xlu0 %2471
        %v2473 = vadd.f32 %v2271, %v2273
        %2474 = vadd.xlane.f32.xlu0 %v2473
        %v2475 = vpop.xlane.xlu0 %2474
        %v2476 = vadd.f32 %v2275, %v2277
        %2477 = vadd.xlane.f32.xlu0 %v2476
        %v2478 = vpop.xlane.xlu0 %2477
        %v2479 = vadd.f32 %v2279, %v2281
        %2480 = vadd.xlane.f32.xlu0 %v2479
        %v2481 = vpop.xlane.xlu0 %2480
        %v2482 = vadd.f32 %v2283, %v2285
        %2483 = vadd.xlane.f32.xlu0 %v2482
        %v2484 = vpop.xlane.xlu0 %2483
        %v2485 = vadd.f32 %v2287, %v2289
        %2486 = vadd.xlane.f32.xlu0 %v2485
        %v2487 = vpop.xlane.xlu0 %2486
        %v2488 = vadd.f32 %v2291, %v2293
        %2489 = vadd.xlane.f32.xlu0 %v2488
        %v2490 = vpop.xlane.xlu0 %2489
        %v2491 = vadd.f32 %v2295, %v2297
        %2492 = vadd.xlane.f32.xlu0 %v2491
        %v2493 = vpop.xlane.xlu0 %2492
        %v2494 = vadd.f32 %v2299, %v2301
        %2495 = vadd.xlane.f32.xlu0 %v2494
        %v2496 = vpop.xlane.xlu0 %2495
        %v2497 = vadd.f32 %v2303, %v2305
        %2498 = vadd.xlane.f32.xlu0 %v2497
        %v2499 = vpop.xlane.xlu0 %2498
        %v2500 = vadd.f32 %v2307, %v2309
        %2501 = vadd.xlane.f32.xlu0 %v2500
        %v2502 = vpop.xlane.xlu0 %2501
        %v2503 = vadd.f32 %v2311, %v2313
        %2504 = vadd.xlane.f32.xlu0 %v2503
        %v2505 = vpop.xlane.xlu0 %2504
        %v2506 = vrcp.pop %v2316
        %v2507 = vrcp.pop %v2319
        %v2508 = vrcp.pop %v2322
        %v2509 = vrcp.pop %v2325
        %v2510 = vrcp.pop %v2328
        %v2511 = vrcp.pop %v2331
        %v2512 = vrcp.pop %v2334
        %v2513 = vrcp.pop %v2337
        %v2514 = vrcp.pop %v2340
        %v2515 = vrcp.pop %v2343
        %v2516 = vrcp.pop %v2346
        %v2517 = vrcp.pop %v2349
        %v2518 = vrcp.pop %v2352
        %v2519 = vrcp.pop %v2355
        %v2520 = vrcp.pop %v2358
        %v2521 = vrcp.pop %v2361
        %v2522 = vrcp.pop %v2364
        %v2523 = vrcp.pop %v2367
        %v2524 = vrcp.pop %v2370
        %v2525 = vrcp.pop %v2373
        %v2526 = vrcp.pop %v2376
        %v2527 = vrcp.pop %v2379
        %v2528 = vrcp.pop %v2382
        %v2529 = vrcp.pop %v2385
        %v2530 = vrcp.pop %v2388
        %v2531 = vrcp.pop %v2391
        %v2532 = vrcp.pop %v2394
        %v2533 = vrcp.pop %v2397
        %v2534 = vrcp.pop %v2400
        %v2535 = vrcp.pop %v2403
        %v2536 = vrcp.pop %v2406
        %v2537 = vrcp.pop %v2409
        %v2538 = vrcp.pop %v2412
        %v2539 = vrcp.pop %v2415
        %v2540 = vrcp.pop %v2418
        %v2541 = vrcp.pop %v2421
        %v2542 = vrcp.pop %v2424
        %v2543 = vrcp.pop %v2427
        %v2544 = vrcp.pop %v2430
        %v2545 = vrcp.pop %v2433
        %v2546 = vrcp.pop %v2436
        %v2547 = vrcp.pop %v2439
        %v2548 = vrcp.pop %v2442
        %v2549 = vrcp.pop %v2445
        %v2550 = vrcp.pop %v2448
        %v2551 = vrcp.pop %v2451
        %v2552 = vrcp.pop %v2454
        %v2553 = vrcp.pop %v2457
        %v2554 = vrcp.pop %v2460
        %v2555 = vrcp.pop %v2463
        %v2556 = vrcp.pop %v2466
        %v2557 = vrcp.pop %v2469
        %v2558 = vrcp.pop %v2472
        %v2559 = vrcp.pop %v2475
        %v2560 = vrcp.pop %v2478
        %v2561 = vrcp.pop %v2481
        %v2562 = vrcp.pop %v2484
        %v2563 = vrcp.pop %v2487
        %v2564 = vrcp.pop %v2490
        %v2565 = vrcp.pop %v2493
        %v2566 = vrcp.pop %v2496
        %v2567 = vrcp.pop %v2499
        %v2568 = vrcp.pop %v2502
        %v2569 = vrcp.pop %v2505
        %v2570 = vmul.f32 %v2059, %v2506
        %v2571 = vmul.f32 %v2061, %v2506
        %v2572 = vmul.f32 %v2063, %v2507
        %v2573 = vmul.f32 %v2065, %v2507
        %v2574 = vmul.f32 %v2067, %v2508
        %v2575 = vmul.f32 %v2069, %v2508
        %v2576 = vmul.f32 %v2071, %v2509
        %v2577 = vmul.f32 %v2073, %v2509
        %v2578 = vmul.f32 %v2075, %v2510
        %v2579 = vmul.f32 %v2077, %v2510
        %v2580 = vmul.f32 %v2079, %v2511
        %v2581 = vmul.f32 %v2081, %v2511
        %v2582 = vmul.f32 %v2083, %v2512
        %v2583 = vmul.f32 %v2085, %v2512
        %v2584 = vmul.f32 %v2087, %v2513
        %v2585 = vmul.f32 %v2089, %v2513
        %v2586 = vmul.f32 %v2091, %v2514
        %v2587 = vmul.f32 %v2093, %v2514
        %v2588 = vmul.f32 %v2095, %v2515
        %v2589 = vmul.f32 %v2097, %v2515
        %v2590 = vmul.f32 %v2099, %v2516
        %v2591 = vmul.f32 %v2101, %v2516
        %v2592 = vmul.f32 %v2103, %v2517
        %v2593 = vmul.f32 %v2105, %v2517
        %v2594 = vmul.f32 %v2107, %v2518
        %v2595 = vmul.f32 %v2109, %v2518
        %v2596 = vmul.f32 %v2111, %v2519
        %v2597 = vmul.f32 %v2113, %v2519
        %v2598 = vmul.f32 %v2115, %v2520
        %v2599 = vmul.f32 %v2117, %v2520
        %v2600 = vmul.f32 %v2119, %v2521
        %v2601 = vmul.f32 %v2121, %v2521
        %v2602 = vmul.f32 %v2123, %v2522
        %v2603 = vmul.f32 %v2125, %v2522
        %v2604 = vmul.f32 %v2127, %v2523
        %v2605 = vmul.f32 %v2129, %v2523
        %v2606 = vmul.f32 %v2131, %v2524
        %v2607 = vmul.f32 %v2133, %v2524
        %v2608 = vmul.f32 %v2135, %v2525
        %v2609 = vmul.f32 %v2137, %v2525
        %v2610 = vmul.f32 %v2139, %v2526
        %v2611 = vmul.f32 %v2141, %v2526
        %v2612 = vmul.f32 %v2143, %v2527
        %v2613 = vmul.f32 %v2145, %v2527
        %v2614 = vmul.f32 %v2147, %v2528
        %v2615 = vmul.f32 %v2149, %v2528
        %v2616 = vmul.f32 %v2151, %v2529
        %v2617 = vmul.f32 %v2153, %v2529
        %v2618 = vmul.f32 %v2155, %v2530
        %v2619 = vmul.f32 %v2157, %v2530
        %v2620 = vmul.f32 %v2159, %v2531
        %v2621 = vmul.f32 %v2161, %v2531
        %v2622 = vmul.f32 %v2163, %v2532
        %v2623 = vmul.f32 %v2165, %v2532
        %v2624 = vmul.f32 %v2167, %v2533
        %v2625 = vmul.f32 %v2169, %v2533
        %v2626 = vmul.f32 %v2171, %v2534
        %v2627 = vmul.f32 %v2173, %v2534
        %v2628 = vmul.f32 %v2175, %v2535
        %v2629 = vmul.f32 %v2177, %v2535
        %v2630 = vmul.f32 %v2179, %v2536
        %v2631 = vmul.f32 %v2181, %v2536
        %v2632 = vmul.f32 %v2183, %v2537
        %v2633 = vmul.f32 %v2185, %v2537
        %v2634 = vmul.f32 %v2187, %v2538
        %v2635 = vmul.f32 %v2189, %v2538
        %v2636 = vmul.f32 %v2191, %v2539
        %v2637 = vmul.f32 %v2193, %v2539
        %v2638 = vmul.f32 %v2195, %v2540
        %v2639 = vmul.f32 %v2197, %v2540
        %v2640 = vmul.f32 %v2199, %v2541
        %v2641 = vmul.f32 %v2201, %v2541
        %v2642 = vmul.f32 %v2203, %v2542
        %v2643 = vmul.f32 %v2205, %v2542
        %v2644 = vmul.f32 %v2207, %v2543
        %v2645 = vmul.f32 %v2209, %v2543
        %v2646 = vmul.f32 %v2211, %v2544
        %v2647 = vmul.f32 %v2213, %v2544
        %v2648 = vmul.f32 %v2215, %v2545
        %v2649 = vmul.f32 %v2217, %v2545
        %v2650 = vmul.f32 %v2219, %v2546
        %v2651 = vmul.f32 %v2221, %v2546
        %v2652 = vmul.f32 %v2223, %v2547
        %v2653 = vmul.f32 %v2225, %v2547
        %v2654 = vmul.f32 %v2227, %v2548
        %v2655 = vmul.f32 %v2229, %v2548
        %v2656 = vmul.f32 %v2231, %v2549
        %v2657 = vmul.f32 %v2233, %v2549
        %v2658 = vmul.f32 %v2235, %v2550
        %v2659 = vmul.f32 %v2237, %v2550
        %v2660 = vmul.f32 %v2239, %v2551
        %v2661 = vmul.f32 %v2241, %v2551
        %v2662 = vmul.f32 %v2243, %v2552
        %v2663 = vmul.f32 %v2245, %v2552
        %v2664 = vmul.f32 %v2247, %v2553
        %v2665 = vmul.f32 %v2249, %v2553
        %v2666 = vmul.f32 %v2251, %v2554
        %v2667 = vmul.f32 %v2253, %v2554
        %v2668 = vmul.f32 %v2255, %v2555
        %v2669 = vmul.f32 %v2257, %v2555
        %v2670 = vmul.f32 %v2259, %v2556
        %v2671 = vmul.f32 %v2261, %v2556
        %v2672 = vmul.f32 %v2263, %v2557
        %v2673 = vmul.f32 %v2265, %v2557
        %v2674 = vmul.f32 %v2267, %v2558
        %v2675 = vmul.f32 %v2269, %v2558
        %v2676 = vmul.f32 %v2271, %v2559
        %v2677 = vmul.f32 %v2273, %v2559
        %v2678 = vmul.f32 %v2275, %v2560
        %v2679 = vmul.f32 %v2277, %v2560
        %v2680 = vmul.f32 %v2279, %v2561
        %v2681 = vmul.f32 %v2281, %v2561
        %v2682 = vmul.f32 %v2283, %v2562
        %v2683 = vmul.f32 %v2285, %v2562
        %v2684 = vmul.f32 %v2287, %v2563
        %v2685 = vmul.f32 %v2289, %v2563
        %v2686 = vmul.f32 %v2291, %v2564
        %v2687 = vmul.f32 %v2293, %v2564
        %v2688 = vmul.f32 %v2295, %v2565
        %v2689 = vmul.f32 %v2297, %v2565
        %v2690 = vmul.f32 %v2299, %v2566
        %v2691 = vmul.f32 %v2301, %v2566
        %v2692 = vmul.f32 %v2303, %v2567
        %v2693 = vmul.f32 %v2305, %v2567
        %v2694 = vmul.f32 %v2307, %v2568
        %v2695 = vmul.f32 %v2309, %v2568
        %v2696 = vmul.f32 %v2311, %v2569
        %v2697 = vmul.f32 %v2313, %v2569
        %v2698 = vpack.c.bf16 %v2571, %v2570
        %v2699 = vpack.c.bf16 %v2573, %v2572
        %v2700 = vpack.c.bf16 %v2575, %v2574
        %v2701 = vpack.c.bf16 %v2577, %v2576
        %v2702 = vpack.c.bf16 %v2579, %v2578
        %v2703 = vpack.c.bf16 %v2581, %v2580
        %v2704 = vpack.c.bf16 %v2583, %v2582
        %v2705 = vpack.c.bf16 %v2585, %v2584
        %v2706 = vpack.c.bf16 %v2587, %v2586
        %v2707 = vpack.c.bf16 %v2589, %v2588
        %v2708 = vpack.c.bf16 %v2591, %v2590
        %v2709 = vpack.c.bf16 %v2593, %v2592
        %v2710 = vpack.c.bf16 %v2595, %v2594
        %v2711 = vpack.c.bf16 %v2597, %v2596
        %v2712 = vpack.c.bf16 %v2599, %v2598
        %v2713 = vpack.c.bf16 %v2601, %v2600
        %v2714 = vpack.c.bf16 %v2603, %v2602
        %v2715 = vpack.c.bf16 %v2605, %v2604
        %v2716 = vpack.c.bf16 %v2607, %v2606
        %v2717 = vpack.c.bf16 %v2609, %v2608
        %v2718 = vpack.c.bf16 %v2611, %v2610
        %v2719 = vpack.c.bf16 %v2613, %v2612
        %v2720 = vpack.c.bf16 %v2615, %v2614
        %v2721 = vpack.c.bf16 %v2617, %v2616
        %v2722 = vpack.c.bf16 %v2619, %v2618
        %v2723 = vpack.c.bf16 %v2621, %v2620
        %v2724 = vpack.c.bf16 %v2623, %v2622
        %v2725 = vpack.c.bf16 %v2625, %v2624
        %v2726 = vpack.c.bf16 %v2627, %v2626
        %v2727 = vpack.c.bf16 %v2629, %v2628
        %v2728 = vpack.c.bf16 %v2631, %v2630
        %v2729 = vpack.c.bf16 %v2633, %v2632
        %v2730 = vpack.c.bf16 %v2635, %v2634
        %v2731 = vpack.c.bf16 %v2637, %v2636
        %v2732 = vpack.c.bf16 %v2639, %v2638
        %v2733 = vpack.c.bf16 %v2641, %v2640
        %v2734 = vpack.c.bf16 %v2643, %v2642
        %v2735 = vpack.c.bf16 %v2645, %v2644
        %v2736 = vpack.c.bf16 %v2647, %v2646
        %v2737 = vpack.c.bf16 %v2649, %v2648
        %v2738 = vpack.c.bf16 %v2651, %v2650
        %v2739 = vpack.c.bf16 %v2653, %v2652
        %v2740 = vpack.c.bf16 %v2655, %v2654
        %v2741 = vpack.c.bf16 %v2657, %v2656
        %v2742 = vpack.c.bf16 %v2659, %v2658
        %v2743 = vpack.c.bf16 %v2661, %v2660
        %v2744 = vpack.c.bf16 %v2663, %v2662
        %v2745 = vpack.c.bf16 %v2665, %v2664
        %v2746 = vpack.c.bf16 %v2667, %v2666
        %v2747 = vpack.c.bf16 %v2669, %v2668
        %v2748 = vpack.c.bf16 %v2671, %v2670
        %v2749 = vpack.c.bf16 %v2673, %v2672
        %v2750 = vpack.c.bf16 %v2675, %v2674
        %v2751 = vpack.c.bf16 %v2677, %v2676
        %v2752 = vpack.c.bf16 %v2679, %v2678
        %v2753 = vpack.c.bf16 %v2681, %v2680
        %v2754 = vpack.c.bf16 %v2683, %v2682
        %v2755 = vpack.c.bf16 %v2685, %v2684
        %v2756 = vpack.c.bf16 %v2687, %v2686
        %v2757 = vpack.c.bf16 %v2689, %v2688
        %v2758 = vpack.c.bf16 %v2691, %v2690
        %v2759 = vpack.c.bf16 %v2693, %v2692
        %v2760 = vpack.c.bf16 %v2695, %v2694
        %v2761 = vpack.c.bf16 %v2697, %v2696
        %v2766 = vunpack.c.l.b16 %v1141
        %v2767 = vunpack.c.h.b16 %v1141
        %v2768 = vunpack.c.l.b16 %v1142
        %v2769 = vunpack.c.h.b16 %v1142
        %v2770 = vunpack.c.l.b16 %v1143
        %v2771 = vunpack.c.h.b16 %v1143
        %v2772 = vunpack.c.l.b16 %v1144
        %v2773 = vunpack.c.h.b16 %v1144
        %v2774 = vpack.c.b16 %v2768, %v2766
        %v2775 = vpack.c.b16 %v2769, %v2767
        %v2776 = vpack.c.b16 %v2772, %v2770
        %v2777 = vpack.c.b16 %v2773, %v2771
        %v2814 = vunpack.c.l.b16 %v2698
        %v2815 = vunpack.c.h.b16 %v2698
        %v2816 = vunpack.c.l.b16 %v2699
        %v2817 = vunpack.c.h.b16 %v2699
        %v2818 = vunpack.c.l.b16 %v2700
        %v2819 = vunpack.c.h.b16 %v2700
        %v2820 = vunpack.c.l.b16 %v2701
        %v2821 = vunpack.c.h.b16 %v2701
        %v2822 = vunpack.c.l.b16 %v2702
        %v2823 = vunpack.c.h.b16 %v2702
        %v2824 = vunpack.c.l.b16 %v2703
        %v2825 = vunpack.c.h.b16 %v2703
        %v2826 = vunpack.c.l.b16 %v2704
        %v2827 = vunpack.c.h.b16 %v2704
        %v2828 = vunpack.c.l.b16 %v2705
        %v2829 = vunpack.c.h.b16 %v2705
        %v2830 = vunpack.c.l.b16 %v2706
        %v2831 = vunpack.c.h.b16 %v2706
        %v2832 = vunpack.c.l.b16 %v2707
        %v2833 = vunpack.c.h.b16 %v2707
        %v2834 = vunpack.c.l.b16 %v2708
        %v2835 = vunpack.c.h.b16 %v2708
        %v2836 = vunpack.c.l.b16 %v2709
        %v2837 = vunpack.c.h.b16 %v2709
        %v2838 = vunpack.c.l.b16 %v2710
        %v2839 = vunpack.c.h.b16 %v2710
        %v2840 = vunpack.c.l.b16 %v2711
        %v2841 = vunpack.c.h.b16 %v2711
        %v2842 = vunpack.c.l.b16 %v2712
        %v2843 = vunpack.c.h.b16 %v2712
        %v2844 = vunpack.c.l.b16 %v2713
        %v2845 = vunpack.c.h.b16 %v2713
        %v2846 = vunpack.c.l.b16 %v2714
        %v2847 = vunpack.c.h.b16 %v2714
        %v2848 = vunpack.c.l.b16 %v2715
        %v2849 = vunpack.c.h.b16 %v2715
        %v2850 = vunpack.c.l.b16 %v2716
        %v2851 = vunpack.c.h.b16 %v2716
        %v2852 = vunpack.c.l.b16 %v2717
        %v2853 = vunpack.c.h.b16 %v2717
        %v2854 = vunpack.c.l.b16 %v2718
        %v2855 = vunpack.c.h.b16 %v2718
        %v2856 = vunpack.c.l.b16 %v2719
        %v2857 = vunpack.c.h.b16 %v2719
        %v2858 = vunpack.c.l.b16 %v2720
        %v2859 = vunpack.c.h.b16 %v2720
        %v2860 = vunpack.c.l.b16 %v2721
        %v2861 = vunpack.c.h.b16 %v2721
        %v2862 = vunpack.c.l.b16 %v2722
        %v2863 = vunpack.c.h.b16 %v2722
        %v2864 = vunpack.c.l.b16 %v2723
        %v2865 = vunpack.c.h.b16 %v2723
        %v2866 = vunpack.c.l.b16 %v2724
        %v2867 = vunpack.c.h.b16 %v2724
        %v2868 = vunpack.c.l.b16 %v2725
        %v2869 = vunpack.c.h.b16 %v2725
        %v2870 = vunpack.c.l.b16 %v2726
        %v2871 = vunpack.c.h.b16 %v2726
        %v2872 = vunpack.c.l.b16 %v2727
        %v2873 = vunpack.c.h.b16 %v2727
        %v2874 = vunpack.c.l.b16 %v2728
        %v2875 = vunpack.c.h.b16 %v2728
        %v2876 = vunpack.c.l.b16 %v2729
        %v2877 = vunpack.c.h.b16 %v2729
        %v2878 = vpack.c.b16 %v2816, %v2814
        %v2879 = vpack.c.b16 %v2817, %v2815
        %v2880 = vpack.c.b16 %v2820, %v2818
        %v2881 = vpack.c.b16 %v2821, %v2819
        %v2882 = vpack.c.b16 %v2824, %v2822
        %v2883 = vpack.c.b16 %v2825, %v2823
        %v2884 = vpack.c.b16 %v2828, %v2826
        %v2885 = vpack.c.b16 %v2829, %v2827
        %v2886 = vpack.c.b16 %v2832, %v2830
        %v2887 = vpack.c.b16 %v2833, %v2831
        %v2888 = vpack.c.b16 %v2836, %v2834
        %v2889 = vpack.c.b16 %v2837, %v2835
        %v2890 = vpack.c.b16 %v2840, %v2838
        %v2891 = vpack.c.b16 %v2841, %v2839
        %v2892 = vpack.c.b16 %v2844, %v2842
        %v2893 = vpack.c.b16 %v2845, %v2843
        %v2894 = vpack.c.b16 %v2848, %v2846
        %v2895 = vpack.c.b16 %v2849, %v2847
        %v2896 = vpack.c.b16 %v2852, %v2850
        %v2897 = vpack.c.b16 %v2853, %v2851
        %v2898 = vpack.c.b16 %v2856, %v2854
        %v2899 = vpack.c.b16 %v2857, %v2855
        %v2900 = vpack.c.b16 %v2860, %v2858
        %v2901 = vpack.c.b16 %v2861, %v2859
        %v2902 = vpack.c.b16 %v2864, %v2862
        %v2903 = vpack.c.b16 %v2865, %v2863
        %v2904 = vpack.c.b16 %v2868, %v2866
        %v2905 = vpack.c.b16 %v2869, %v2867
        %v2906 = vpack.c.b16 %v2872, %v2870
        %v2907 = vpack.c.b16 %v2873, %v2871
        %v2908 = vpack.c.b16 %v2876, %v2874
        %v2909 = vpack.c.b16 %v2877, %v2875
        %2942 = vmatpush.bf16.xpose.msra.mxu0 %v2892
        %2943 = vmatpush.bf16.xpose.msra.mxu0 %v2890
        %2944 = vmatpush.bf16.xpose.msra.mxu0 %v2888
        %2945 = vmatpush.bf16.xpose.msra.mxu0 %v2886
        %2946 = vmatpush.bf16.xpose.msra.mxu0 %v2884
        %2947 = vmatpush.bf16.xpose.msra.mxu0 %v2882
        %2948 = vmatpush.bf16.xpose.msra.mxu0 %v2880
        %2949 = vmatpush.bf16.xpose.msra.mxu0 %v2878
        %2950 = vmatmul.bf16.gmra.mxu0 %v2774
        %v2951 = vpop.f32.mrf.mxu0
        %v2952 = vadd.f32 0.0, %v2951
        %v2953 = vpop.f32.mrf.mxu0
        %v2954 = vadd.f32 0.0, %v2953
        %2955 = vmatmul.bf16.gmra.mxu0 %v2776
        %v2956 = vpop.f32.mrf.mxu0
        %v2957 = vadd.f32 0.0, %v2956
        %v2958 = vpop.f32.mrf.mxu0
        %v2959 = vadd.f32 0.0, %v2958
        %2960 = vdwg.mxu0
        %2961 = vmatpush.bf16.xpose.msra.mxu0 %v2893
        %2962 = vmatpush.bf16.xpose.msra.mxu0 %v2891
        %2963 = vmatpush.bf16.xpose.msra.mxu0 %v2889
        %2964 = vmatpush.bf16.xpose.msra.mxu0 %v2887
        %2965 = vmatpush.bf16.xpose.msra.mxu0 %v2885
        %2966 = vmatpush.bf16.xpose.msra.mxu0 %v2883
        %2967 = vmatpush.bf16.xpose.msra.mxu0 %v2881
        %2968 = vmatpush.bf16.xpose.msra.mxu0 %v2879
        %2969 = vmatmul.bf16.gmra.mxu0 %v2775
        %v2970 = vpop.f32.mrf.mxu0
        %v2971 = vadd.f32 %v2952, %v2970
        %v2972 = vpop.f32.mrf.mxu0
        %v2973 = vadd.f32 %v2954, %v2972
        %2974 = vmatmul.bf16.gmra.mxu0 %v2777
        %v2975 = vpop.f32.mrf.mxu0
        %v2976 = vadd.f32 %v2957, %v2975
        %v2977 = vpop.f32.mrf.mxu0
        %v2978 = vadd.f32 %v2959, %v2977
        %2979 = vdwg.mxu0
        %2980 = vmatpush.bf16.xpose.msra.mxu0 %v2908
        %2981 = vmatpush.bf16.xpose.msra.mxu0 %v2906
        %2982 = vmatpush.bf16.xpose.msra.mxu0 %v2904
        %2983 = vmatpush.bf16.xpose.msra.mxu0 %v2902
        %2984 = vmatpush.bf16.xpose.msra.mxu0 %v2900
        %2985 = vmatpush.bf16.xpose.msra.mxu0 %v2898
        %2986 = vmatpush.bf16.xpose.msra.mxu0 %v2896
        %2987 = vmatpush.bf16.xpose.msra.mxu0 %v2894
        %2988 = vmatmul.bf16.gmra.mxu0 %v2774
        %v2989 = vpop.f32.mrf.mxu0
        %v2990 = vadd.f32 0.0, %v2989
        %v2991 = vpop.f32.mrf.mxu0
        %v2992 = vadd.f32 0.0, %v2991
        %2993 = vmatmul.bf16.gmra.mxu0 %v2776
        %v2994 = vpop.f32.mrf.mxu0
        %v2995 = vadd.f32 0.0, %v2994
        %v2996 = vpop.f32.mrf.mxu0
        %v2997 = vadd.f32 0.0, %v2996
        %2998 = vdwg.mxu0
        %2999 = vmatpush.bf16.xpose.msra.mxu0 %v2909
        %3000 = vmatpush.bf16.xpose.msra.mxu0 %v2907
        %3001 = vmatpush.bf16.xpose.msra.mxu0 %v2905
        %3002 = vmatpush.bf16.xpose.msra.mxu0 %v2903
        %3003 = vmatpush.bf16.xpose.msra.mxu0 %v2901
        %3004 = vmatpush.bf16.xpose.msra.mxu0 %v2899
        %3005 = vmatpush.bf16.xpose.msra.mxu0 %v2897
        %3006 = vmatpush.bf16.xpose.msra.mxu0 %v2895
        %3007 = vmatmul.bf16.gmra.mxu0 %v2775
        %v3008 = vpop.f32.mrf.mxu0
        %v3009 = vadd.f32 %v2990, %v3008
        %v3010 = vpop.f32.mrf.mxu0
        %v3011 = vadd.f32 %v2992, %v3010
        %3012 = vmatmul.bf16.gmra.mxu0 %v2777
        %v3013 = vpop.f32.mrf.mxu0
        %v3014 = vadd.f32 %v2995, %v3013
        %v3015 = vpop.f32.mrf.mxu0
        %v3016 = vadd.f32 %v2997, %v3015
        %3017 = vdwg.mxu0
        %v3022 = vunpack.c.l.b16 %v1153
        %v3023 = vunpack.c.h.b16 %v1153
        %v3024 = vunpack.c.l.b16 %v1154
        %v3025 = vunpack.c.h.b16 %v1154
        %v3026 = vunpack.c.l.b16 %v1155
        %v3027 = vunpack.c.h.b16 %v1155
        %v3028 = vunpack.c.l.b16 %v1156
        %v3029 = vunpack.c.h.b16 %v1156
        %v3030 = vpack.c.b16 %v3024, %v3022
        %v3031 = vpack.c.b16 %v3025, %v3023
        %v3032 = vpack.c.b16 %v3028, %v3026
        %v3033 = vpack.c.b16 %v3029, %v3027
        %v3070 = vunpack.c.l.b16 %v2730
        %v3071 = vunpack.c.h.b16 %v2730
        %v3072 = vunpack.c.l.b16 %v2731
        %v3073 = vunpack.c.h.b16 %v2731
        %v3074 = vunpack.c.l.b16 %v2732
        %v3075 = vunpack.c.h.b16 %v2732
        %v3076 = vunpack.c.l.b16 %v2733
        %v3077 = vunpack.c.h.b16 %v2733
        %v3078 = vunpack.c.l.b16 %v2734
        %v3079 = vunpack.c.h.b16 %v2734
        %v3080 = vunpack.c.l.b16 %v2735
        %v3081 = vunpack.c.h.b16 %v2735
        %v3082 = vunpack.c.l.b16 %v2736
        %v3083 = vunpack.c.h.b16 %v2736
        %v3084 = vunpack.c.l.b16 %v2737
        %v3085 = vunpack.c.h.b16 %v2737
        %v3086 = vunpack.c.l.b16 %v2738
        %v3087 = vunpack.c.h.b16 %v2738
        %v3088 = vunpack.c.l.b16 %v2739
        %v3089 = vunpack.c.h.b16 %v2739
        %v3090 = vunpack.c.l.b16 %v2740
        %v3091 = vunpack.c.h.b16 %v2740
        %v3092 = vunpack.c.l.b16 %v2741
        %v3093 = vunpack.c.h.b16 %v2741
        %v3094 = vunpack.c.l.b16 %v2742
        %v3095 = vunpack.c.h.b16 %v2742
        %v3096 = vunpack.c.l.b16 %v2743
        %v3097 = vunpack.c.h.b16 %v2743
        %v3098 = vunpack.c.l.b16 %v2744
        %v3099 = vunpack.c.h.b16 %v2744
        %v3100 = vunpack.c.l.b16 %v2745
        %v3101 = vunpack.c.h.b16 %v2745
        %v3102 = vunpack.c.l.b16 %v2746
        %v3103 = vunpack.c.h.b16 %v2746
        %v3104 = vunpack.c.l.b16 %v2747
        %v3105 = vunpack.c.h.b16 %v2747
        %v3106 = vunpack.c.l.b16 %v2748
        %v3107 = vunpack.c.h.b16 %v2748
        %v3108 = vunpack.c.l.b16 %v2749
        %v3109 = vunpack.c.h.b16 %v2749
        %v3110 = vunpack.c.l.b16 %v2750
        %v3111 = vunpack.c.h.b16 %v2750
        %v3112 = vunpack.c.l.b16 %v2751
        %v3113 = vunpack.c.h.b16 %v2751
        %v3114 = vunpack.c.l.b16 %v2752
        %v3115 = vunpack.c.h.b16 %v2752
        %v3116 = vunpack.c.l.b16 %v2753
        %v3117 = vunpack.c.h.b16 %v2753
        %v3118 = vunpack.c.l.b16 %v2754
        %v3119 = vunpack.c.h.b16 %v2754
        %v3120 = vunpack.c.l.b16 %v2755
        %v3121 = vunpack.c.h.b16 %v2755
        %v3122 = vunpack.c.l.b16 %v2756
        %v3123 = vunpack.c.h.b16 %v2756
        %v3124 = vunpack.c.l.b16 %v2757
        %v3125 = vunpack.c.h.b16 %v2757
        %v3126 = vunpack.c.l.b16 %v2758
        %v3127 = vunpack.c.h.b16 %v2758
        %v3128 = vunpack.c.l.b16 %v2759
        %v3129 = vunpack.c.h.b16 %v2759
        %v3130 = vunpack.c.l.b16 %v2760
        %v3131 = vunpack.c.h.b16 %v2760
        %v3132 = vunpack.c.l.b16 %v2761
        %v3133 = vunpack.c.h.b16 %v2761
        %v3134 = vpack.c.b16 %v3072, %v3070
        %v3135 = vpack.c.b16 %v3073, %v3071
        %v3136 = vpack.c.b16 %v3076, %v3074
        %v3137 = vpack.c.b16 %v3077, %v3075
        %v3138 = vpack.c.b16 %v3080, %v3078
        %v3139 = vpack.c.b16 %v3081, %v3079
        %v3140 = vpack.c.b16 %v3084, %v3082
        %v3141 = vpack.c.b16 %v3085, %v3083
        %v3142 = vpack.c.b16 %v3088, %v3086
        %v3143 = vpack.c.b16 %v3089, %v3087
        %v3144 = vpack.c.b16 %v3092, %v3090
        %v3145 = vpack.c.b16 %v3093, %v3091
        %v3146 = vpack.c.b16 %v3096, %v3094
        %v3147 = vpack.c.b16 %v3097, %v3095
        %v3148 = vpack.c.b16 %v3100, %v3098
        %v3149 = vpack.c.b16 %v3101, %v3099
        %v3150 = vpack.c.b16 %v3104, %v3102
        %v3151 = vpack.c.b16 %v3105, %v3103
        %v3152 = vpack.c.b16 %v3108, %v3106
        %v3153 = vpack.c.b16 %v3109, %v3107
        %v3154 = vpack.c.b16 %v3112, %v3110
        %v3155 = vpack.c.b16 %v3113, %v3111
        %v3156 = vpack.c.b16 %v3116, %v3114
        %v3157 = vpack.c.b16 %v3117, %v3115
        %v3158 = vpack.c.b16 %v3120, %v3118
        %v3159 = vpack.c.b16 %v3121, %v3119
        %v3160 = vpack.c.b16 %v3124, %v3122
        %v3161 = vpack.c.b16 %v3125, %v3123
        %v3162 = vpack.c.b16 %v3128, %v3126
        %v3163 = vpack.c.b16 %v3129, %v3127
        %v3164 = vpack.c.b16 %v3132, %v3130
        %v3165 = vpack.c.b16 %v3133, %v3131
        %3198 = vmatpush.bf16.xpose.msra.mxu0 %v3148
        %3199 = vmatpush.bf16.xpose.msra.mxu0 %v3146
        %3200 = vmatpush.bf16.xpose.msra.mxu0 %v3144
        %3201 = vmatpush.bf16.xpose.msra.mxu0 %v3142
        %3202 = vmatpush.bf16.xpose.msra.mxu0 %v3140
        %3203 = vmatpush.bf16.xpose.msra.mxu0 %v3138
        %3204 = vmatpush.bf16.xpose.msra.mxu0 %v3136
        %3205 = vmatpush.bf16.xpose.msra.mxu0 %v3134
        %3206 = vmatmul.bf16.gmra.mxu0 %v3030
        %v3207 = vpop.f32.mrf.mxu0
        %v3208 = vadd.f32 0.0, %v3207
        %v3209 = vpop.f32.mrf.mxu0
        %v3210 = vadd.f32 0.0, %v3209
        %3211 = vmatmul.bf16.gmra.mxu0 %v3032
        %v3212 = vpop.f32.mrf.mxu0
        %v3213 = vadd.f32 0.0, %v3212
        %v3214 = vpop.f32.mrf.mxu0
        %v3215 = vadd.f32 0.0, %v3214
        %3216 = vdwg.mxu0
        %3217 = vmatpush.bf16.xpose.msra.mxu0 %v3149
        %3218 = vmatpush.bf16.xpose.msra.mxu0 %v3147
        %3219 = vmatpush.bf16.xpose.msra.mxu0 %v3145
        %3220 = vmatpush.bf16.xpose.msra.mxu0 %v3143
        %3221 = vmatpush.bf16.xpose.msra.mxu0 %v3141
        %3222 = vmatpush.bf16.xpose.msra.mxu0 %v3139
        %3223 = vmatpush.bf16.xpose.msra.mxu0 %v3137
        %3224 = vmatpush.bf16.xpose.msra.mxu0 %v3135
        %3225 = vmatmul.bf16.gmra.mxu0 %v3031
        %v3226 = vpop.f32.mrf.mxu0
        %v3227 = vadd.f32 %v3208, %v3226
        %v3228 = vpop.f32.mrf.mxu0
        %v3229 = vadd.f32 %v3210, %v3228
        %3230 = vmatmul.bf16.gmra.mxu0 %v3033
        %v3231 = vpop.f32.mrf.mxu0
        %v3232 = vadd.f32 %v3213, %v3231
        %v3233 = vpop.f32.mrf.mxu0
        %v3234 = vadd.f32 %v3215, %v3233
        %3235 = vdwg.mxu0
        %3236 = vmatpush.bf16.xpose.msra.mxu0 %v3164
        %3237 = vmatpush.bf16.xpose.msra.mxu0 %v3162
        %3238 = vmatpush.bf16.xpose.msra.mxu0 %v3160
        %3239 = vmatpush.bf16.xpose.msra.mxu0 %v3158
        %3240 = vmatpush.bf16.xpose.msra.mxu0 %v3156
        %3241 = vmatpush.bf16.xpose.msra.mxu0 %v3154
        %3242 = vmatpush.bf16.xpose.msra.mxu0 %v3152
        %3243 = vmatpush.bf16.xpose.msra.mxu0 %v3150
        %3244 = vmatmul.bf16.gmra.mxu0 %v3030
        %v3245 = vpop.f32.mrf.mxu0
        %v3246 = vadd.f32 0.0, %v3245
        %v3247 = vpop.f32.mrf.mxu0
        %v3248 = vadd.f32 0.0, %v3247
        %3249 = vmatmul.bf16.gmra.mxu0 %v3032
        %v3250 = vpop.f32.mrf.mxu0
        %v3251 = vadd.f32 0.0, %v3250
        %v3252 = vpop.f32.mrf.mxu0
        %v3253 = vadd.f32 0.0, %v3252
        %3254 = vdwg.mxu0
        %3255 = vmatpush.bf16.xpose.msra.mxu0 %v3165
        %3256 = vmatpush.bf16.xpose.msra.mxu0 %v3163
        %3257 = vmatpush.bf16.xpose.msra.mxu0 %v3161
        %3258 = vmatpush.bf16.xpose.msra.mxu0 %v3159
        %3259 = vmatpush.bf16.xpose.msra.mxu0 %v3157
        %3260 = vmatpush.bf16.xpose.msra.mxu0 %v3155
        %3261 = vmatpush.bf16.xpose.msra.mxu0 %v3153
        %3262 = vmatpush.bf16.xpose.msra.mxu0 %v3151
        %3263 = vmatmul.bf16.gmra.mxu0 %v3031
        %v3264 = vpop.f32.mrf.mxu0
        %v3265 = vadd.f32 %v3246, %v3264
        %v3266 = vpop.f32.mrf.mxu0
        %v3267 = vadd.f32 %v3248, %v3266
        %3268 = vmatmul.bf16.gmra.mxu0 %v3033
        %v3269 = vpop.f32.mrf.mxu0
        %v3270 = vadd.f32 %v3251, %v3269
        %v3271 = vpop.f32.mrf.mxu0
        %v3272 = vadd.f32 %v3253, %v3271
        %3273 = vdwg.mxu0
        %v3274 = vpack.c.bf16 %v2973, %v2971
        %v3275 = vpack.c.bf16 %v3011, %v3009
        %v3276 = vpack.c.bf16 %v2978, %v2976
        %v3277 = vpack.c.bf16 %v3016, %v3014
        %v3278 = vpack.c.bf16 %v3229, %v3227
        %v3279 = vpack.c.bf16 %v3267, %v3265
        %v3280 = vpack.c.bf16 %v3234, %v3232
        %v3281 = vpack.c.bf16 %v3272, %v3270
        %v3282 = vld [vmem:[%s6] sm:$0xf]
        %v3283 = vld [vmem:[%s6 + $0x4] sm:$0xf]
        %v3284 = vld [vmem:[%s6 + $0x8] sm:$0xf]
        %v3285 = vld [vmem:[%s6 + $0xc] sm:$0xf]
        %v3286 = vld [vmem:[%s6 + $0x10] sm:$0xf]
        %v3287 = vld [vmem:[%s6 + $0x14] sm:$0xf]
        %v3288 = vld [vmem:[%s6 + $0x18] sm:$0xf]
        %v3289 = vld [vmem:[%s6 + $0x1c] sm:$0xf]
        %v3298 = vunpack.c.l.b16 %v3282
        %v3299 = vunpack.c.l.b16 %v3283
        %v3300 = vunpack.c.l.b16 %v3284
        %v3301 = vunpack.c.l.b16 %v3285
        %v3302 = vunpack.c.l.b16 %v3286
        %v3303 = vunpack.c.l.b16 %v3287
        %v3304 = vunpack.c.l.b16 %v3288
        %v3305 = vunpack.c.l.b16 %v3289
        %v3306 = vpack.c.b16 %v3299, %v3298
        %v3307 = vpack.c.b16 %v3301, %v3300
        %v3308 = vpack.c.b16 %v3303, %v3302
        %v3309 = vpack.c.b16 %v3305, %v3304
        %v3311 = vsel %vm958, %v3306, 0
        %v3314 = vsel %vm958, %v3307, 0
        %v3317 = vsel %vm958, %v3308, 0
        %v3320 = vsel %vm958, %v3309, 0
        %3322 = vmatpush.bf16.msra.mxu0 0
        %3323 = vmatpush.bf16.msra.mxu0 0
        %3324 = vmatpush.bf16.msra.mxu0 0
        %3325 = vmatpush.bf16.msra.mxu0 0
        %3326 = vmatpush.bf16.msra.mxu0 %v3280
        %3327 = vmatpush.bf16.msra.mxu0 %v3278
        %3328 = vmatpush.bf16.msra.mxu0 %v3276
        %3329 = vmatpush.bf16.msra.mxu0 %v3274
        %3330 = vmatmul.bf16.gmra.mxu0 %v3311
        %v3331 = vpop.f32.mrf.mxu0
        %v3332 = vadd.f32 0.0, %v3331
        %v3333 = vpop.f32.mrf.mxu0
        %v3334 = vadd.f32 0.0, %v3333
        %3335 = vmatmul.bf16.gmra.mxu0 %v3314
        %v3336 = vpop.f32.mrf.mxu0
        %v3337 = vadd.f32 0.0, %v3336
        %v3338 = vpop.f32.mrf.mxu0
        %v3339 = vadd.f32 0.0, %v3338
        %3340 = vmatmul.bf16.gmra.mxu0 %v3317
        %v3341 = vpop.f32.mrf.mxu0
        %v3342 = vadd.f32 0.0, %v3341
        %v3343 = vpop.f32.mrf.mxu0
        %v3344 = vadd.f32 0.0, %v3343
        %3345 = vmatmul.bf16.gmra.mxu0 %v3320
        %v3346 = vpop.f32.mrf.mxu0
        %v3347 = vadd.f32 0.0, %v3346
        %v3348 = vpop.f32.mrf.mxu0
        %v3349 = vadd.f32 0.0, %v3348
        %3350 = vdwg.mxu0
        %3351 = vmatpush.bf16.msra.mxu0 0
        %3352 = vmatpush.bf16.msra.mxu0 0
        %3353 = vmatpush.bf16.msra.mxu0 0
        %3354 = vmatpush.bf16.msra.mxu0 0
        %3355 = vmatpush.bf16.msra.mxu0 %v3281
        %3356 = vmatpush.bf16.msra.mxu0 %v3279
        %3357 = vmatpush.bf16.msra.mxu0 %v3277
        %3358 = vmatpush.bf16.msra.mxu0 %v3275
        %3359 = vmatmul.bf16.gmra.mxu0 %v3311
        %v3360 = vpop.f32.mrf.mxu0
        %v3361 = vadd.f32 0.0, %v3360
        %v3362 = vpop.f32.mrf.mxu0
        %v3363 = vadd.f32 0.0, %v3362
        %3364 = vmatmul.bf16.gmra.mxu0 %v3314
        %v3365 = vpop.f32.mrf.mxu0
        %v3366 = vadd.f32 0.0, %v3365
        %v3367 = vpop.f32.mrf.mxu0
        %v3368 = vadd.f32 0.0, %v3367
        %3369 = vmatmul.bf16.gmra.mxu0 %v3317
        %v3370 = vpop.f32.mrf.mxu0
        %v3371 = vadd.f32 0.0, %v3370
        %v3372 = vpop.f32.mrf.mxu0
        %v3373 = vadd.f32 0.0, %v3372
        %3374 = vmatmul.bf16.gmra.mxu0 %v3320
        %v3375 = vpop.f32.mrf.mxu0
        %v3376 = vadd.f32 0.0, %v3375
        %v3377 = vpop.f32.mrf.mxu0
        %v3378 = vadd.f32 0.0, %v3377
        %3379 = vdwg.mxu0
        %v3380 = vadd.f32 %v305, %v3332
        %v3381 = vadd.f32 %v306, %v3361
        %v3382 = vadd.f32 %v307, %v3334
        %v3383 = vadd.f32 %v308, %v3363
        %v3384 = vadd.f32 %v309, %v3337
        %v3385 = vadd.f32 %v310, %v3366
        %v3386 = vadd.f32 %v311, %v3339
        %v3387 = vadd.f32 %v312, %v3368
        %v3388 = vadd.f32 %v313, %v3342
        %v3389 = vadd.f32 %v314, %v3371
        %v3390 = vadd.f32 %v315, %v3344
        %v3391 = vadd.f32 %v316, %v3373
        %v3392 = vadd.f32 %v317, %v3347
        %v3393 = vadd.f32 %v318, %v3376
        %v3394 = vadd.f32 %v319, %v3349
        %v3395 = vadd.f32 %v320, %v3378
        %v3396 = vld [vmem:[%s7] sm:$0xff]
        %v3397 = vld [vmem:[%s7 + $0x8] sm:$0xff]
        %v3398 = vld [vmem:[%s7 + $0x10] sm:$0xff]
        %v3399 = vld [vmem:[%s7 + $0x18] sm:$0xff]
        %v3400 = vld [vmem:[%s7 + $0x20] sm:$0xff]
        %v3401 = vld [vmem:[%s7 + $0x28] sm:$0xff]
        %v3402 = vld [vmem:[%s7 + $0x30] sm:$0xff]
        %v3403 = vld [vmem:[%s7 + $0x38] sm:$0xff]
        %3405 = vset.pattern.permute.xlu0 0
        %3406 = vperm.xlu0 %3405, %v3396
        %v3407 = vpop.permute.xlu0 %3406
        %3410 = vset.pattern.permute.xlu0 0
        %3411 = vperm.xlu0 %3410, %v3397
        %v3412 = vpop.permute.xlu0 %3411
        %3415 = vset.pattern.permute.xlu0 0
        %3416 = vperm.xlu0 %3415, %v3398
        %v3417 = vpop.permute.xlu0 %3416
        %3420 = vset.pattern.permute.xlu0 0
        %3421 = vperm.xlu0 %3420, %v3399
        %v3422 = vpop.permute.xlu0 %3421
        %3425 = vset.pattern.permute.xlu0 0
        %3426 = vperm.xlu0 %3425, %v3400
        %v3427 = vpop.permute.xlu0 %3426
        %3430 = vset.pattern.permute.xlu0 0
        %3431 = vperm.xlu0 %3430, %v3401
        %v3432 = vpop.permute.xlu0 %3431
        %3435 = vset.pattern.permute.xlu0 0
        %3436 = vperm.xlu0 %3435, %v3402
        %v3437 = vpop.permute.xlu0 %3436
        %3440 = vset.pattern.permute.xlu0 0
        %3441 = vperm.xlu0 %3440, %v3403
        %v3442 = vpop.permute.xlu0 %3441
        %v3444 = vadd.f32 %v3380, %v3407
        %v3445 = vadd.f32 %v3381, %v3407
        %v3446 = vadd.f32 %v3382, %v3412
        %v3447 = vadd.f32 %v3383, %v3412
        %v3448 = vadd.f32 %v3384, %v3417
        %v3449 = vadd.f32 %v3385, %v3417
        %v3450 = vadd.f32 %v3386, %v3422
        %v3451 = vadd.f32 %v3387, %v3422
        %v3452 = vadd.f32 %v3388, %v3427
        %v3453 = vadd.f32 %v3389, %v3427
        %v3454 = vadd.f32 %v3390, %v3432
        %v3455 = vadd.f32 %v3391, %v3432
        %v3456 = vadd.f32 %v3392, %v3437
        %v3457 = vadd.f32 %v3393, %v3437
        %v3458 = vadd.f32 %v3394, %v3442
        %v3459 = vadd.f32 %v3395, %v3442
        %3460 = vst [vmem:[%s298] sm:$0xff] %v3444
        %3461 = vst [vmem:[%s298 + $0x8] sm:$0xff] %v3445
        %3462 = vst [vmem:[%s298 + $0x10] sm:$0xff] %v3446
        %3463 = vst [vmem:[%s298 + $0x18] sm:$0xff] %v3447
        %3464 = vst [vmem:[%s298 + $0x20] sm:$0xff] %v3448
        %3465 = vst [vmem:[%s298 + $0x28] sm:$0xff] %v3449
        %3466 = vst [vmem:[%s298 + $0x30] sm:$0xff] %v3450
        %3467 = vst [vmem:[%s298 + $0x38] sm:$0xff] %v3451
        %3468 = vst [vmem:[%s298 + $0x40] sm:$0xff] %v3452
        %3469 = vst [vmem:[%s298 + $0x48] sm:$0xff] %v3453
        %3470 = vst [vmem:[%s298 + $0x50] sm:$0xff] %v3454
        %3471 = vst [vmem:[%s298 + $0x58] sm:$0xff] %v3455
        %3472 = vst [vmem:[%s298 + $0x60] sm:$0xff] %v3456
        %3473 = vst [vmem:[%s298 + $0x68] sm:$0xff] %v3457
        %3474 = vst [vmem:[%s298 + $0x70] sm:$0xff] %v3458
        %3475 = vst [vmem:[%s298 + $0x78] sm:$0xff] %v3459
        %s3476 = sand.u32 %s203, 1
        %s3477 = scalar_lea.sflag [#allocation3], %s3476
        %s3478 = sand.u32 %s203, 1
        %s3479 = smul.addr %s3478, 128
        %s3480 = scalar_lea.vmem [#allocation2], %s3479
        // Predicated region
        $region53: #{tpu_custom_call.1} parent=51 // pred_check
          %p3481 = pneg %p213
        $region54: #{tpu_custom_call.1} parent=51 // pred_check_branch
          %3483 = sbr.rel (%p3481) target = $region56
        $region55: #{tpu_custom_call.1} parent=51 // pred_region
          %3485 = vsyncadd %s3477, 0
          %s3486 = smul.addr %s22, 16
          %s3487 = smul.addr %s3486, 8
          %s3488 = scalar_lea.hbm %s8, %s3487
          %s3489 = sshll.u32 %s3480, 4
          %s3490 = int_to_ptr.vmem [resolvable:$true] %s3489
          %s3491 = sshll.u32 %s3488, 4
          %s3492 = int_to_ptr.hbm [resolvable:$true] %s3491
          %3497 = dma.vmem_to_hbm [thread:$0]  %s3490, 2048, %s3492, %s3477, 256, 256, 16
        $region56: #{tpu_custom_call.1} parent=51 // pred_fallthru
          _
      $region52: #{tpu_custom_call.1} parent=5 // pred_fallthru
        _
      %p3498 = scmp.le.s32.totalorder 2, %s17
      // Predicated region
      $region57: #{tpu_custom_call.1} parent=5 // pred_check
        %p3499 = pneg %p3498
      $region58: #{tpu_custom_call.1} parent=5 // pred_check_branch
        %3501 = sbr.rel (%p3499) target = $region60
      $region59: #{tpu_custom_call.1} parent=5 // pred_region
        %s3502 = ssub.s32 %s17, 2
        // Predicated region
        $region61: #{tpu_custom_call.1} parent=59 // pred_check
          %p3503 = pneg %p219
        $region62: #{tpu_custom_call.1} parent=59 // pred_check_branch
          %3505 = sbr.rel (%p3503) target = $region64
        $region63: #{tpu_custom_call.1} parent=59 // pred_region
          %s3506 = sand.u32 %s204, 1
          %s3507 = scalar_lea.sflag [#allocation3], %s3506
          %s3508 = sand.u32 %s204, 1
          %s3509 = smul.addr %s3508, 128
          %s3510 = scalar_lea.vmem [#allocation2], %s3509
          %3512 = dma.done %s3507, 2048
        $region64: #{tpu_custom_call.1} parent=59 // pred_fallthru
          _
      $region60: #{tpu_custom_call.1} parent=5 // pred_fallthru
        _
    $region6: #{tpu_custom_call.1} parent=1 // loop_footer
      %s21 = sadd.s32 1, %s17
    $region7: #{tpu_custom_call.1} parent=1 // loop_footer_branch
      %16 = sbr.rel target = $region3
    $region8: #{tpu_custom_call.1} parent=1 // loop_exit
      _
    %3513 = vsyncpa [#allocation3], 1
    %s3514 = scalar_lea.sflag [#allocation3], 1
    %3515 = vsyncpa %s3514, 1

</llo_original>
